<compile_context>
chip_gen: v5e
topology: v5e:2x2
jax: 0.10.0
libtpu: 0.0.40
codegen_flags: <defaults>
</compile_context>

<pallas_src>
import math

import jax
import jax.numpy as jnp
import numpy as np
from jax.experimental import pallas as pl
from jax.experimental.pallas import tpu as pltpu


def _round_up(n, m):
    return ((n + m - 1) // m) * m


# ----------------------------------------------------------------------------
# In-kernel helpers (traced inside the Pallas kernels; everything stays 2-D).
# ----------------------------------------------------------------------------
def _col_masks(P, W):
    # W is always a power of two here (4 * 2**k), so p % W == p & (W - 1).
    p = jax.lax.broadcasted_iota(jnp.int32, (P, 1), 0)
    wcol = jnp.bitwise_and(p, W - 1)
    return wcol == 0, wcol == (W - 1)


def _bias_act_adain(h, bias, ys, yb):
    """(x + noise_y[==0]) + bias -> leaky_relu(0.2) -> adaIN (per-sample).
    h: (P, C) f32; bias/ys/yb: (1, C) f32.  Two-pass variance + eps=1e-8
    exactly matches the PyTorch adaIN."""
    h = h + bias
    h = jnp.where(h >= 0.0, h, 0.2 * h)
    m = jnp.mean(h, axis=0, keepdims=True)
    d = h - m
    var = jnp.mean(d * d, axis=0, keepdims=True)
    return ys * (d * jax.lax.rsqrt(var + 1e-8)) + yb


def _zero_halos(pad_ref, off, P, c):
    """Zero only the top/bottom halo rows; the interior [off, off+P) is fully
    overwritten every step, so no full-buffer clear is needed."""
    z = jnp.zeros((off, c), jnp.float32)
    pad_ref[pl.ds(0, off), :] = z
    pad_ref[pl.ds(off + P, off), :] = z


def _conv3x3_acc(pad_ref, wtaps_ref, *, P, W, off, c_out, col_first, col_last):
    """3x3 'same' conv as 9 shifted (P, Cin) @ (Cin, Cout) bf16 MXU matmuls
    accumulated in f32.  `pad_ref` holds the activation at row offset `off`
    (a multiple of 8) of a zero-halo (2*off + P, Cin) f32 VMEM scratch; image
    row wrap-around is removed with the first/last-column masks (applied in
    f32 before the bf16 cast).  All slice starts are static."""
    acc = jnp.zeros((P, c_out), jnp.float32)
    k = 0
    for dy in (-1, 0, 1):
        for dx in (-1, 0, 1):
            start = off + dy * W + dx
            tap = pad_ref[pl.ds(start, P), :]              # (P, Cin) f32
            if dx == 1:
                tap = jnp.where(col_last, 0.0, tap)
            elif dx == -1:
                tap = jnp.where(col_first, 0.0, tap)
            acc = acc + jnp.dot(tap.astype(jnp.bfloat16), wtaps_ref[k],
                                preferred_element_type=jnp.float32)
            k += 1
    return acc


# ----------------------------------------------------------------------------
# Fused block kernels (one pallas_call per StyleALAEGeneratorBlock)
# ----------------------------------------------------------------------------
def _make_start_block_kernel(c_out, off, emit_rgb):
    W, P = 4, 16

    def kernel(st_ref, start_ref, w2_ref, b1_ref, b2_ref, *rest):
        if emit_rgb:
            rgbw_ref, rgbb_ref, o_ref, pad_ref = rest
        else:
            o_ref, pad_ref = rest

        col_first, col_last = _col_masks(P, W)
        styles = st_ref[0]                                 # (4, C) f32

        # x = start constant   (+ Baff1(noise) == 0, weights zeroed)
        h = start_ref[...]                                 # (16, C) f32
        h = _bias_act_adain(h, b1_ref[...], styles[0:1], styles[1:2])

        # conv2 (ConvTranspose k3 s1 p1 == 'same' conv)
        _zero_halos(pad_ref, off, P, c_out)
        pad_ref[pl.ds(off, P), :] = h
        h = _conv3x3_acc(pad_ref, w2_ref, P=P, W=W, off=off, c_out=c_out,
                         col_first=col_first, col_last=col_last)

        # (+ Baff2(noise) == 0) + bias2 -> leakyReLU -> adaIN(style2)
        h = _bias_act_adain(h, b2_ref[...], styles[2:3], styles[3:4])

        if emit_rgb:
            o_ref[0] = (jnp.dot(h.astype(jnp.bfloat16), rgbw_ref[...],
                                preferred_element_type=jnp.float32)
                        + rgbb_ref[...])
        else:
            o_ref[0] = h.astype(jnp.bfloat16)              # bf16 carry to next block

    return kernel


def _make_upscale_block_kernel(wo, c_in, c_out, off, emit_rgb):
    P = wo * wo

    def kernel(x_ref, st_ref, w1_ref, w2_ref, b1_ref, b2_ref, *rest):
        if emit_rgb:
            rgbw_ref, rgbb_ref, o_ref, pad1_ref, pad2_ref = rest
        else:
            o_ref, pad1_ref, pad2_ref = rest

        col_first, col_last = _col_masks(P, wo)
        styles = st_ref[0]                                 # (4, C) f32

        # --- conv1 on the (XLA-pre-upsampled) bf16 input -----------------------
        _zero_halos(pad1_ref, off, P, c_in)
        pad1_ref[pl.ds(off, P), :] = x_ref[0].astype(jnp.float32)
        h = _conv3x3_acc(pad1_ref, w1_ref, P=P, W=wo, off=off, c_out=c_out,
                         col_first=col_first, col_last=col_last)

        # --- (+ Baff1(noise) == 0) + bias1 -> leakyReLU -> adaIN(style1) -------
        h = _bias_act_adain(h, b1_ref[...], styles[0:1], styles[1:2])

        # --- conv2 --------------------------------------------------------------
        _zero_halos(pad2_ref, off, P, c_out)
        pad2_ref[pl.ds(off, P), :] = h
        h = _conv3x3_acc(pad2_ref, w2_ref, P=P, W=wo, off=off, c_out=c_out,
                         col_first=col_first, col_last=col_last)

        # --- (+ Baff2(noise) == 0) + bias2 -> leakyReLU -> adaIN(style2) -------
        h = _bias_act_adain(h, b2_ref[...], styles[2:3], styles[3:4])

        if emit_rgb:
            # only the final block computes to_rgb (1x1 conv, gain 0.03)
            o_ref[0] = (jnp.dot(h.astype(jnp.bfloat16), rgbw_ref[...],
                                preferred_element_type=jnp.float32)
                        + rgbb_ref[...])
        else:
            o_ref[0] = h.astype(jnp.bfloat16)              # bf16 carry to next block

    return kernel


# ----------------------------------------------------------------------------
# pallas_call wrappers
# ----------------------------------------------------------------------------
def _vmem_limit_bytes():
    # ~75% of the chip's VMEM, capped at 100 MiB:
    #   v5e/v6e (128 MiB) -> 96 MiB, v7x (64 MiB) -> 48 MiB.
    cap = 128 * 1024 * 1024
    try:
        get_info = getattr(pltpu, "get_tpu_info", None)
        if get_info is not None:
            cap = int(getattr(get_info(), "vmem_capacity_bytes", cap)) or cap
    except Exception:
        pass
    cap = max(cap, 32 * 1024 * 1024)
    return int(min(cap * 3 // 4, 100 * 1024 * 1024))


_COMPILER_PARAMS = pltpu.CompilerParams(
    dimension_semantics=("parallel",),          # split batch across TensorCores
    vmem_limit_bytes=_vmem_limit_bytes(),
)


def _const_spec(a):
    n = a.ndim
    return pl.BlockSpec(a.shape, lambda b, _n=n: (0,) * _n)


def _start_block_call(bp, styles, emit_rgb):
    B = styles.shape[0]
    c = bp["w2"].shape[2]
    W, P = 4, 16
    off = _round_up(W + 1, 8)

    consts = [bp["start"], bp["w2"], bp["b1"], bp["b2"]]
    if emit_rgb:
        consts += [bp["rgbw"], bp["rgbb"]]
        out_shape = jax.ShapeDtypeStruct((B, P, 3), jnp.float32)
        out_spec = pl.BlockSpec((1, P, 3), lambda b: (b, 0, 0))
    else:
        out_shape = jax.ShapeDtypeStruct((B, P, c), jnp.bfloat16)
        out_spec = pl.BlockSpec((1, P, c), lambda b: (b, 0, 0))

    return pl.pallas_call(
        _make_start_block_kernel(c, off, emit_rgb),
        grid=(B,),
        in_specs=[pl.BlockSpec((1, 4, c), lambda b: (b, 0, 0))]
                 + [_const_spec(cst) for cst in consts],
        out_specs=out_spec,
        out_shape=out_shape,
        scratch_shapes=[pltpu.VMEM((P + 2 * off, c), jnp.float32)],
        compiler_params=_COMPILER_PARAMS,
    )(styles, *consts)


def _upscale_block_call(bp, xup, styles, emit_rgb):
    B, P, c_in = xup.shape
    c_out = bp["w1"].shape[2]
    assert bp["w1"].shape[1] == c_in
    wo = math.isqrt(P)
    assert wo * wo == P and (wo & (wo - 1)) == 0
    off = _round_up(wo + 1, 8)

    consts = [bp["w1"], bp["w2"], bp["b1"], bp["b2"]]
    if emit_rgb:
        consts += [bp["rgbw"], bp["rgbb"]]
        out_shape = jax.ShapeDtypeStruct((B, P, 3), jnp.float32)
        out_spec = pl.BlockSpec((1, P, 3), lambda b: (b, 0, 0))
    else:
        out_shape = jax.ShapeDtypeStruct((B, P, c_out), jnp.bfloat16)
        out_spec = pl.BlockSpec((1, P, c_out), lambda b: (b, 0, 0))

    return pl.pallas_call(
        _make_upscale_block_kernel(wo, c_in, c_out, off, emit_rgb),
        grid=(B,),
        in_specs=[pl.BlockSpec((1, P, c_in), lambda b: (b, 0, 0)),
                  pl.BlockSpec((1, 4, c_out), lambda b: (b, 0, 0))]
                 + [_const_spec(cst) for cst in consts],
        out_specs=out_spec,
        out_shape=out_shape,
        scratch_shapes=[pltpu.VMEM((P + 2 * off, c_in), jnp.float32),
                        pltpu.VMEM((P + 2 * off, c_out), jnp.float32)],
        compiler_params=_COMPILER_PARAMS,
    )(xup, styles, *consts)


# ----------------------------------------------------------------------------
# XLA-side glue between kernels (style affines, separable 2x bilinear upsample)
# ----------------------------------------------------------------------------
def _block_styles(bp, wlat):
    """ys1/yb1/ys2/yb2 for the whole batch, packed as (B, 4, C) f32."""
    C = bp["b1"].shape[1]
    s1 = wlat @ bp["aff1_w"] + bp["aff1_b"]   # (B, 2C)
    s2 = wlat @ bp["aff2_w"] + bp["aff2_b"]
    return jnp.stack([s1[:, :C], s1[:, C:], s2[:, :C], s2[:, C:]], axis=1)


def _upsample_2x(x, U):
    """Separable 2x bilinear upsample (align_corners=True), f32 math.
    x: (B, H*H, C) bf16; U: (2H, H) f32. Returns (B, 4*H*H, C) bf16."""
    B, p_in, C = x.shape
    H = U.shape[1]
    xi = x.reshape(B, H, H, C).astype(jnp.float32)
    y = jnp.einsum('oh,bhwc->bowc', U, xi)
    y = jnp.einsum('pw,bowc->bopc', U, y)
    return y.reshape(B, 4 * p_in, C).astype(jnp.bfloat16)


# ----------------------------------------------------------------------------
# One-time parameter preparation (hoisted out of the jitted forward)
# ----------------------------------------------------------------------------
def _interp_matrix(n_in, n_out):
    # bilinear, align_corners=True (== torch.nn.functional.upsample_bilinear)
    if n_in == 1:
        return np.ones((n_out, 1), np.float32)
    U = np.zeros((n_out, n_in), np.float32)
    for i in range(n_out):
        src = i * (n_in - 1) / (n_out - 1)
        i0 = int(np.floor(src))
        i1 = min(i0 + 1, n_in - 1)
        t = src - i0
        U[i, i0] += 1.0 - t
        U[i, i1] += t
    return U


def _conv_taps(w_ct, scale):
    # ConvTranspose2d(k=3, s=1, p=1) == 'same' Conv2d with the spatially flipped,
    # (in,out)-swapped kernel; equalized-LR gain applied once here.
    w_conv = jnp.flip(w_ct, axis=(2, 3)).transpose(1, 0, 2, 3) * scale  # (Co,Ci,3,3)
    cout, cin = w_conv.shape[0], w_conv.shape[1]
    # (tap k = 3*ky + kx, Cin, Cout) so the kernel indexes taps on the leading dim
    return w_conv.transpose(2, 3, 1, 0).reshape(9, cin, cout).astype(jnp.bfloat16)


def _prepare_block(p, h_in):
    C = p["out_size"]
    bp = {}
    if p["is_start"]:
        # learned 4x4 start constant, NCHW -> (H*W, C)
        bp["start"] = p["start"][0].transpose(1, 2, 0).reshape(16, C).astype(jnp.float32)
    else:
        cin = p["conv1_w"].shape[0]
        bp["up"] = jnp.asarray(_interp_matrix(h_in, 2 * h_in), jnp.float32)
        bp["w1"] = _conv_taps(p["conv1_w"], math.sqrt(2.0) / math.sqrt(cin * 9))
    bp["w2"] = _conv_taps(p["conv2_w"], math.sqrt(2.0) / math.sqrt(C * 9))
    bp["b1"] = p["bias1"].reshape(1, C).astype(jnp.float32)
    bp["b2"] = p["bias2"].reshape(1, C).astype(jnp.float32)
    # Conv2dNormalizedLR(w_size, 2C, 1, gain=1): equalized-LR scale = 1/sqrt(w_size)
    s = 1.0 / math.sqrt(p["aaff1_w"].shape[0])
    bp["aff1_w"] = (p["aaff1_w"] * s).astype(jnp.float32)
    bp["aff1_b"] = p["aaff1_b"].astype(jnp.float32)
    bp["aff2_w"] = (p["aaff2_w"] * s).astype(jnp.float32)
    bp["aff2_b"] = p["aaff2_b"].astype(jnp.float32)
    bp["rgbw"] = (p["rgb_w"] * (0.03 / math.sqrt(C))).astype(jnp.bfloat16)
    bp["rgbb"] = p["rgb_b"].reshape(1, 3).astype(jnp.float32)
    return bp


def prepare_generator_params(raw):
    prepared = {"init": _prepare_block(raw["init"], None), "layers": []}
    h = 4
    for p in raw["layers"]:
        prepared["layers"].append(_prepare_block(p, h))
        h *= 2
    return prepared


# ----------------------------------------------------------------------------
# Raw parameters (deterministic, synthetic — mirrors reset_parameters())
# ----------------------------------------------------------------------------
def init_block_params(key, in_size, out_size, w_size, is_start):
    keys = jax.random.split(key, 5)
    p = {"out_size": out_size, "is_start": is_start}
    if is_start:
        p["start"] = jnp.ones((1, out_size, 4, 4), jnp.float32)      # init.ones_
    else:
        # ConvTranspose2d weight layout: (Cin, Cout, 3, 3), equalized LR
        p["conv1_w"] = jax.random.normal(keys[0], (in_size, out_size, 3, 3), jnp.float32)
    p["conv2_w"] = jax.random.normal(keys[1], (out_size, out_size, 3, 3), jnp.float32)
    p["bias1"] = jnp.zeros((out_size,), jnp.float32)
    p["bias2"] = jnp.zeros((out_size,), jnp.float32)
    p["aaff1_w"] = jax.random.normal(keys[2], (w_size, 2 * out_size), jnp.float32)
    p["aaff1_b"] = jnp.zeros((2 * out_size,), jnp.float32)
    p["aaff2_w"] = jax.random.normal(keys[3], (w_size, 2 * out_size), jnp.float32)
    p["aaff2_b"] = jnp.zeros((2 * out_size,), jnp.float32)
    # Baff1/Baff2 weights are zero-initialized -> noise branch contributes 0.
    p["rgb_w"] = jax.random.normal(keys[4], (out_size, 3), jnp.float32)
    p["rgb_b"] = jnp.zeros((3,), jnp.float32)
    return p


def init_generator_params(key, w_size, n_upscales, output_h_size,
                          scaling_factor=2, max_h_size=1e10):
    initial_size = min(int(output_h_size * scaling_factor ** n_upscales), int(max_h_size))
    keys = jax.random.split(key, n_upscales + 1)
    params = {
        "init": init_block_params(keys[0], initial_size, initial_size, w_size, True),
        "layers": [],
    }
    for i in range(n_upscales):
        inp = min(int(output_h_size * scaling_factor ** (n_upscales - i)), int(max_h_size))
        outp = min(int(output_h_size * scaling_factor ** (n_upscales - i - 1)), int(max_h_size))
        params["layers"].append(init_block_params(keys[i + 1], inp, outp, w_size, False))
    return params


# ----------------------------------------------------------------------------
# Forward pass (phase=None  ->  alpha == 1 path)
# ----------------------------------------------------------------------------
def generator_forward(prepared, w):
    """ALAEGenerator.forward with phase=None; w: (B, w_size, 1, 1) or (B, w_size)."""
    B = w.shape[0]
    wlat = w.reshape(B, -1).astype(jnp.float32)              # (B, w_size)
    layers = prepared["layers"]
    n_up = len(layers)

    styles = _block_styles(prepared["init"], wlat)
    out = _start_block_call(prepared["init"], styles, emit_rgb=(n_up == 0))
    if n_up == 0:
        rgb = out
    else:
        x = out                                              # (B, 16, C) bf16
        for i, bp in enumerate(layers):
            last = (i == n_up - 1)
            xup = _upsample_2x(x, bp["up"])                  # separable, f32 math
            styles = _block_styles(bp, wlat)
            out = _upscale_block_call(bp, xup, styles, emit_rgb=last)
            if last:
                rgb = out                                    # (B, P, 3) f32
            else:
                x = out                                      # (B, P, C) bf16
    s = math.isqrt(rgb.shape[1])
    # single layout change at the very end: (B, H*W, 3) -> NCHW like PyTorch
    return rgb.reshape(B, s, s, 3).transpose(0, 3, 1, 2)


# ----------------------------------------------------------------------------
if __name__ == "__main__":
    w_size = 8
    n_upscales = 1
    output_h_size = 4
    B = 2

    key = jax.random.PRNGKey(0)
    kp, kw = jax.random.split(key)

    raw_params = init_generator_params(kp, w_size, n_upscales, output_h_size)
    prepared = prepare_generator_params(raw_params)          # one-time weight prep

    # latent w in the PyTorch layout used by the 1x1 style convs: (B, w_size, 1, 1)
    w = jax.random.normal(kw, (B, w_size, 1, 1), jnp.float32)

    fwd = jax.jit(generator_forward)
    out = jax.block_until_ready(fwd(prepared, w))

    expected_hw = 4 * (2 ** n_upscales)
    assert out.shape == (B, 3, expected_hw, expected_hw), out.shape
    assert out.dtype == jnp.float32
    assert bool(jnp.all(jnp.isfinite(out)))
    print("KERNEL_OK")
</pallas_src>

<mosaic_0001>
module attributes {stable_mosaic.version = 11 : i64} {
  func.func @kernel(%arg0: i32, %arg1: memref<1x4x8xf32, #tpu.memory_space<vmem>>, %arg2: memref<16x8xf32, #tpu.memory_space<vmem>>, %arg3: memref<9x8x8xbf16, #tpu.memory_space<vmem>>, %arg4: memref<1x8xf32, #tpu.memory_space<vmem>>, %arg5: memref<1x8xf32, #tpu.memory_space<vmem>>, %arg6: memref<1x16x8xbf16, #tpu.memory_space<vmem>>, %arg7: memref<32x8xf32, #tpu.memory_space<vmem>>) attributes {dimension_semantics = [#tpu.dimension_semantics<parallel>], iteration_bounds = array<i64: 2>, scalar_prefetch = 0 : i64, scratch_operands = 1 : i64, tpu.core_type = #tpu.core_type<tc>, window_params = [{transform_indices = @transform_0, window_bounds = array<i64: 1, 4, 8>}, {pipeline_mode = #tpu.pipeline_mode<synchronous>, transform_indices = @transform_1, window_bounds = array<i64: 16, 8>}, {pipeline_mode = #tpu.pipeline_mode<synchronous>, transform_indices = @transform_2, window_bounds = array<i64: 9, 8, 8>}, {pipeline_mode = #tpu.pipeline_mode<synchronous>, transform_indices = @transform_3, window_bounds = array<i64: 1, 8>}, {pipeline_mode = #tpu.pipeline_mode<synchronous>, transform_indices = @transform_4, window_bounds = array<i64: 1, 8>}, {transform_indices = @transform_5, window_bounds = array<i64: 1, 16, 8>}]} {
    %0 = tpu.iota {dimensions = array<i32: 0>} : vector<16x1xi32>
    %c3_i32 = arith.constant 3 : i32
    %1 = vector.broadcast %c3_i32 : i32 to vector<16x1xi32>
    %2 = arith.andi %0, %1 : vector<16x1xi32>
    %c0_i32 = arith.constant 0 : i32
    %3 = vector.broadcast %c0_i32 : i32 to vector<16x1xi32>
    %4 = arith.cmpi eq, %2, %3 : vector<16x1xi32>
    %c3_i32_0 = arith.constant 3 : i32
    %5 = vector.broadcast %c3_i32_0 : i32 to vector<16x1xi32>
    %6 = arith.cmpi eq, %2, %5 : vector<16x1xi32>
    %c0 = arith.constant 0 : index
    %c0_1 = arith.constant 0 : index
    %c0_2 = arith.constant 0 : index
    %7 = vector.load %arg1[%c0, %c0_1, %c0_2] : memref<1x4x8xf32, #tpu.memory_space<vmem>>, vector<1x4x8xf32>
    %8 = vector.shape_cast %7 : vector<1x4x8xf32> to vector<4x8xf32>
    %c0_3 = arith.constant 0 : index
    %c0_4 = arith.constant 0 : index
    %9 = vector.load %arg2[%c0_3, %c0_4] : memref<16x8xf32, #tpu.memory_space<vmem>>, vector<16x8xf32>
    %c0_5 = arith.constant 0 : index
    %c0_6 = arith.constant 0 : index
    %10 = vector.load %arg4[%c0_5, %c0_6] : memref<1x8xf32, #tpu.memory_space<vmem>>, vector<1x8xf32>
    %11 = vector.extract_strided_slice %8 {offsets = [0, 0], sizes = [1, 8], strides = [1, 1]} : vector<4x8xf32> to vector<1x8xf32>
    %12 = vector.extract_strided_slice %8 {offsets = [1, 0], sizes = [1, 8], strides = [1, 1]} : vector<4x8xf32> to vector<1x8xf32>
    %13 = vector.broadcast %10 : vector<1x8xf32> to vector<16x8xf32>
    %14 = arith.addf %9, %13 : vector<16x8xf32>
    %cst = arith.constant 0.000000e+00 : f32
    %15 = vector.broadcast %cst : f32 to vector<16x8xf32>
    %16 = arith.cmpf oge, %14, %15 : vector<16x8xf32>
    %cst_7 = arith.constant 2.000000e-01 : f32
    %17 = vector.broadcast %cst_7 : f32 to vector<16x8xf32>
    %18 = arith.mulf %17, %14 : vector<16x8xf32>
    %19 = arith.select %16, %14, %18 : vector<16x8xi1>, vector<16x8xf32>
    %cst_8 = arith.constant dense<0.000000e+00> : vector<8xf32>
    %20 = vector.multi_reduction <add>, %19, %cst_8 [0] : vector<16x8xf32> to vector<8xf32>
    %21 = vector.shape_cast %20 : vector<8xf32> to vector<1x8xf32>
    %cst_9 = arith.constant 1.600000e+01 : f32
    %22 = vector.broadcast %cst_9 : f32 to vector<1x8xf32>
    %23 = arith.divf %21, %22 : vector<1x8xf32>
    %24 = vector.broadcast %23 : vector<1x8xf32> to vector<16x8xf32>
    %25 = arith.subf %19, %24 : vector<16x8xf32>
    %26 = arith.mulf %25, %25 : vector<16x8xf32>
    %cst_10 = arith.constant dense<0.000000e+00> : vector<8xf32>
    %27 = vector.multi_reduction <add>, %26, %cst_10 [0] : vector<16x8xf32> to vector<8xf32>
    %28 = vector.shape_cast %27 : vector<8xf32> to vector<1x8xf32>
    %cst_11 = arith.constant 1.600000e+01 : f32
    %29 = vector.broadcast %cst_11 : f32 to vector<1x8xf32>
    %30 = arith.divf %28, %29 : vector<1x8xf32>
    %cst_12 = arith.constant 9.99999993E-9 : f32
    %31 = vector.broadcast %cst_12 : f32 to vector<1x8xf32>
    %32 = arith.addf %30, %31 : vector<1x8xf32>
    %33 = math.rsqrt %32 : vector<1x8xf32>
    %34 = vector.broadcast %33 : vector<1x8xf32> to vector<16x8xf32>
    %35 = arith.mulf %25, %34 : vector<16x8xf32>
    %36 = vector.broadcast %11 : vector<1x8xf32> to vector<16x8xf32>
    %37 = arith.mulf %36, %35 : vector<16x8xf32>
    %38 = vector.broadcast %12 : vector<1x8xf32> to vector<16x8xf32>
    %39 = arith.addf %37, %38 : vector<16x8xf32>
    %cst_13 = arith.constant 0.000000e+00 : f32
    %40 = vector.broadcast %cst_13 : f32 to vector<8x8xf32>
    %c0_14 = arith.constant 0 : index
    %c0_15 = arith.constant 0 : index
    %41 = vector.load %arg7[%c0_14, %c0_15] : memref<32x8xf32, #tpu.memory_space<vmem>>, vector<8x8xf32>
    tpu.vector_store %arg7[%c0_14, %c0_15], %40 {strides = array<i32>} : memref<32x8xf32, #tpu.memory_space<vmem>>, vector<8x8xf32>,
    %c24 = arith.constant 24 : index
    %c0_16 = arith.constant 0 : index
    %42 = vector.load %arg7[%c24, %c0_16] : memref<32x8xf32, #tpu.memory_space<vmem>>, vector<8x8xf32>
    tpu.vector_store %arg7[%c24, %c0_16], %40 {strides = array<i32>} : memref<32x8xf32, #tpu.memory_space<vmem>>, vector<8x8xf32>,
    %c8 = arith.constant 8 : index
    %c0_17 = arith.constant 0 : index
    %43 = vector.load %arg7[%c8, %c0_17] : memref<32x8xf32, #tpu.memory_space<vmem>>, vector<16x8xf32>
    tpu.vector_store %arg7[%c8, %c0_17], %39 {strides = array<i32>} : memref<32x8xf32, #tpu.memory_space<vmem>>, vector<16x8xf32>,
    %cst_18 = arith.constant 0.000000e+00 : f32
    %44 = vector.broadcast %cst_18 : f32 to vector<16x8xf32>
    %c3 = arith.constant 3 : index
    %c0_19 = arith.constant 0 : index
    %45 = vector.load %arg7[%c3, %c0_19] : memref<32x8xf32, #tpu.memory_space<vmem>>, vector<16x8xf32>
    %cst_20 = arith.constant 0.000000e+00 : f32
    %46 = vector.shape_cast %4 : vector<16x1xi1> to vector<16x1xi1>
    %47 = vector.broadcast %46 : vector<16x1xi1> to vector<16x8xi1>
    %48 = vector.broadcast %cst_20 : f32 to vector<16x8xf32>
    %49 = arith.select %47, %48, %45 : vector<16x8xi1>, vector<16x8xf32>
    %50 = arith.truncf %49 : vector<16x8xf32> to vector<16x8xbf16>
    %c0_21 = arith.constant 0 : index
    %c0_22 = arith.constant 0 : index
    %c0_23 = arith.constant 0 : index
    %51 = vector.load %arg3[%c0_21, %c0_22, %c0_23] : memref<9x8x8xbf16, #tpu.memory_space<vmem>>, vector<1x8x8xbf16>
    %52 = vector.shape_cast %51 : vector<1x8x8xbf16> to vector<8x8xbf16>
    %cst_24 = arith.constant dense<0.000000e+00> : vector<16x8xf32>
    %53 = tpu.matmul %50, %52, %cst_24 {dimension_numbers = #tpu.dot_dimension_numbers<[1], [0], [0], [1], [0, 0, 1, 1], [], []>} : vector<16x8xbf16>, vector<8x8xbf16>, vector<16x8xf32> -> vector<16x8xf32>
    %54 = arith.addf %44, %53 : vector<16x8xf32>
    %c4 = arith.constant 4 : index
    %c0_25 = arith.constant 0 : index
    %55 = vector.load %arg7[%c4, %c0_25] : memref<32x8xf32, #tpu.memory_space<vmem>>, vector<16x8xf32>
    %56 = arith.truncf %55 : vector<16x8xf32> to vector<16x8xbf16>
    %c1 = arith.constant 1 : index
    %c0_26 = arith.constant 0 : index
    %c0_27 = arith.constant 0 : index
    %57 = vector.load %arg3[%c1, %c0_26, %c0_27] : memref<9x8x8xbf16, #tpu.memory_space<vmem>>, vector<1x8x8xbf16>
    %58 = vector.shape_cast %57 : vector<1x8x8xbf16> to vector<8x8xbf16>
    %cst_28 = arith.constant dense<0.000000e+00> : vector<16x8xf32>
    %59 = tpu.matmul %56, %58, %cst_28 {dimension_numbers = #tpu.dot_dimension_numbers<[1], [0], [0], [1], [0, 0, 1, 1], [], []>} : vector<16x8xbf16>, vector<8x8xbf16>, vector<16x8xf32> -> vector<16x8xf32>
    %60 = arith.addf %54, %59 : vector<16x8xf32>
    %c5 = arith.constant 5 : index
    %c0_29 = arith.constant 0 : index
    %61 = vector.load %arg7[%c5, %c0_29] : memref<32x8xf32, #tpu.memory_space<vmem>>, vector<16x8xf32>
    %cst_30 = arith.constant 0.000000e+00 : f32
    %62 = vector.shape_cast %6 : vector<16x1xi1> to vector<16x1xi1>
    %63 = vector.broadcast %62 : vector<16x1xi1> to vector<16x8xi1>
    %64 = vector.broadcast %cst_30 : f32 to vector<16x8xf32>
    %65 = arith.select %63, %64, %61 : vector<16x8xi1>, vector<16x8xf32>
    %66 = arith.truncf %65 : vector<16x8xf32> to vector<16x8xbf16>
    %c2 = arith.constant 2 : index
    %c0_31 = arith.constant 0 : index
    %c0_32 = arith.constant 0 : index
    %67 = vector.load %arg3[%c2, %c0_31, %c0_32] : memref<9x8x8xbf16, #tpu.memory_space<vmem>>, vector<1x8x8xbf16>
    %68 = vector.shape_cast %67 : vector<1x8x8xbf16> to vector<8x8xbf16>
    %cst_33 = arith.constant dense<0.000000e+00> : vector<16x8xf32>
    %69 = tpu.matmul %66, %68, %cst_33 {dimension_numbers = #tpu.dot_dimension_numbers<[1], [0], [0], [1], [0, 0, 1, 1], [], []>} : vector<16x8xbf16>, vector<8x8xbf16>, vector<16x8xf32> -> vector<16x8xf32>
    %70 = arith.addf %60, %69 : vector<16x8xf32>
    %c7 = arith.constant 7 : index
    %c0_34 = arith.constant 0 : index
    %71 = vector.load %arg7[%c7, %c0_34] : memref<32x8xf32, #tpu.memory_space<vmem>>, vector<16x8xf32>
    %cst_35 = arith.constant 0.000000e+00 : f32
    %72 = vector.shape_cast %4 : vector<16x1xi1> to vector<16x1xi1>
    %73 = vector.broadcast %72 : vector<16x1xi1> to vector<16x8xi1>
    %74 = vector.broadcast %cst_35 : f32 to vector<16x8xf32>
    %75 = arith.select %73, %74, %71 : vector<16x8xi1>, vector<16x8xf32>
    %76 = arith.truncf %75 : vector<16x8xf32> to vector<16x8xbf16>
    %c3_36 = arith.constant 3 : index
    %c0_37 = arith.constant 0 : index
    %c0_38 = arith.constant 0 : index
    %77 = vector.load %arg3[%c3_36, %c0_37, %c0_38] : memref<9x8x8xbf16, #tpu.memory_space<vmem>>, vector<1x8x8xbf16>
    %78 = vector.shape_cast %77 : vector<1x8x8xbf16> to vector<8x8xbf16>
    %cst_39 = arith.constant dense<0.000000e+00> : vector<16x8xf32>
    %79 = tpu.matmul %76, %78, %cst_39 {dimension_numbers = #tpu.dot_dimension_numbers<[1], [0], [0], [1], [0, 0, 1, 1], [], []>} : vector<16x8xbf16>, vector<8x8xbf16>, vector<16x8xf32> -> vector<16x8xf32>
    %80 = arith.addf %70, %79 : vector<16x8xf32>
    %c8_40 = arith.constant 8 : index
    %c0_41 = arith.constant 0 : index
    %81 = vector.load %arg7[%c8_40, %c0_41] : memref<32x8xf32, #tpu.memory_space<vmem>>, vector<16x8xf32>
    %82 = arith.truncf %81 : vector<16x8xf32> to vector<16x8xbf16>
    %c4_42 = arith.constant 4 : index
    %c0_43 = arith.constant 0 : index
    %c0_44 = arith.constant 0 : index
    %83 = vector.load %arg3[%c4_42, %c0_43, %c0_44] : memref<9x8x8xbf16, #tpu.memory_space<vmem>>, vector<1x8x8xbf16>
    %84 = vector.shape_cast %83 : vector<1x8x8xbf16> to vector<8x8xbf16>
    %cst_45 = arith.constant dense<0.000000e+00> : vector<16x8xf32>
    %85 = tpu.matmul %82, %84, %cst_45 {dimension_numbers = #tpu.dot_dimension_numbers<[1], [0], [0], [1], [0, 0, 1, 1], [], []>} : vector<16x8xbf16>, vector<8x8xbf16>, vector<16x8xf32> -> vector<16x8xf32>
    %86 = arith.addf %80, %85 : vector<16x8xf32>
    %c9 = arith.constant 9 : index
    %c0_46 = arith.constant 0 : index
    %87 = vector.load %arg7[%c9, %c0_46] : memref<32x8xf32, #tpu.memory_space<vmem>>, vector<16x8xf32>
    %cst_47 = arith.constant 0.000000e+00 : f32
    %88 = vector.shape_cast %6 : vector<16x1xi1> to vector<16x1xi1>
    %89 = vector.broadcast %88 : vector<16x1xi1> to vector<16x8xi1>
    %90 = vector.broadcast %cst_47 : f32 to vector<16x8xf32>
    %91 = arith.select %89, %90, %87 : vector<16x8xi1>, vector<16x8xf32>
    %92 = arith.truncf %91 : vector<16x8xf32> to vector<16x8xbf16>
    %c5_48 = arith.constant 5 : index
    %c0_49 = arith.constant 0 : index
    %c0_50 = arith.constant 0 : index
    %93 = vector.load %arg3[%c5_48, %c0_49, %c0_50] : memref<9x8x8xbf16, #tpu.memory_space<vmem>>, vector<1x8x8xbf16>
    %94 = vector.shape_cast %93 : vector<1x8x8xbf16> to vector<8x8xbf16>
    %cst_51 = arith.constant dense<0.000000e+00> : vector<16x8xf32>
    %95 = tpu.matmul %92, %94, %cst_51 {dimension_numbers = #tpu.dot_dimension_numbers<[1], [0], [0], [1], [0, 0, 1, 1], [], []>} : vector<16x8xbf16>, vector<8x8xbf16>, vector<16x8xf32> -> vector<16x8xf32>
    %96 = arith.addf %86, %95 : vector<16x8xf32>
    %c11 = arith.constant 11 : index
    %c0_52 = arith.constant 0 : index
    %97 = vector.load %arg7[%c11, %c0_52] : memref<32x8xf32, #tpu.memory_space<vmem>>, vector<16x8xf32>
    %cst_53 = arith.constant 0.000000e+00 : f32
    %98 = vector.shape_cast %4 : vector<16x1xi1> to vector<16x1xi1>
    %99 = vector.broadcast %98 : vector<16x1xi1> to vector<16x8xi1>
    %100 = vector.broadcast %cst_53 : f32 to vector<16x8xf32>
    %101 = arith.select %99, %100, %97 : vector<16x8xi1>, vector<16x8xf32>
    %102 = arith.truncf %101 : vector<16x8xf32> to vector<16x8xbf16>
    %c6 = arith.constant 6 : index
    %c0_54 = arith.constant 0 : index
    %c0_55 = arith.constant 0 : index
    %103 = vector.load %arg3[%c6, %c0_54, %c0_55] : memref<9x8x8xbf16, #tpu.memory_space<vmem>>, vector<1x8x8xbf16>
    %104 = vector.shape_cast %103 : vector<1x8x8xbf16> to vector<8x8xbf16>
    %cst_56 = arith.constant dense<0.000000e+00> : vector<16x8xf32>
    %105 = tpu.matmul %102, %104, %cst_56 {dimension_numbers = #tpu.dot_dimension_numbers<[1], [0], [0], [1], [0, 0, 1, 1], [], []>} : vector<16x8xbf16>, vector<8x8xbf16>, vector<16x8xf32> -> vector<16x8xf32>
    %106 = arith.addf %96, %105 : vector<16x8xf32>
    %c12 = arith.constant 12 : index
    %c0_57 = arith.constant 0 : index
    %107 = vector.load %arg7[%c12, %c0_57] : memref<32x8xf32, #tpu.memory_space<vmem>>, vector<16x8xf32>
    %108 = arith.truncf %107 : vector<16x8xf32> to vector<16x8xbf16>
    %c7_58 = arith.constant 7 : index
    %c0_59 = arith.constant 0 : index
    %c0_60 = arith.constant 0 : index
    %109 = vector.load %arg3[%c7_58, %c0_59, %c0_60] : memref<9x8x8xbf16, #tpu.memory_space<vmem>>, vector<1x8x8xbf16>
    %110 = vector.shape_cast %109 : vector<1x8x8xbf16> to vector<8x8xbf16>
    %cst_61 = arith.constant dense<0.000000e+00> : vector<16x8xf32>
    %111 = tpu.matmul %108, %110, %cst_61 {dimension_numbers = #tpu.dot_dimension_numbers<[1], [0], [0], [1], [0, 0, 1, 1], [], []>} : vector<16x8xbf16>, vector<8x8xbf16>, vector<16x8xf32> -> vector<16x8xf32>
    %112 = arith.addf %106, %111 : vector<16x8xf32>
    %c13 = arith.constant 13 : index
    %c0_62 = arith.constant 0 : index
    %113 = vector.load %arg7[%c13, %c0_62] : memref<32x8xf32, #tpu.memory_space<vmem>>, vector<16x8xf32>
    %cst_63 = arith.constant 0.000000e+00 : f32
    %114 = vector.shape_cast %6 : vector<16x1xi1> to vector<16x1xi1>
    %115 = vector.broadcast %114 : vector<16x1xi1> to vector<16x8xi1>
    %116 = vector.broadcast %cst_63 : f32 to vector<16x8xf32>
    %117 = arith.select %115, %116, %113 : vector<16x8xi1>, vector<16x8xf32>
    %118 = arith.truncf %117 : vector<16x8xf32> to vector<16x8xbf16>
    %c8_64 = arith.constant 8 : index
    %c0_65 = arith.constant 0 : index
    %c0_66 = arith.constant 0 : index
    %119 = vector.load %arg3[%c8_64, %c0_65, %c0_66] : memref<9x8x8xbf16, #tpu.memory_space<vmem>>, vector<1x8x8xbf16>
    %120 = vector.shape_cast %119 : vector<1x8x8xbf16> to vector<8x8xbf16>
    %cst_67 = arith.constant dense<0.000000e+00> : vector<16x8xf32>
    %121 = tpu.matmul %118, %120, %cst_67 {dimension_numbers = #tpu.dot_dimension_numbers<[1], [0], [0], [1], [0, 0, 1, 1], [], []>} : vector<16x8xbf16>, vector<8x8xbf16>, vector<16x8xf32> -> vector<16x8xf32>
    %122 = arith.addf %112, %121 : vector<16x8xf32>
    %c0_68 = arith.constant 0 : index
    %c0_69 = arith.constant 0 : index
    %123 = vector.load %arg5[%c0_68, %c0_69] : memref<1x8xf32, #tpu.memory_space<vmem>>, vector<1x8xf32>
    %124 = vector.extract_strided_slice %8 {offsets = [2, 0], sizes = [1, 8], strides = [1, 1]} : vector<4x8xf32> to vector<1x8xf32>
    %125 = vector.extract_strided_slice %8 {offsets = [3, 0], sizes = [1, 8], strides = [1, 1]} : vector<4x8xf32> to vector<1x8xf32>
    %126 = vector.broadcast %123 : vector<1x8xf32> to vector<16x8xf32>
    %127 = arith.addf %122, %126 : vector<16x8xf32>
    %cst_70 = arith.constant 0.000000e+00 : f32
    %128 = vector.broadcast %cst_70 : f32 to vector<16x8xf32>
    %129 = arith.cmpf oge, %127, %128 : vector<16x8xf32>
    %cst_71 = arith.constant 2.000000e-01 : f32
    %130 = vector.broadcast %cst_71 : f32 to vector<16x8xf32>
    %131 = arith.mulf %130, %127 : vector<16x8xf32>
    %132 = arith.select %129, %127, %131 : vector<16x8xi1>, vector<16x8xf32>
    %cst_72 = arith.constant dense<0.000000e+00> : vector<8xf32>
    %133 = vector.multi_reduction <add>, %132, %cst_72 [0] : vector<16x8xf32> to vector<8xf32>
    %134 = vector.shape_cast %133 : vector<8xf32> to vector<1x8xf32>
    %cst_73 = arith.constant 1.600000e+01 : f32
    %135 = vector.broadcast %cst_73 : f32 to vector<1x8xf32>
    %136 = arith.divf %134, %135 : vector<1x8xf32>
    %137 = vector.broadcast %136 : vector<1x8xf32> to vector<16x8xf32>
    %138 = arith.subf %132, %137 : vector<16x8xf32>
    %139 = arith.mulf %138, %138 : vector<16x8xf32>
    %cst_74 = arith.constant dense<0.000000e+00> : vector<8xf32>
    %140 = vector.multi_reduction <add>, %139, %cst_74 [0] : vector<16x8xf32> to vector<8xf32>
    %141 = vector.shape_cast %140 : vector<8xf32> to vector<1x8xf32>
    %cst_75 = arith.constant 1.600000e+01 : f32
    %142 = vector.broadcast %cst_75 : f32 to vector<1x8xf32>
    %143 = arith.divf %141, %142 : vector<1x8xf32>
    %cst_76 = arith.constant 9.99999993E-9 : f32
    %144 = vector.broadcast %cst_76 : f32 to vector<1x8xf32>
    %145 = arith.addf %143, %144 : vector<1x8xf32>
    %146 = math.rsqrt %145 : vector<1x8xf32>
    %147 = vector.broadcast %146 : vector<1x8xf32> to vector<16x8xf32>
    %148 = arith.mulf %138, %147 : vector<16x8xf32>
    %149 = vector.broadcast %124 : vector<1x8xf32> to vector<16x8xf32>
    %150 = arith.mulf %149, %148 : vector<16x8xf32>
    %151 = vector.broadcast %125 : vector<1x8xf32> to vector<16x8xf32>
    %152 = arith.addf %150, %151 : vector<16x8xf32>
    %153 = arith.truncf %152 : vector<16x8xf32> to vector<16x8xbf16>
    %c0_77 = arith.constant 0 : index
    %c0_78 = arith.constant 0 : index
    %c0_79 = arith.constant 0 : index
    %154 = vector.load %arg6[%c0_77, %c0_78, %c0_79] : memref<1x16x8xbf16, #tpu.memory_space<vmem>>, vector<1x16x8xbf16>
    %155 = vector.shape_cast %154 : vector<1x16x8xbf16> to vector<16x8xbf16>
    %156 = vector.shape_cast %153 : vector<16x8xbf16> to vector<1x16x8xbf16>
    tpu.vector_store %arg6[%c0_77, %c0_78, %c0_79], %156 {strides = array<i32>} : memref<1x16x8xbf16, #tpu.memory_space<vmem>>, vector<1x16x8xbf16>,
    return
  }
  func.func @transform_0(%arg0: i32) -> (i32, i32, i32) {
    %c0_i32 = arith.constant 0 : i32
    %c0_i32_0 = arith.constant 0 : i32
    %c0_i32_1 = arith.constant 0 : i32
    return %arg0, %c0_i32, %c0_i32_0 : i32, i32, i32
  }
  func.func @transform_1(%arg0: i32) -> (i32, i32) {
    %c0_i32 = arith.constant 0 : i32
    %c0_i32_0 = arith.constant 0 : i32
    %c0_i32_1 = arith.constant 0 : i32
    return %c0_i32, %c0_i32_0 : i32, i32
  }
  func.func @transform_2(%arg0: i32) -> (i32, i32, i32) {
    %c0_i32 = arith.constant 0 : i32
    %c0_i32_0 = arith.constant 0 : i32
    %c0_i32_1 = arith.constant 0 : i32
    %c0_i32_2 = arith.constant 0 : i32
    return %c0_i32, %c0_i32_0, %c0_i32_1 : i32, i32, i32
  }
  func.func @transform_3(%arg0: i32) -> (i32, i32) {
    %c0_i32 = arith.constant 0 : i32
    %c0_i32_0 = arith.constant 0 : i32
    %c0_i32_1 = arith.constant 0 : i32
    return %c0_i32, %c0_i32_0 : i32, i32
  }
  func.func @transform_4(%arg0: i32) -> (i32, i32) {
    %c0_i32 = arith.constant 0 : i32
    %c0_i32_0 = arith.constant 0 : i32
    %c0_i32_1 = arith.constant 0 : i32
    return %c0_i32, %c0_i32_0 : i32, i32
  }
  func.func @transform_5(%arg0: i32) -> (i32, i32, i32) {
    %c0_i32 = arith.constant 0 : i32
    %c0_i32_0 = arith.constant 0 : i32
    %c0_i32_1 = arith.constant 0 : i32
    return %arg0, %c0_i32, %c0_i32_0 : i32, i32, i32
  }
}

module attributes {stable_mosaic.version = 11 : i64} {
  func.func @kernel(%arg0: i32, %arg1: memref<1x64x8xbf16, #tpu.memory_space<vmem>>, %arg2: memref<1x4x4xf32, #tpu.memory_space<vmem>>, %arg3: memref<9x8x4xbf16, #tpu.memory_space<vmem>>, %arg4: memref<9x4x4xbf16, #tpu.memory_space<vmem>>, %arg5: memref<1x4xf32, #tpu.memory_space<vmem>>, %arg6: memref<1x4xf32, #tpu.memory_space<vmem>>, %arg7: memref<4x3xbf16, #tpu.memory_space<vmem>>, %arg8: memref<1x3xf32, #tpu.memory_space<vmem>>, %arg9: memref<1x64x3xf32, #tpu.memory_space<vmem>>, %arg10: memref<96x8xf32, #tpu.memory_space<vmem>>, %arg11: memref<96x4xf32, #tpu.memory_space<vmem>>) attributes {dimension_semantics = [#tpu.dimension_semantics<parallel>], iteration_bounds = array<i64: 2>, scalar_prefetch = 0 : i64, scratch_operands = 2 : i64, tpu.core_type = #tpu.core_type<tc>, window_params = [{transform_indices = @transform_0, window_bounds = array<i64: 1, 64, 8>}, {transform_indices = @transform_1, window_bounds = array<i64: 1, 4, 4>}, {pipeline_mode = #tpu.pipeline_mode<synchronous>, transform_indices = @transform_2, window_bounds = array<i64: 9, 8, 4>}, {pipeline_mode = #tpu.pipeline_mode<synchronous>, transform_indices = @transform_3, window_bounds = array<i64: 9, 4, 4>}, {pipeline_mode = #tpu.pipeline_mode<synchronous>, transform_indices = @transform_4, window_bounds = array<i64: 1, 4>}, {pipeline_mode = #tpu.pipeline_mode<synchronous>, transform_indices = @transform_5, window_bounds = array<i64: 1, 4>}, {pipeline_mode = #tpu.pipeline_mode<synchronous>, transform_indices = @transform_6, window_bounds = array<i64: 4, 3>}, {pipeline_mode = #tpu.pipeline_mode<synchronous>, transform_indices = @transform_7, window_bounds = array<i64: 1, 3>}, {transform_indices = @transform_8, window_bounds = array<i64: 1, 64, 3>}]} {
    %0 = tpu.iota {dimensions = array<i32: 0>} : vector<64x1xi32>
    %c7_i32 = arith.constant 7 : i32
    %1 = vector.broadcast %c7_i32 : i32 to vector<64x1xi32>
    %2 = arith.andi %0, %1 : vector<64x1xi32>
    %c0_i32 = arith.constant 0 : i32
    %3 = vector.broadcast %c0_i32 : i32 to vector<64x1xi32>
    %4 = arith.cmpi eq, %2, %3 : vector<64x1xi32>
    %c7_i32_0 = arith.constant 7 : i32
    %5 = vector.broadcast %c7_i32_0 : i32 to vector<64x1xi32>
    %6 = arith.cmpi eq, %2, %5 : vector<64x1xi32>
    %c0 = arith.constant 0 : index
    %c0_1 = arith.constant 0 : index
    %c0_2 = arith.constant 0 : index
    %7 = vector.load %arg2[%c0, %c0_1, %c0_2] : memref<1x4x4xf32, #tpu.memory_space<vmem>>, vector<1x4x4xf32>
    %8 = vector.shape_cast %7 : vector<1x4x4xf32> to vector<4x4xf32>
    %cst = arith.constant 0.000000e+00 : f32
    %9 = vector.broadcast %cst : f32 to vector<16x8xf32>
    %c0_3 = arith.constant 0 : index
    %c0_4 = arith.constant 0 : index
    %10 = vector.load %arg10[%c0_3, %c0_4] : memref<96x8xf32, #tpu.memory_space<vmem>>, vector<16x8xf32>
    tpu.vector_store %arg10[%c0_3, %c0_4], %9 {strides = array<i32>} : memref<96x8xf32, #tpu.memory_space<vmem>>, vector<16x8xf32>,
    %c80 = arith.constant 80 : index
    %c0_5 = arith.constant 0 : index
    %11 = vector.load %arg10[%c80, %c0_5] : memref<96x8xf32, #tpu.memory_space<vmem>>, vector<16x8xf32>
    tpu.vector_store %arg10[%c80, %c0_5], %9 {strides = array<i32>} : memref<96x8xf32, #tpu.memory_space<vmem>>, vector<16x8xf32>,
    %c0_6 = arith.constant 0 : index
    %c0_7 = arith.constant 0 : index
    %c0_8 = arith.constant 0 : index
    %12 = vector.load %arg1[%c0_6, %c0_7, %c0_8] : memref<1x64x8xbf16, #tpu.memory_space<vmem>>, vector<1x64x8xbf16>
    %13 = vector.shape_cast %12 : vector<1x64x8xbf16> to vector<64x8xbf16>
    %14 = arith.extf %13 : vector<64x8xbf16> to vector<64x8xf32>
    %c16 = arith.constant 16 : index
    %c0_9 = arith.constant 0 : index
    %15 = vector.load %arg10[%c16, %c0_9] : memref<96x8xf32, #tpu.memory_space<vmem>>, vector<64x8xf32>
    tpu.vector_store %arg10[%c16, %c0_9], %14 {strides = array<i32>} : memref<96x8xf32, #tpu.memory_space<vmem>>, vector<64x8xf32>,
    %cst_10 = arith.constant 0.000000e+00 : f32
    %16 = vector.broadcast %cst_10 : f32 to vector<64x4xf32>
    %c7 = arith.constant 7 : index
    %c0_11 = arith.constant 0 : index
    %17 = vector.load %arg10[%c7, %c0_11] : memref<96x8xf32, #tpu.memory_space<vmem>>, vector<64x8xf32>
    %cst_12 = arith.constant 0.000000e+00 : f32
    %18 = vector.shape_cast %4 : vector<64x1xi1> to vector<64x1xi1>
    %19 = vector.broadcast %18 : vector<64x1xi1> to vector<64x8xi1>
    %20 = vector.broadcast %cst_12 : f32 to vector<64x8xf32>
    %21 = arith.select %19, %20, %17 : vector<64x8xi1>, vector<64x8xf32>
    %22 = arith.truncf %21 : vector<64x8xf32> to vector<64x8xbf16>
    %c0_13 = arith.constant 0 : index
    %c0_14 = arith.constant 0 : index
    %c0_15 = arith.constant 0 : index
    %23 = vector.load %arg3[%c0_13, %c0_14, %c0_15] : memref<9x8x4xbf16, #tpu.memory_space<vmem>>, vector<1x8x4xbf16>
    %24 = vector.shape_cast %23 : vector<1x8x4xbf16> to vector<8x4xbf16>
    %cst_16 = arith.constant dense<0.000000e+00> : vector<64x4xf32>
    %25 = tpu.matmul %22, %24, %cst_16 {dimension_numbers = #tpu.dot_dimension_numbers<[1], [0], [0], [1], [0, 0, 1, 1], [], []>} : vector<64x8xbf16>, vector<8x4xbf16>, vector<64x4xf32> -> vector<64x4xf32>
    %26 = arith.addf %16, %25 : vector<64x4xf32>
    %c8 = arith.constant 8 : index
    %c0_17 = arith.constant 0 : index
    %27 = vector.load %arg10[%c8, %c0_17] : memref<96x8xf32, #tpu.memory_space<vmem>>, vector<64x8xf32>
    %28 = arith.truncf %27 : vector<64x8xf32> to vector<64x8xbf16>
    %c1 = arith.constant 1 : index
    %c0_18 = arith.constant 0 : index
    %c0_19 = arith.constant 0 : index
    %29 = vector.load %arg3[%c1, %c0_18, %c0_19] : memref<9x8x4xbf16, #tpu.memory_space<vmem>>, vector<1x8x4xbf16>
    %30 = vector.shape_cast %29 : vector<1x8x4xbf16> to vector<8x4xbf16>
    %cst_20 = arith.constant dense<0.000000e+00> : vector<64x4xf32>
    %31 = tpu.matmul %28, %30, %cst_20 {dimension_numbers = #tpu.dot_dimension_numbers<[1], [0], [0], [1], [0, 0, 1, 1], [], []>} : vector<64x8xbf16>, vector<8x4xbf16>, vector<64x4xf32> -> vector<64x4xf32>
    %32 = arith.addf %26, %31 : vector<64x4xf32>
    %c9 = arith.constant 9 : index
    %c0_21 = arith.constant 0 : index
    %33 = vector.load %arg10[%c9, %c0_21] : memref<96x8xf32, #tpu.memory_space<vmem>>, vector<64x8xf32>
    %cst_22 = arith.constant 0.000000e+00 : f32
    %34 = vector.shape_cast %6 : vector<64x1xi1> to vector<64x1xi1>
    %35 = vector.broadcast %34 : vector<64x1xi1> to vector<64x8xi1>
    %36 = vector.broadcast %cst_22 : f32 to vector<64x8xf32>
    %37 = arith.select %35, %36, %33 : vector<64x8xi1>, vector<64x8xf32>
    %38 = arith.truncf %37 : vector<64x8xf32> to vector<64x8xbf16>
    %c2 = arith.constant 2 : index
    %c0_23 = arith.constant 0 : index
    %c0_24 = arith.constant 0 : index
    %39 = vector.load %arg3[%c2, %c0_23, %c0_24] : memref<9x8x4xbf16, #tpu.memory_space<vmem>>, vector<1x8x4xbf16>
    %40 = vector.shape_cast %39 : vector<1x8x4xbf16> to vector<8x4xbf16>
    %cst_25 = arith.constant dense<0.000000e+00> : vector<64x4xf32>
    %41 = tpu.matmul %38, %40, %cst_25 {dimension_numbers = #tpu.dot_dimension_numbers<[1], [0], [0], [1], [0, 0, 1, 1], [], []>} : vector<64x8xbf16>, vector<8x4xbf16>, vector<64x4xf32> -> vector<64x4xf32>
    %42 = arith.addf %32, %41 : vector<64x4xf32>
    %c15 = arith.constant 15 : index
    %c0_26 = arith.constant 0 : index
    %43 = vector.load %arg10[%c15, %c0_26] : memref<96x8xf32, #tpu.memory_space<vmem>>, vector<64x8xf32>
    %cst_27 = arith.constant 0.000000e+00 : f32
    %44 = vector.shape_cast %4 : vector<64x1xi1> to vector<64x1xi1>
    %45 = vector.broadcast %44 : vector<64x1xi1> to vector<64x8xi1>
    %46 = vector.broadcast %cst_27 : f32 to vector<64x8xf32>
    %47 = arith.select %45, %46, %43 : vector<64x8xi1>, vector<64x8xf32>
    %48 = arith.truncf %47 : vector<64x8xf32> to vector<64x8xbf16>
    %c3 = arith.constant 3 : index
    %c0_28 = arith.constant 0 : index
    %c0_29 = arith.constant 0 : index
    %49 = vector.load %arg3[%c3, %c0_28, %c0_29] : memref<9x8x4xbf16, #tpu.memory_space<vmem>>, vector<1x8x4xbf16>
    %50 = vector.shape_cast %49 : vector<1x8x4xbf16> to vector<8x4xbf16>
    %cst_30 = arith.constant dense<0.000000e+00> : vector<64x4xf32>
    %51 = tpu.matmul %48, %50, %cst_30 {dimension_numbers = #tpu.dot_dimension_numbers<[1], [0], [0], [1], [0, 0, 1, 1], [], []>} : vector<64x8xbf16>, vector<8x4xbf16>, vector<64x4xf32> -> vector<64x4xf32>
    %52 = arith.addf %42, %51 : vector<64x4xf32>
    %c16_31 = arith.constant 16 : index
    %c0_32 = arith.constant 0 : index
    %53 = vector.load %arg10[%c16_31, %c0_32] : memref<96x8xf32, #tpu.memory_space<vmem>>, vector<64x8xf32>
    %54 = arith.truncf %53 : vector<64x8xf32> to vector<64x8xbf16>
    %c4 = arith.constant 4 : index
    %c0_33 = arith.constant 0 : index
    %c0_34 = arith.constant 0 : index
    %55 = vector.load %arg3[%c4, %c0_33, %c0_34] : memref<9x8x4xbf16, #tpu.memory_space<vmem>>, vector<1x8x4xbf16>
    %56 = vector.shape_cast %55 : vector<1x8x4xbf16> to vector<8x4xbf16>
    %cst_35 = arith.constant dense<0.000000e+00> : vector<64x4xf32>
    %57 = tpu.matmul %54, %56, %cst_35 {dimension_numbers = #tpu.dot_dimension_numbers<[1], [0], [0], [1], [0, 0, 1, 1], [], []>} : vector<64x8xbf16>, vector<8x4xbf16>, vector<64x4xf32> -> vector<64x4xf32>
    %58 = arith.addf %52, %57 : vector<64x4xf32>
    %c17 = arith.constant 17 : index
    %c0_36 = arith.constant 0 : index
    %59 = vector.load %arg10[%c17, %c0_36] : memref<96x8xf32, #tpu.memory_space<vmem>>, vector<64x8xf32>
    %cst_37 = arith.constant 0.000000e+00 : f32
    %60 = vector.shape_cast %6 : vector<64x1xi1> to vector<64x1xi1>
    %61 = vector.broadcast %60 : vector<64x1xi1> to vector<64x8xi1>
    %62 = vector.broadcast %cst_37 : f32 to vector<64x8xf32>
    %63 = arith.select %61, %62, %59 : vector<64x8xi1>, vector<64x8xf32>
    %64 = arith.truncf %63 : vector<64x8xf32> to vector<64x8xbf16>
    %c5 = arith.constant 5 : index
    %c0_38 = arith.constant 0 : index
    %c0_39 = arith.constant 0 : index
    %65 = vector.load %arg3[%c5, %c0_38, %c0_39] : memref<9x8x4xbf16, #tpu.memory_space<vmem>>, vector<1x8x4xbf16>
    %66 = vector.shape_cast %65 : vector<1x8x4xbf16> to vector<8x4xbf16>
    %cst_40 = arith.constant dense<0.000000e+00> : vector<64x4xf32>
    %67 = tpu.matmul %64, %66, %cst_40 {dimension_numbers = #tpu.dot_dimension_numbers<[1], [0], [0], [1], [0, 0, 1, 1], [], []>} : vector<64x8xbf16>, vector<8x4xbf16>, vector<64x4xf32> -> vector<64x4xf32>
    %68 = arith.addf %58, %67 : vector<64x4xf32>
    %c23 = arith.constant 23 : index
    %c0_41 = arith.constant 0 : index
    %69 = vector.load %arg10[%c23, %c0_41] : memref<96x8xf32, #tpu.memory_space<vmem>>, vector<64x8xf32>
    %cst_42 = arith.constant 0.000000e+00 : f32
    %70 = vector.shape_cast %4 : vector<64x1xi1> to vector<64x1xi1>
    %71 = vector.broadcast %70 : vector<64x1xi1> to vector<64x8xi1>
    %72 = vector.broadcast %cst_42 : f32 to vector<64x8xf32>
    %73 = arith.select %71, %72, %69 : vector<64x8xi1>, vector<64x8xf32>
    %74 = arith.truncf %73 : vector<64x8xf32> to vector<64x8xbf16>
    %c6 = arith.constant 6 : index
    %c0_43 = arith.constant 0 : index
    %c0_44 = arith.constant 0 : index
    %75 = vector.load %arg3[%c6, %c0_43, %c0_44] : memref<9x8x4xbf16, #tpu.memory_space<vmem>>, vector<1x8x4xbf16>
    %76 = vector.shape_cast %75 : vector<1x8x4xbf16> to vector<8x4xbf16>
    %cst_45 = arith.constant dense<0.000000e+00> : vector<64x4xf32>
    %77 = tpu.matmul %74, %76, %cst_45 {dimension_numbers = #tpu.dot_dimension_numbers<[1], [0], [0], [1], [0, 0, 1, 1], [], []>} : vector<64x8xbf16>, vector<8x4xbf16>, vector<64x4xf32> -> vector<64x4xf32>
    %78 = arith.addf %68, %77 : vector<64x4xf32>
    %c24 = arith.constant 24 : index
    %c0_46 = arith.constant 0 : index
    %79 = vector.load %arg10[%c24, %c0_46] : memref<96x8xf32, #tpu.memory_space<vmem>>, vector<64x8xf32>
    %80 = arith.truncf %79 : vector<64x8xf32> to vector<64x8xbf16>
    %c7_47 = arith.constant 7 : index
    %c0_48 = arith.constant 0 : index
    %c0_49 = arith.constant 0 : index
    %81 = vector.load %arg3[%c7_47, %c0_48, %c0_49] : memref<9x8x4xbf16, #tpu.memory_space<vmem>>, vector<1x8x4xbf16>
    %82 = vector.shape_cast %81 : vector<1x8x4xbf16> to vector<8x4xbf16>
    %cst_50 = arith.constant dense<0.000000e+00> : vector<64x4xf32>
    %83 = tpu.matmul %80, %82, %cst_50 {dimension_numbers = #tpu.dot_dimension_numbers<[1], [0], [0], [1], [0, 0, 1, 1], [], []>} : vector<64x8xbf16>, vector<8x4xbf16>, vector<64x4xf32> -> vector<64x4xf32>
    %84 = arith.addf %78, %83 : vector<64x4xf32>
    %c25 = arith.constant 25 : index
    %c0_51 = arith.constant 0 : index
    %85 = vector.load %arg10[%c25, %c0_51] : memref<96x8xf32, #tpu.memory_space<vmem>>, vector<64x8xf32>
    %cst_52 = arith.constant 0.000000e+00 : f32
    %86 = vector.shape_cast %6 : vector<64x1xi1> to vector<64x1xi1>
    %87 = vector.broadcast %86 : vector<64x1xi1> to vector<64x8xi1>
    %88 = vector.broadcast %cst_52 : f32 to vector<64x8xf32>
    %89 = arith.select %87, %88, %85 : vector<64x8xi1>, vector<64x8xf32>
    %90 = arith.truncf %89 : vector<64x8xf32> to vector<64x8xbf16>
    %c8_53 = arith.constant 8 : index
    %c0_54 = arith.constant 0 : index
    %c0_55 = arith.constant 0 : index
    %91 = vector.load %arg3[%c8_53, %c0_54, %c0_55] : memref<9x8x4xbf16, #tpu.memory_space<vmem>>, vector<1x8x4xbf16>
    %92 = vector.shape_cast %91 : vector<1x8x4xbf16> to vector<8x4xbf16>
    %cst_56 = arith.constant dense<0.000000e+00> : vector<64x4xf32>
    %93 = tpu.matmul %90, %92, %cst_56 {dimension_numbers = #tpu.dot_dimension_numbers<[1], [0], [0], [1], [0, 0, 1, 1], [], []>} : vector<64x8xbf16>, vector<8x4xbf16>, vector<64x4xf32> -> vector<64x4xf32>
    %94 = arith.addf %84, %93 : vector<64x4xf32>
    %c0_57 = arith.constant 0 : index
    %c0_58 = arith.constant 0 : index
    %95 = vector.load %arg5[%c0_57, %c0_58] : memref<1x4xf32, #tpu.memory_space<vmem>>, vector<1x4xf32>
    %96 = vector.extract_strided_slice %8 {offsets = [0, 0], sizes = [1, 4], strides = [1, 1]} : vector<4x4xf32> to vector<1x4xf32>
    %97 = vector.extract_strided_slice %8 {offsets = [1, 0], sizes = [1, 4], strides = [1, 1]} : vector<4x4xf32> to vector<1x4xf32>
    %98 = vector.broadcast %95 : vector<1x4xf32> to vector<64x4xf32>
    %99 = arith.addf %94, %98 : vector<64x4xf32>
    %cst_59 = arith.constant 0.000000e+00 : f32
    %100 = vector.broadcast %cst_59 : f32 to vector<64x4xf32>
    %101 = arith.cmpf oge, %99, %100 : vector<64x4xf32>
    %cst_60 = arith.constant 2.000000e-01 : f32
    %102 = vector.broadcast %cst_60 : f32 to vector<64x4xf32>
    %103 = arith.mulf %102, %99 : vector<64x4xf32>
    %104 = arith.select %101, %99, %103 : vector<64x4xi1>, vector<64x4xf32>
    %cst_61 = arith.constant dense<0.000000e+00> : vector<4xf32>
    %105 = vector.multi_reduction <add>, %104, %cst_61 [0] : vector<64x4xf32> to vector<4xf32>
    %106 = vector.shape_cast %105 : vector<4xf32> to vector<1x4xf32>
    %cst_62 = arith.constant 6.400000e+01 : f32
    %107 = vector.broadcast %cst_62 : f32 to vector<1x4xf32>
    %108 = arith.divf %106, %107 : vector<1x4xf32>
    %109 = vector.broadcast %108 : vector<1x4xf32> to vector<64x4xf32>
    %110 = arith.subf %104, %109 : vector<64x4xf32>
    %111 = arith.mulf %110, %110 : vector<64x4xf32>
    %cst_63 = arith.constant dense<0.000000e+00> : vector<4xf32>
    %112 = vector.multi_reduction <add>, %111, %cst_63 [0] : vector<64x4xf32> to vector<4xf32>
    %113 = vector.shape_cast %112 : vector<4xf32> to vector<1x4xf32>
    %cst_64 = arith.constant 6.400000e+01 : f32
    %114 = vector.broadcast %cst_64 : f32 to vector<1x4xf32>
    %115 = arith.divf %113, %114 : vector<1x4xf32>
    %cst_65 = arith.constant 9.99999993E-9 : f32
    %116 = vector.broadcast %cst_65 : f32 to vector<1x4xf32>
    %117 = arith.addf %115, %116 : vector<1x4xf32>
    %118 = math.rsqrt %117 : vector<1x4xf32>
    %119 = vector.broadcast %118 : vector<1x4xf32> to vector<64x4xf32>
    %120 = arith.mulf %110, %119 : vector<64x4xf32>
    %121 = vector.broadcast %96 : vector<1x4xf32> to vector<64x4xf32>
    %122 = arith.mulf %121, %120 : vector<64x4xf32>
    %123 = vector.broadcast %97 : vector<1x4xf32> to vector<64x4xf32>
    %124 = arith.addf %122, %123 : vector<64x4xf32>
    %cst_66 = arith.constant 0.000000e+00 : f32
    %125 = vector.broadcast %cst_66 : f32 to vector<16x4xf32>
    %c0_67 = arith.constant 0 : index
    %c0_68 = arith.constant 0 : index
    %126 = vector.load %arg11[%c0_67, %c0_68] : memref<96x4xf32, #tpu.memory_space<vmem>>, vector<16x4xf32>
    tpu.vector_store %arg11[%c0_67, %c0_68], %125 {strides = array<i32>} : memref<96x4xf32, #tpu.memory_space<vmem>>, vector<16x4xf32>,
    %c80_69 = arith.constant 80 : index
    %c0_70 = arith.constant 0 : index
    %127 = vector.load %arg11[%c80_69, %c0_70] : memref<96x4xf32, #tpu.memory_space<vmem>>, vector<16x4xf32>
    tpu.vector_store %arg11[%c80_69, %c0_70], %125 {strides = array<i32>} : memref<96x4xf32, #tpu.memory_space<vmem>>, vector<16x4xf32>,
    %c16_71 = arith.constant 16 : index
    %c0_72 = arith.constant 0 : index
    %128 = vector.load %arg11[%c16_71, %c0_72] : memref<96x4xf32, #tpu.memory_space<vmem>>, vector<64x4xf32>
    tpu.vector_store %arg11[%c16_71, %c0_72], %124 {strides = array<i32>} : memref<96x4xf32, #tpu.memory_space<vmem>>, vector<64x4xf32>,
    %cst_73 = arith.constant 0.000000e+00 : f32
    %129 = vector.broadcast %cst_73 : f32 to vector<64x4xf32>
    %c7_74 = arith.constant 7 : index
    %c0_75 = arith.constant 0 : index
    %130 = vector.load %arg11[%c7_74, %c0_75] : memref<96x4xf32, #tpu.memory_space<vmem>>, vector<64x4xf32>
    %cst_76 = arith.constant 0.000000e+00 : f32
    %131 = vector.shape_cast %4 : vector<64x1xi1> to vector<64x1xi1>
    %132 = vector.broadcast %131 : vector<64x1xi1> to vector<64x4xi1>
    %133 = vector.broadcast %cst_76 : f32 to vector<64x4xf32>
    %134 = arith.select %132, %133, %130 : vector<64x4xi1>, vector<64x4xf32>
    %135 = arith.truncf %134 : vector<64x4xf32> to vector<64x4xbf16>
    %c0_77 = arith.constant 0 : index
    %c0_78 = arith.constant 0 : index
    %c0_79 = arith.constant 0 : index
    %136 = vector.load %arg4[%c0_77, %c0_78, %c0_79] : memref<9x4x4xbf16, #tpu.memory_space<vmem>>, vector<1x4x4xbf16>
    %137 = vector.shape_cast %136 : vector<1x4x4xbf16> to vector<4x4xbf16>
    %cst_80 = arith.constant dense<0.000000e+00> : vector<64x4xf32>
    %138 = tpu.matmul %135, %137, %cst_80 {dimension_numbers = #tpu.dot_dimension_numbers<[1], [0], [0], [1], [0, 0, 1, 1], [], []>} : vector<64x4xbf16>, vector<4x4xbf16>, vector<64x4xf32> -> vector<64x4xf32>
    %139 = arith.addf %129, %138 : vector<64x4xf32>
    %c8_81 = arith.constant 8 : index
    %c0_82 = arith.constant 0 : index
    %140 = vector.load %arg11[%c8_81, %c0_82] : memref<96x4xf32, #tpu.memory_space<vmem>>, vector<64x4xf32>
    %141 = arith.truncf %140 : vector<64x4xf32> to vector<64x4xbf16>
    %c1_83 = arith.constant 1 : index
    %c0_84 = arith.constant 0 : index
    %c0_85 = arith.constant 0 : index
    %142 = vector.load %arg4[%c1_83, %c0_84, %c0_85] : memref<9x4x4xbf16, #tpu.memory_space<vmem>>, vector<1x4x4xbf16>
    %143 = vector.shape_cast %142 : vector<1x4x4xbf16> to vector<4x4xbf16>
    %cst_86 = arith.constant dense<0.000000e+00> : vector<64x4xf32>
    %144 = tpu.matmul %141, %143, %cst_86 {dimension_numbers = #tpu.dot_dimension_numbers<[1], [0], [0], [1], [0, 0, 1, 1], [], []>} : vector<64x4xbf16>, vector<4x4xbf16>, vector<64x4xf32> -> vector<64x4xf32>
    %145 = arith.addf %139, %144 : vector<64x4xf32>
    %c9_87 = arith.constant 9 : index
    %c0_88 = arith.constant 0 : index
    %146 = vector.load %arg11[%c9_87, %c0_88] : memref<96x4xf32, #tpu.memory_space<vmem>>, vector<64x4xf32>
    %cst_89 = arith.constant 0.000000e+00 : f32
    %147 = vector.shape_cast %6 : vector<64x1xi1> to vector<64x1xi1>
    %148 = vector.broadcast %147 : vector<64x1xi1> to vector<64x4xi1>
    %149 = vector.broadcast %cst_89 : f32 to vector<64x4xf32>
    %150 = arith.select %148, %149, %146 : vector<64x4xi1>, vector<64x4xf32>
    %151 = arith.truncf %150 : vector<64x4xf32> to vector<64x4xbf16>
    %c2_90 = arith.constant 2 : index
    %c0_91 = arith.constant 0 : index
    %c0_92 = arith.constant 0 : index
    %152 = vector.load %arg4[%c2_90, %c0_91, %c0_92] : memref<9x4x4xbf16, #tpu.memory_space<vmem>>, vector<1x4x4xbf16>
    %153 = vector.shape_cast %152 : vector<1x4x4xbf16> to vector<4x4xbf16>
    %cst_93 = arith.constant dense<0.000000e+00> : vector<64x4xf32>
    %154 = tpu.matmul %151, %153, %cst_93 {dimension_numbers = #tpu.dot_dimension_numbers<[1], [0], [0], [1], [0, 0, 1, 1], [], []>} : vector<64x4xbf16>, vector<4x4xbf16>, vector<64x4xf32> -> vector<64x4xf32>
    %155 = arith.addf %145, %154 : vector<64x4xf32>
    %c15_94 = arith.constant 15 : index
    %c0_95 = arith.constant 0 : index
    %156 = vector.load %arg11[%c15_94, %c0_95] : memref<96x4xf32, #tpu.memory_space<vmem>>, vector<64x4xf32>
    %cst_96 = arith.constant 0.000000e+00 : f32
    %157 = vector.shape_cast %4 : vector<64x1xi1> to vector<64x1xi1>
    %158 = vector.broadcast %157 : vector<64x1xi1> to vector<64x4xi1>
    %159 = vector.broadcast %cst_96 : f32 to vector<64x4xf32>
    %160 = arith.select %158, %159, %156 : vector<64x4xi1>, vector<64x4xf32>
    %161 = arith.truncf %160 : vector<64x4xf32> to vector<64x4xbf16>
    %c3_97 = arith.constant 3 : index
    %c0_98 = arith.constant 0 : index
    %c0_99 = arith.constant 0 : index
    %162 = vector.load %arg4[%c3_97, %c0_98, %c0_99] : memref<9x4x4xbf16, #tpu.memory_space<vmem>>, vector<1x4x4xbf16>
    %163 = vector.shape_cast %162 : vector<1x4x4xbf16> to vector<4x4xbf16>
    %cst_100 = arith.constant dense<0.000000e+00> : vector<64x4xf32>
    %164 = tpu.matmul %161, %163, %cst_100 {dimension_numbers = #tpu.dot_dimension_numbers<[1], [0], [0], [1], [0, 0, 1, 1], [], []>} : vector<64x4xbf16>, vector<4x4xbf16>, vector<64x4xf32> -> vector<64x4xf32>
    %165 = arith.addf %155, %164 : vector<64x4xf32>
    %c16_101 = arith.constant 16 : index
    %c0_102 = arith.constant 0 : index
    %166 = vector.load %arg11[%c16_101, %c0_102] : memref<96x4xf32, #tpu.memory_space<vmem>>, vector<64x4xf32>
    %167 = arith.truncf %166 : vector<64x4xf32> to vector<64x4xbf16>
    %c4_103 = arith.constant 4 : index
    %c0_104 = arith.constant 0 : index
    %c0_105 = arith.constant 0 : index
    %168 = vector.load %arg4[%c4_103, %c0_104, %c0_105] : memref<9x4x4xbf16, #tpu.memory_space<vmem>>, vector<1x4x4xbf16>
    %169 = vector.shape_cast %168 : vector<1x4x4xbf16> to vector<4x4xbf16>
    %cst_106 = arith.constant dense<0.000000e+00> : vector<64x4xf32>
    %170 = tpu.matmul %167, %169, %cst_106 {dimension_numbers = #tpu.dot_dimension_numbers<[1], [0], [0], [1], [0, 0, 1, 1], [], []>} : vector<64x4xbf16>, vector<4x4xbf16>, vector<64x4xf32> -> vector<64x4xf32>
    %171 = arith.addf %165, %170 : vector<64x4xf32>
    %c17_107 = arith.constant 17 : index
    %c0_108 = arith.constant 0 : index
    %172 = vector.load %arg11[%c17_107, %c0_108] : memref<96x4xf32, #tpu.memory_space<vmem>>, vector<64x4xf32>
    %cst_109 = arith.constant 0.000000e+00 : f32
    %173 = vector.shape_cast %6 : vector<64x1xi1> to vector<64x1xi1>
    %174 = vector.broadcast %173 : vector<64x1xi1> to vector<64x4xi1>
    %175 = vector.broadcast %cst_109 : f32 to vector<64x4xf32>
    %176 = arith.select %174, %175, %172 : vector<64x4xi1>, vector<64x4xf32>
    %177 = arith.truncf %176 : vector<64x4xf32> to vector<64x4xbf16>
    %c5_110 = arith.constant 5 : index
    %c0_111 = arith.constant 0 : index
    %c0_112 = arith.constant 0 : index
    %178 = vector.load %arg4[%c5_110, %c0_111, %c0_112] : memref<9x4x4xbf16, #tpu.memory_space<vmem>>, vector<1x4x4xbf16>
    %179 = vector.shape_cast %178 : vector<1x4x4xbf16> to vector<4x4xbf16>
    %cst_113 = arith.constant dense<0.000000e+00> : vector<64x4xf32>
    %180 = tpu.matmul %177, %179, %cst_113 {dimension_numbers = #tpu.dot_dimension_numbers<[1], [0], [0], [1], [0, 0, 1, 1], [], []>} : vector<64x4xbf16>, vector<4x4xbf16>, vector<64x4xf32> -> vector<64x4xf32>
    %181 = arith.addf %171, %180 : vector<64x4xf32>
    %c23_114 = arith.constant 23 : index
    %c0_115 = arith.constant 0 : index
    %182 = vector.load %arg11[%c23_114, %c0_115] : memref<96x4xf32, #tpu.memory_space<vmem>>, vector<64x4xf32>
    %cst_116 = arith.constant 0.000000e+00 : f32
    %183 = vector.shape_cast %4 : vector<64x1xi1> to vector<64x1xi1>
    %184 = vector.broadcast %183 : vector<64x1xi1> to vector<64x4xi1>
    %185 = vector.broadcast %cst_116 : f32 to vector<64x4xf32>
    %186 = arith.select %184, %185, %182 : vector<64x4xi1>, vector<64x4xf32>
    %187 = arith.truncf %186 : vector<64x4xf32> to vector<64x4xbf16>
    %c6_117 = arith.constant 6 : index
    %c0_118 = arith.constant 0 : index
    %c0_119 = arith.constant 0 : index
    %188 = vector.load %arg4[%c6_117, %c0_118, %c0_119] : memref<9x4x4xbf16, #tpu.memory_space<vmem>>, vector<1x4x4xbf16>
    %189 = vector.shape_cast %188 : vector<1x4x4xbf16> to vector<4x4xbf16>
    %cst_120 = arith.constant dense<0.000000e+00> : vector<64x4xf32>
    %190 = tpu.matmul %187, %189, %cst_120 {dimension_numbers = #tpu.dot_dimension_numbers<[1], [0], [0], [1], [0, 0, 1, 1], [], []>} : vector<64x4xbf16>, vector<4x4xbf16>, vector<64x4xf32> -> vector<64x4xf32>
    %191 = arith.addf %181, %190 : vector<64x4xf32>
    %c24_121 = arith.constant 24 : index
    %c0_122 = arith.constant 0 : index
    %192 = vector.load %arg11[%c24_121, %c0_122] : memref<96x4xf32, #tpu.memory_space<vmem>>, vector<64x4xf32>
    %193 = arith.truncf %192 : vector<64x4xf32> to vector<64x4xbf16>
    %c7_123 = arith.constant 7 : index
    %c0_124 = arith.constant 0 : index
    %c0_125 = arith.constant 0 : index
    %194 = vector.load %arg4[%c7_123, %c0_124, %c0_125] : memref<9x4x4xbf16, #tpu.memory_space<vmem>>, vector<1x4x4xbf16>
    %195 = vector.shape_cast %194 : vector<1x4x4xbf16> to vector<4x4xbf16>
    %cst_126 = arith.constant dense<0.000000e+00> : vector<64x4xf32>
    %196 = tpu.matmul %193, %195, %cst_126 {dimension_numbers = #tpu.dot_dimension_numbers<[1], [0], [0], [1], [0, 0, 1, 1], [], []>} : vector<64x4xbf16>, vector<4x4xbf16>, vector<64x4xf32> -> vector<64x4xf32>
    %197 = arith.addf %191, %196 : vector<64x4xf32>
    %c25_127 = arith.constant 25 : index
    %c0_128 = arith.constant 0 : index
    %198 = vector.load %arg11[%c25_127, %c0_128] : memref<96x4xf32, #tpu.memory_space<vmem>>, vector<64x4xf32>
    %cst_129 = arith.constant 0.000000e+00 : f32
    %199 = vector.shape_cast %6 : vector<64x1xi1> to vector<64x1xi1>
    %200 = vector.broadcast %199 : vector<64x1xi1> to vector<64x4xi1>
    %201 = vector.broadcast %cst_129 : f32 to vector<64x4xf32>
    %202 = arith.select %200, %201, %198 : vector<64x4xi1>, vector<64x4xf32>
    %203 = arith.truncf %202 : vector<64x4xf32> to vector<64x4xbf16>
    %c8_130 = arith.constant 8 : index
    %c0_131 = arith.constant 0 : index
    %c0_132 = arith.constant 0 : index
    %204 = vector.load %arg4[%c8_130, %c0_131, %c0_132] : memref<9x4x4xbf16, #tpu.memory_space<vmem>>, vector<1x4x4xbf16>
    %205 = vector.shape_cast %204 : vector<1x4x4xbf16> to vector<4x4xbf16>
    %cst_133 = arith.constant dense<0.000000e+00> : vector<64x4xf32>
    %206 = tpu.matmul %203, %205, %cst_133 {dimension_numbers = #tpu.dot_dimension_numbers<[1], [0], [0], [1], [0, 0, 1, 1], [], []>} : vector<64x4xbf16>, vector<4x4xbf16>, vector<64x4xf32> -> vector<64x4xf32>
    %207 = arith.addf %197, %206 : vector<64x4xf32>
    %c0_134 = arith.constant 0 : index
    %c0_135 = arith.constant 0 : index
    %208 = vector.load %arg6[%c0_134, %c0_135] : memref<1x4xf32, #tpu.memory_space<vmem>>, vector<1x4xf32>
    %209 = vector.extract_strided_slice %8 {offsets = [2, 0], sizes = [1, 4], strides = [1, 1]} : vector<4x4xf32> to vector<1x4xf32>
    %210 = vector.extract_strided_slice %8 {offsets = [3, 0], sizes = [1, 4], strides = [1, 1]} : vector<4x4xf32> to vector<1x4xf32>
    %211 = vector.broadcast %208 : vector<1x4xf32> to vector<64x4xf32>
    %212 = arith.addf %207, %211 : vector<64x4xf32>
    %cst_136 = arith.constant 0.000000e+00 : f32
    %213 = vector.broadcast %cst_136 : f32 to vector<64x4xf32>
    %214 = arith.cmpf oge, %212, %213 : vector<64x4xf32>
    %cst_137 = arith.constant 2.000000e-01 : f32
    %215 = vector.broadcast %cst_137 : f32 to vector<64x4xf32>
    %216 = arith.mulf %215, %212 : vector<64x4xf32>
    %217 = arith.select %214, %212, %216 : vector<64x4xi1>, vector<64x4xf32>
    %cst_138 = arith.constant dense<0.000000e+00> : vector<4xf32>
    %218 = vector.multi_reduction <add>, %217, %cst_138 [0] : vector<64x4xf32> to vector<4xf32>
    %219 = vector.shape_cast %218 : vector<4xf32> to vector<1x4xf32>
    %cst_139 = arith.constant 6.400000e+01 : f32
    %220 = vector.broadcast %cst_139 : f32 to vector<1x4xf32>
    %221 = arith.divf %219, %220 : vector<1x4xf32>
    %222 = vector.broadcast %221 : vector<1x4xf32> to vector<64x4xf32>
    %223 = arith.subf %217, %222 : vector<64x4xf32>
    %224 = arith.mulf %223, %223 : vector<64x4xf32>
    %cst_140 = arith.constant dense<0.000000e+00> : vector<4xf32>
    %225 = vector.multi_reduction <add>, %224, %cst_140 [0] : vector<64x4xf32> to vector<4xf32>
    %226 = vector.shape_cast %225 : vector<4xf32> to vector<1x4xf32>
    %cst_141 = arith.constant 6.400000e+01 : f32
    %227 = vector.broadcast %cst_141 : f32 to vector<1x4xf32>
    %228 = arith.divf %226, %227 : vector<1x4xf32>
    %cst_142 = arith.constant 9.99999993E-9 : f32
    %229 = vector.broadcast %cst_142 : f32 to vector<1x4xf32>
    %230 = arith.addf %228, %229 : vector<1x4xf32>
    %231 = math.rsqrt %230 : vector<1x4xf32>
    %232 = vector.broadcast %231 : vector<1x4xf32> to vector<64x4xf32>
    %233 = arith.mulf %223, %232 : vector<64x4xf32>
    %234 = vector.broadcast %209 : vector<1x4xf32> to vector<64x4xf32>
    %235 = arith.mulf %234, %233 : vector<64x4xf32>
    %236 = vector.broadcast %210 : vector<1x4xf32> to vector<64x4xf32>
    %237 = arith.addf %235, %236 : vector<64x4xf32>
    %238 = arith.truncf %237 : vector<64x4xf32> to vector<64x4xbf16>
    %c0_143 = arith.constant 0 : index
    %c0_144 = arith.constant 0 : index
    %239 = vector.load %arg7[%c0_143, %c0_144] : memref<4x3xbf16, #tpu.memory_space<vmem>>, vector<4x3xbf16>
    %cst_145 = arith.constant dense<0.000000e+00> : vector<64x3xf32>
    %240 = tpu.matmul %238, %239, %cst_145 {dimension_numbers = #tpu.dot_dimension_numbers<[1], [0], [0], [1], [0, 0, 1, 1], [], []>} : vector<64x4xbf16>, vector<4x3xbf16>, vector<64x3xf32> -> vector<64x3xf32>
    %c0_146 = arith.constant 0 : index
    %c0_147 = arith.constant 0 : index
    %241 = vector.load %arg8[%c0_146, %c0_147] : memref<1x3xf32, #tpu.memory_space<vmem>>, vector<1x3xf32>
    %242 = vector.broadcast %241 : vector<1x3xf32> to vector<64x3xf32>
    %243 = arith.addf %240, %242 : vector<64x3xf32>
    %c0_148 = arith.constant 0 : index
    %c0_149 = arith.constant 0 : index
    %c0_150 = arith.constant 0 : index
    %244 = vector.load %arg9[%c0_148, %c0_149, %c0_150] : memref<1x64x3xf32, #tpu.memory_space<vmem>>, vector<1x64x3xf32>
    %245 = vector.shape_cast %244 : vector<1x64x3xf32> to vector<64x3xf32>
    %246 = vector.shape_cast %243 : vector<64x3xf32> to vector<1x64x3xf32>
    tpu.vector_store %arg9[%c0_148, %c0_149, %c0_150], %246 {strides = array<i32>} : memref<1x64x3xf32, #tpu.memory_space<vmem>>, vector<1x64x3xf32>,
    return
  }
  func.func @transform_0(%arg0: i32) -> (i32, i32, i32) {
    %c0_i32 = arith.constant 0 : i32
    %c0_i32_0 = arith.constant 0 : i32
    %c0_i32_1 = arith.constant 0 : i32
    return %arg0, %c0_i32, %c0_i32_0 : i32, i32, i32
  }
  func.func @transform_1(%arg0: i32) -> (i32, i32, i32) {
    %c0_i32 = arith.constant 0 : i32
    %c0_i32_0 = arith.constant 0 : i32
    %c0_i32_1 = arith.constant 0 : i32
    return %arg0, %c0_i32, %c0_i32_0 : i32, i32, i32
  }
  func.func @transform_2(%arg0: i32) -> (i32, i32, i32) {
    %c0_i32 = arith.constant 0 : i32
    %c0_i32_0 = arith.constant 0 : i32
    %c0_i32_1 = arith.constant 0 : i32
    %c0_i32_2 = arith.constant 0 : i32
    return %c0_i32, %c0_i32_0, %c0_i32_1 : i32, i32, i32
  }
  func.func @transform_3(%arg0: i32) -> (i32, i32, i32) {
    %c0_i32 = arith.constant 0 : i32
    %c0_i32_0 = arith.constant 0 : i32
    %c0_i32_1 = arith.constant 0 : i32
    %c0_i32_2 = arith.constant 0 : i32
    return %c0_i32, %c0_i32_0, %c0_i32_1 : i32, i32, i32
  }
  func.func @transform_4(%arg0: i32) -> (i32, i32) {
    %c0_i32 = arith.constant 0 : i32
    %c0_i32_0 = arith.constant 0 : i32
    %c0_i32_1 = arith.constant 0 : i32
    return %c0_i32, %c0_i32_0 : i32, i32
  }
  func.func @transform_5(%arg0: i32) -> (i32, i32) {
    %c0_i32 = arith.constant 0 : i32
    %c0_i32_0 = arith.constant 0 : i32
    %c0_i32_1 = arith.constant 0 : i32
    return %c0_i32, %c0_i32_0 : i32, i32
  }
  func.func @transform_6(%arg0: i32) -> (i32, i32) {
    %c0_i32 = arith.constant 0 : i32
    %c0_i32_0 = arith.constant 0 : i32
    %c0_i32_1 = arith.constant 0 : i32
    return %c0_i32, %c0_i32_0 : i32, i32
  }
  func.func @transform_7(%arg0: i32) -> (i32, i32) {
    %c0_i32 = arith.constant 0 : i32
    %c0_i32_0 = arith.constant 0 : i32
    %c0_i32_1 = arith.constant 0 : i32
    return %c0_i32, %c0_i32_0 : i32, i32
  }
  func.func @transform_8(%arg0: i32) -> (i32, i32, i32) {
    %c0_i32 = arith.constant 0 : i32
    %c0_i32_0 = arith.constant 0 : i32
    %c0_i32_1 = arith.constant 0 : i32
    return %arg0, %c0_i32, %c0_i32_0 : i32, i32, i32
  }
}

</mosaic_0001>

<llo_original>
// kernel: generator_forward.2
$region0: #{generator_forward.2}
  #allocation0 [shape = 'u32[]', space=smem, size = 0x4, offset = 0x4, fixed_abs, tag = 'smem constant byte address 0x4 - core index']
  #allocation1 [shape = 'u32[72,128]{1,0:T(1,128)}', space=vmem, size = 0x9000, scoped, tag = 'internal scratch']
  #allocation2 [shape = 'f32[32,8]{1,0:T(8,128)}', space=vmem, size = 0x4000, scoped, tag = 'scratch operand']
  %s0 = inlined_call_operand.vmem [shape: f32[2,4,8], index: 0, kind: input, shape index: {}]
  %s1 = inlined_call_operand.vmem [shape: f32[16,8], index: 1, kind: input, shape index: {}]
  %s2 = inlined_call_operand.vmem [shape: bf16[9,8,8], index: 2, kind: input, shape index: {}]
  %s3 = inlined_call_operand.vmem [shape: f32[1,8], index: 3, kind: input, shape index: {}]
  %s4 = inlined_call_operand.vmem [shape: f32[1,8], index: 4, kind: input, shape index: {}]
  %s5 = inlined_call_operand.vmem [shape: bf16[2,16,8], index: 5, kind: output, shape index: {}]
  %s6 = sld [smem:[#allocation0]]
  $region53: #{generator_forward.2} parent=0
    _
  %s8 = ssub.s32 1, %s6
  %s9 = scalar_select 0, %s8, %s6
  loop: start=0, step=1, limit=4
  $region2: #{generator_forward.2} parent=0 // loop_pre_header
    _
  $region3: #{generator_forward.2} parent=0 // loop_header
    %s11 = sphi 0, %s15
    %p12 = scmp.ge.s32.totalorder %s11, 4
    %s21 = sphi 0, %s23
    %s24 = sphi 0, %s21
    %s25 = sphi 0, %s24
    %s41 = sphi 0, %s25
    %s45 = sphi 0, %s45
    %s47 = sphi 0, %s45
    %s48 = sphi 0, %s47
    %s62 = sphi 0, %s48
    %s66 = sphi 0, %s66
    %s68 = sphi 0, %s66
    %s69 = sphi 0, %s68
    %s83 = sphi 0, %s69
    %s87 = sphi 0, %s87
    %s89 = sphi 0, %s87
    %s90 = sphi 0, %s89
    %s104 = sphi 0, %s90
    %s108 = sphi 0, %s108
    %s110 = sphi 0, %s108
    %s111 = sphi 0, %s110
    %s125 = sphi 0, %s111
    %s131 = sphi 0, %s133
    %s134 = sphi 0, %s131
    %s135 = sphi 0, %s134
    %s151 = sphi 0, %s135
  $region4: #{generator_forward.2} parent=0 // loop_header_branch
    %14 = sbr.rel (%p12) target = $region8
  $region5: #{generator_forward.2} parent=0 // loop_body
    %s16 = ssub.s32 %s11, 1
    %s17 = ssub.s32 %s11, 2
    %s18 = sadd.s32 %s11, 1
    %s19 = ssub.s32 %s11, %s18
    %p20 = scmp.eq.s32.totalorder %s19, 0
    %s22 = sadd.s32 %s21, 1
    %s23 = scalar_select %p20, %s21, %s22
    %p26 = pneg %p20
    %p27 = scmp.eq.s32.totalorder %s11, 1
    %p28 = por %p26, %p27
    %p29 = scmp.ne.s32.totalorder %s21, %s24
    %p30 = scmp.eq.s32.totalorder %s11, 0
    %p31 = por %p29, %p30
    %p32 = scmp.ne.s32.totalorder %s21, %s24
    %p33 = scmp.eq.s32.totalorder %s16, 1
    %p34 = por %p32, %p33
    %p35 = scmp.ne.s32.totalorder %s24, %s25
    %p36 = scmp.eq.s32.totalorder %s16, 0
    %p37 = por %p35, %p36
    %p38 = scmp.ne.s32.totalorder %s24, %s25
    %p39 = scmp.eq.s32.totalorder %s17, 1
    %p40 = por %p38, %p39
    %p42 = scmp.ne.s32.totalorder %s25, %s41
    %p43 = scmp.eq.s32.totalorder %s17, 0
    %p44 = por %p42, %p43
    %s46 = sadd.s32 %s45, 1
    %p49 = scmp.eq.s32.totalorder %s11, 1
    %p50 = scmp.ne.s32.totalorder %s45, %s47
    %p51 = scmp.eq.s32.totalorder %s11, 0
    %p52 = por %p50, %p51
    %p53 = scmp.ne.s32.totalorder %s45, %s47
    %p54 = scmp.eq.s32.totalorder %s16, 1
    %p55 = por %p53, %p54
    %p56 = scmp.ne.s32.totalorder %s47, %s48
    %p57 = scmp.eq.s32.totalorder %s16, 0
    %p58 = por %p56, %p57
    %p59 = scmp.ne.s32.totalorder %s47, %s48
    %p60 = scmp.eq.s32.totalorder %s17, 1
    %p61 = por %p59, %p60
    %p63 = scmp.ne.s32.totalorder %s48, %s62
    %p64 = scmp.eq.s32.totalorder %s17, 0
    %p65 = por %p63, %p64
    %s67 = sadd.s32 %s66, 1
    %p70 = scmp.eq.s32.totalorder %s11, 1
    %p71 = scmp.ne.s32.totalorder %s66, %s68
    %p72 = scmp.eq.s32.totalorder %s11, 0
    %p73 = por %p71, %p72
    %p74 = scmp.ne.s32.totalorder %s66, %s68
    %p75 = scmp.eq.s32.totalorder %s16, 1
    %p76 = por %p74, %p75
    %p77 = scmp.ne.s32.totalorder %s68, %s69
    %p78 = scmp.eq.s32.totalorder %s16, 0
    %p79 = por %p77, %p78
    %p80 = scmp.ne.s32.totalorder %s68, %s69
    %p81 = scmp.eq.s32.totalorder %s17, 1
    %p82 = por %p80, %p81
    %p84 = scmp.ne.s32.totalorder %s69, %s83
    %p85 = scmp.eq.s32.totalorder %s17, 0
    %p86 = por %p84, %p85
    %s88 = sadd.s32 %s87, 1
    %p91 = scmp.eq.s32.totalorder %s11, 1
    %p92 = scmp.ne.s32.totalorder %s87, %s89
    %p93 = scmp.eq.s32.totalorder %s11, 0
    %p94 = por %p92, %p93
    %p95 = scmp.ne.s32.totalorder %s87, %s89
    %p96 = scmp.eq.s32.totalorder %s16, 1
    %p97 = por %p95, %p96
    %p98 = scmp.ne.s32.totalorder %s89, %s90
    %p99 = scmp.eq.s32.totalorder %s16, 0
    %p100 = por %p98, %p99
    %p101 = scmp.ne.s32.totalorder %s89, %s90
    %p102 = scmp.eq.s32.totalorder %s17, 1
    %p103 = por %p101, %p102
    %p105 = scmp.ne.s32.totalorder %s90, %s104
    %p106 = scmp.eq.s32.totalorder %s17, 0
    %p107 = por %p105, %p106
    %s109 = sadd.s32 %s108, 1
    %p112 = scmp.eq.s32.totalorder %s11, 1
    %p113 = scmp.ne.s32.totalorder %s108, %s110
    %p114 = scmp.eq.s32.totalorder %s11, 0
    %p115 = por %p113, %p114
    %p116 = scmp.ne.s32.totalorder %s108, %s110
    %p117 = scmp.eq.s32.totalorder %s16, 1
    %p118 = por %p116, %p117
    %p119 = scmp.ne.s32.totalorder %s110, %s111
    %p120 = scmp.eq.s32.totalorder %s16, 0
    %p121 = por %p119, %p120
    %p122 = scmp.ne.s32.totalorder %s110, %s111
    %p123 = scmp.eq.s32.totalorder %s17, 1
    %p124 = por %p122, %p123
    %p126 = scmp.ne.s32.totalorder %s111, %s125
    %p127 = scmp.eq.s32.totalorder %s17, 0
    %p128 = por %p126, %p127
    %s129 = ssub.s32 %s11, %s18
    %p130 = scmp.eq.s32.totalorder %s129, 0
    %s132 = sadd.s32 %s131, 1
    %s133 = scalar_select %p130, %s131, %s132
    %p136 = pneg %p130
    %p137 = scmp.eq.s32.totalorder %s11, 1
    %p138 = por %p136, %p137
    %p139 = scmp.ne.s32.totalorder %s131, %s134
    %p140 = scmp.eq.s32.totalorder %s11, 0
    %p141 = por %p139, %p140
    %p142 = scmp.ne.s32.totalorder %s131, %s134
    %p143 = scmp.eq.s32.totalorder %s16, 1
    %p144 = por %p142, %p143
    %p145 = scmp.ne.s32.totalorder %s134, %s135
    %p146 = scmp.eq.s32.totalorder %s16, 0
    %p147 = por %p145, %p146
    %p148 = scmp.ne.s32.totalorder %s134, %s135
    %p149 = scmp.eq.s32.totalorder %s17, 1
    %p150 = por %p148, %p149
    %p152 = scmp.ne.s32.totalorder %s135, %s151
    %p153 = scmp.eq.s32.totalorder %s17, 0
    %p154 = por %p152, %p153
    %p155 = scmp.le.s32.totalorder 1, %s11
    %p156 = scmp.lt.s32.totalorder %s11, 3
    %p157 = pnand %p155, %p156
    %p158 = pneg %p157
    // Predicated region
    $region9: #{generator_forward.2} parent=5 // pred_check
      _
    $region10: #{generator_forward.2} parent=5 // pred_check_branch
      %160 = sbr.rel (%p157) target = $region12
    $region11: #{generator_forward.2} parent=5 // pred_region
      %s161 = ssub.s32 %s11, 1
      // Predicated region
      $region13: #{generator_forward.2} parent=11 // pred_check
        %p162 = pneg %p58
      $region14: #{generator_forward.2} parent=11 // pred_check_branch
        %164 = sbr.rel (%p162) target = $region16
      $region15: #{generator_forward.2} parent=11 // pred_region
        _
      $region16: #{generator_forward.2} parent=11 // pred_fallthru
        _
      // Predicated region
      $region17: #{generator_forward.2} parent=11 // pred_check
        %p165 = pneg %p79
      $region18: #{generator_forward.2} parent=11 // pred_check_branch
        %167 = sbr.rel (%p165) target = $region20
      $region19: #{generator_forward.2} parent=11 // pred_region
        _
      $region20: #{generator_forward.2} parent=11 // pred_fallthru
        _
      // Predicated region
      $region21: #{generator_forward.2} parent=11 // pred_check
        %p168 = pneg %p100
      $region22: #{generator_forward.2} parent=11 // pred_check_branch
        %170 = sbr.rel (%p168) target = $region24
      $region23: #{generator_forward.2} parent=11 // pred_region
        _
      $region24: #{generator_forward.2} parent=11 // pred_fallthru
        _
      // Predicated region
      $region25: #{generator_forward.2} parent=11 // pred_check
        %p171 = pneg %p121
      $region26: #{generator_forward.2} parent=11 // pred_check_branch
        %173 = sbr.rel (%p171) target = $region28
      $region27: #{generator_forward.2} parent=11 // pred_region
        _
      $region28: #{generator_forward.2} parent=11 // pred_fallthru
        _
    $region12: #{generator_forward.2} parent=5 // pred_fallthru
      _
    %p174 = scmp.lt.s32.totalorder %s11, 2
    // Predicated region
    $region29: #{generator_forward.2} parent=5 // pred_check
      %p175 = pneg %p174
    $region30: #{generator_forward.2} parent=5 // pred_check_branch
      %177 = sbr.rel (%p175) target = $region32
    $region31: #{generator_forward.2} parent=5 // pred_region
      // Predicated region
      $region33: #{generator_forward.2} parent=31 // pred_check
        %p178 = pneg %p31
      $region34: #{generator_forward.2} parent=31 // pred_check_branch
        %180 = sbr.rel (%p178) target = $region36
      $region35: #{generator_forward.2} parent=31 // pred_region
        %p181 = scmp.lt.s32.totalorder %s11, 1
        %s182 = scalar_select %p181, %s11, 1
        %s183 = smul.addr %s182, 4
        %s184 = scalar_lea.vmem %s0, %s183
      $region36: #{generator_forward.2} parent=31 // pred_fallthru
        _
    $region32: #{generator_forward.2} parent=5 // pred_fallthru
      _
    %p185 = scmp.le.s32.totalorder 1, %s11
    %p186 = scmp.lt.s32.totalorder %s11, 3
    %p187 = pnand %p185, %p186
    %p188 = pneg %p187
    // Predicated region
    $region37: #{generator_forward.2} parent=5 // pred_check
      _
    $region38: #{generator_forward.2} parent=5 // pred_check_branch
      %190 = sbr.rel (%p187) target = $region40
    $region39: #{generator_forward.2} parent=5 // pred_region
      %s191 = ssub.s32 %s11, 1
      %p192 = scmp.lt.s32.totalorder %s16, 1
      %s193 = scalar_select %p192, %s16, 1
      %s194 = smul.addr %s193, 4
      %s195 = scalar_lea.vmem %s0, %s194
      %p196 = pneg %p37
      %p197 = pneg %p34
      %p198 = pneg %p58
      %p199 = pneg %p55
      %p200 = pneg %p79
      %p201 = pneg %p76
      %p202 = pneg %p100
      %p203 = pneg %p97
      %p204 = pneg %p121
      %p205 = pneg %p118
      %p206 = pneg %p147
      %p207 = pneg %p144
      %p208 = scmp.lt.s32.totalorder %s16, 1
      %s209 = scalar_select %p208, %s16, 1
      %s210 = smul.addr %s209, 2
      %s211 = smul.addr %s210, 4
      %s212 = scalar_lea.vmem %s5, %s211
      %p213 = scmp.lt.s32.totalorder %s16, 1
      %s214 = scalar_select %p213, %s16, 1
      %s215 = smul.addr %s214, 4
      %s216 = scalar_lea.vmem %s0, %s215
      %p217 = scmp.lt.s32.totalorder %s16, 1
      %s218 = scalar_select %p217, %s16, 1
      %s219 = smul.addr %s218, 2
      %s220 = smul.addr %s219, 4
      %s221 = scalar_lea.vmem %s5, %s220
      %v223 = vlaneseq
      %v224 = vshrl.u32 %v223, 7
      %v225 = vadd.s32 %v224, 8
      %v226 = vand.u32 %v224, 3
      %v227 = vand.u32 %v225, 3
      %vm228 = vcmp.eq.s32.totalorder %v226, 0
      %vm229 = vcmp.eq.s32.totalorder %v227, 0
      %vm230 = vcmp.eq.s32.totalorder %v226, 3
      %vm231 = vcmp.eq.s32.totalorder %v227, 3
      %v232 = vld [vmem:[%s216] sm:$0xf]
      %v233 = vld [vmem:[%s1] sm:$0xff]
      %v234 = vld [vmem:[%s1 + $0x8] sm:$0xff]
      %v235 = vld [vmem:[%s3] sm:$0x1]
      %v237 = vperm.slane %v235, 0
      %v239 = vadd.f32 %v233, %v237
      %v240 = vadd.f32 %v234, %v237
      %vm241 = vcmp.ge.f32.partialorder %v239, 0.0
      %vm242 = vcmp.ge.f32.partialorder %v240, 0.0
      %v243 = vmul.f32 %v239, 0.2
      %v244 = vmul.f32 %v240, 0.2
      %v245 = vsel %vm241, %v239, %v243
      %v246 = vsel %vm242, %v240, %v244
      %vm247 = vcmask 64512
      %v248 = vsel %vm247, %v245, 0.0
      %v249 = vsel %vm247, %v246, 0.0
      %v250 = vadd.f32 %v248, %v249
      %v251 = vrot.slane %v250, 4
      %v252 = vadd.f32 %v250, %v251
      %v253 = vrot.slane %v252, 2
      %v254 = vadd.f32 %v252, %v253
      %v255 = vrot.slane %v254, 1
      %v256 = vadd.f32 %v254, %v255
      %v257 = vrcp.pop 16.0
      %v258 = vmul.f32 16.0, %v257
      %v259 = vsub.f32 1.0, %v258
      %v260 = vmul.f32 %v257, %v259
      %v261 = vadd.f32 %v257, %v260
      %vm262 = vweird.f32 %v257
      %v263 = vsel %vm262, %v257, %v261
      %v264 = vmul.f32 %v256, %v263
      %v265 = vsub.f32 %v245, %v264
      %v266 = vsub.f32 %v246, %v264
      %v267 = vmul.f32 %v265, %v265
      %v268 = vmul.f32 %v266, %v266
      %v269 = vsel %vm247, %v267, 0.0
      %v270 = vsel %vm247, %v268, 0.0
      %v271 = vadd.f32 %v269, %v270
      %v272 = vrot.slane %v271, 4
      %v273 = vadd.f32 %v271, %v272
      %v274 = vrot.slane %v273, 2
      %v275 = vadd.f32 %v273, %v274
      %v276 = vrot.slane %v275, 1
      %v277 = vadd.f32 %v275, %v276
      %v278 = vmul.f32 %v277, %v263
      %v279 = vadd.f32 %v278, 1e-08
      %v280 = vrsqrt.pop %v279
      %v281 = vmul.f32 %v280, %v279
      %v282 = vmul.f32 %v281, %v280
      %v283 = vmul.f32 0.5, %v282
      %v284 = vsub.f32 1.5, %v283
      %v285 = vmul.f32 %v280, %v284
      %vm286 = vweird.f32 %v279
      %vm287 = vweird.f32 %v280
      %vm288 = vmor %vm286, %vm287
      %v289 = vsel %vm288, %v280, %v285
      %v290 = vmul.f32 %v265, %v289
      %v291 = vmul.f32 %v266, %v289
      %v292 = vperm.slane %v232, 0
      %v293 = vmul.f32 %v292, %v290
      %v294 = vmul.f32 %v292, %v291
      %v295 = vperm.slane %v232, 1
      %v296 = vadd.f32 %v293, %v295
      %v297 = vadd.f32 %v294, %v295
      %298 = vst.msk [vmem:[#allocation2] sm:$0xff] %vm247, 0.0
      %299 = vst.msk [vmem:[#allocation2 + $0x18] sm:$0xff] %vm247, 0.0
      %300 = vst.msk [vmem:[#allocation2 + $0x8] sm:$0xff] %vm247, %v296
      %301 = vst.msk [vmem:[#allocation2 + $0x10] sm:$0xff] %vm247, %v297
      %v302 = vld [vmem:[#allocation2 + $0x3] sm:$0xff]
      %v303 = vld [vmem:[#allocation2 + $0xb] sm:$0xff]
      %v304 = vsel %vm228, 1, 0
      %v305 = vsel %vm229, 1, 0
      %vm306 = vcmp.eq.s32.totalorder %v304, 1
      %vm307 = vcmp.eq.s32.totalorder %v305, 1
      %v308 = vsel %vm306, 0.0, %v302
      %v309 = vsel %vm307, 0.0, %v303
      %v310 = vpack.c.bf16 %v309, %v308
      %v311 = vld [vmem:[%s2] sm:$0xf]
      %v312 = vld [vmem:[#allocation2 + $0x4] sm:$0xff]
      %v313 = vld [vmem:[#allocation2 + $0xc] sm:$0xff]
      %v314 = vpack.c.bf16 %v313, %v312
      %s315 = scalar_lea.vmem %s2, 4
      %v316 = vld [vmem:[%s315] sm:$0xf]
      %v318 = vsel %vm247, %v314, 0
      %vm320 = vcmask 1043456
      %v322 = vsel %vm320, %v316, 0
      %324 = vmatpush.bf16.msra.mxu0 0
      %325 = vmatpush.bf16.msra.mxu0 0
      %326 = vmatpush.bf16.msra.mxu0 0
      %327 = vmatpush.bf16.msra.mxu0 0
      %328 = vmatpush.bf16.msra.mxu0 0
      %329 = vmatpush.bf16.msra.mxu0 0
      %330 = vmatpush.bf16.msra.mxu0 0
      %331 = vmatpush.bf16.msra.mxu0 %v322
      %332 = vmatmul.bf16.gmra.mxu0 %v318
      %v333 = vpop.f32.mrf.mxu0
      %v334 = vadd.f32 0.0, %v333
      %v335 = vpop.f32.mrf.mxu0
      %v336 = vadd.f32 0.0, %v335
      %337 = vdwg.mxu0
      %v339 = vsel %vm247, %v310, 0
      %v342 = vsel %vm320, %v311, 0
      %344 = vmatpush.bf16.msra.mxu0 0
      %345 = vmatpush.bf16.msra.mxu0 0
      %346 = vmatpush.bf16.msra.mxu0 0
      %347 = vmatpush.bf16.msra.mxu0 0
      %348 = vmatpush.bf16.msra.mxu0 0
      %349 = vmatpush.bf16.msra.mxu0 0
      %350 = vmatpush.bf16.msra.mxu0 0
      %351 = vmatpush.bf16.msra.mxu0 %v342
      %352 = vmatmul.bf16.gmra.mxu0 %v339
      %v353 = vpop.f32.mrf.mxu0
      %v354 = vadd.f32 %v334, %v353
      %v355 = vpop.f32.mrf.mxu0
      %v356 = vadd.f32 %v336, %v355
      %357 = vdwg.mxu0
      %v358 = vld [vmem:[#allocation2 + $0x5] sm:$0xff]
      %v359 = vld [vmem:[#allocation2 + $0xd] sm:$0xff]
      %v360 = vsel %vm230, 1, 0
      %v361 = vsel %vm231, 1, 0
      %vm362 = vcmp.eq.s32.totalorder %v360, 1
      %vm363 = vcmp.eq.s32.totalorder %v361, 1
      %v364 = vsel %vm362, 0.0, %v358
      %v365 = vsel %vm363, 0.0, %v359
      %v366 = vpack.c.bf16 %v365, %v364
      %s367 = scalar_lea.vmem %s2, 8
      %v368 = vld [vmem:[%s367] sm:$0xf]
      %v370 = vsel %vm247, %v366, 0
      %v373 = vsel %vm320, %v368, 0
      %375 = vmatpush.bf16.msra.mxu0 0
      %376 = vmatpush.bf16.msra.mxu0 0
      %377 = vmatpush.bf16.msra.mxu0 0
      %378 = vmatpush.bf16.msra.mxu0 0
      %379 = vmatpush.bf16.msra.mxu0 0
      %380 = vmatpush.bf16.msra.mxu0 0
      %381 = vmatpush.bf16.msra.mxu0 0
      %382 = vmatpush.bf16.msra.mxu0 %v373
      %383 = vmatmul.bf16.gmra.mxu0 %v370
      %v384 = vpop.f32.mrf.mxu0
      %v385 = vadd.f32 0.0, %v384
      %v386 = vpop.f32.mrf.mxu0
      %v387 = vadd.f32 0.0, %v386
      %388 = vdwg.mxu0
      %v389 = vadd.f32 %v354, %v385
      %v390 = vadd.f32 %v356, %v387
      %v391 = vld [vmem:[#allocation2 + $0x7] sm:$0xff]
      %v392 = vld [vmem:[#allocation2 + $0xf] sm:$0xff]
      %v393 = vsel %vm306, 0.0, %v391
      %v394 = vsel %vm307, 0.0, %v392
      %v395 = vpack.c.bf16 %v394, %v393
      %s396 = scalar_lea.vmem %s2, 12
      %v397 = vld [vmem:[%s396] sm:$0xf]
      %v399 = vsel %vm247, %v395, 0
      %v402 = vsel %vm320, %v397, 0
      %404 = vmatpush.bf16.msra.mxu0 0
      %405 = vmatpush.bf16.msra.mxu0 0
      %406 = vmatpush.bf16.msra.mxu0 0
      %407 = vmatpush.bf16.msra.mxu0 0
      %408 = vmatpush.bf16.msra.mxu0 0
      %409 = vmatpush.bf16.msra.mxu0 0
      %410 = vmatpush.bf16.msra.mxu0 0
      %411 = vmatpush.bf16.msra.mxu0 %v402
      %412 = vmatmul.bf16.gmra.mxu0 %v399
      %v413 = vpop.f32.mrf.mxu0
      %v414 = vadd.f32 0.0, %v413
      %v415 = vpop.f32.mrf.mxu0
      %v416 = vadd.f32 0.0, %v415
      %417 = vdwg.mxu0
      %v418 = vadd.f32 %v389, %v414
      %v419 = vadd.f32 %v390, %v416
      %v420 = vld [vmem:[#allocation2 + $0x8] sm:$0xff]
      %v421 = vld [vmem:[#allocation2 + $0x10] sm:$0xff]
      %v422 = vpack.c.bf16 %v421, %v420
      %s423 = scalar_lea.vmem %s2, 16
      %v424 = vld [vmem:[%s423] sm:$0xf]
      %v426 = vsel %vm247, %v422, 0
      %v429 = vsel %vm320, %v424, 0
      %431 = vmatpush.bf16.msra.mxu0 0
      %432 = vmatpush.bf16.msra.mxu0 0
      %433 = vmatpush.bf16.msra.mxu0 0
      %434 = vmatpush.bf16.msra.mxu0 0
      %435 = vmatpush.bf16.msra.mxu0 0
      %436 = vmatpush.bf16.msra.mxu0 0
      %437 = vmatpush.bf16.msra.mxu0 0
      %438 = vmatpush.bf16.msra.mxu0 %v429
      %439 = vmatmul.bf16.gmra.mxu0 %v426
      %v440 = vpop.f32.mrf.mxu0
      %v441 = vadd.f32 0.0, %v440
      %v442 = vpop.f32.mrf.mxu0
      %v443 = vadd.f32 0.0, %v442
      %444 = vdwg.mxu0
      %v445 = vadd.f32 %v418, %v441
      %v446 = vadd.f32 %v419, %v443
      %v447 = vld [vmem:[#allocation2 + $0x9] sm:$0xff]
      %v448 = vld [vmem:[#allocation2 + $0x11] sm:$0xff]
      %v449 = vsel %vm362, 0.0, %v447
      %v450 = vsel %vm363, 0.0, %v448
      %v451 = vpack.c.bf16 %v450, %v449
      %s452 = scalar_lea.vmem %s2, 20
      %v453 = vld [vmem:[%s452] sm:$0xf]
      %v455 = vsel %vm247, %v451, 0
      %v458 = vsel %vm320, %v453, 0
      %460 = vmatpush.bf16.msra.mxu0 0
      %461 = vmatpush.bf16.msra.mxu0 0
      %462 = vmatpush.bf16.msra.mxu0 0
      %463 = vmatpush.bf16.msra.mxu0 0
      %464 = vmatpush.bf16.msra.mxu0 0
      %465 = vmatpush.bf16.msra.mxu0 0
      %466 = vmatpush.bf16.msra.mxu0 0
      %467 = vmatpush.bf16.msra.mxu0 %v458
      %468 = vmatmul.bf16.gmra.mxu0 %v455
      %v469 = vpop.f32.mrf.mxu0
      %v470 = vadd.f32 0.0, %v469
      %v471 = vpop.f32.mrf.mxu0
      %v472 = vadd.f32 0.0, %v471
      %473 = vdwg.mxu0
      %v474 = vadd.f32 %v445, %v470
      %v475 = vadd.f32 %v446, %v472
      %v476 = vld [vmem:[#allocation2 + $0xb] sm:$0xff]
      %v477 = vld [vmem:[#allocation2 + $0x13] sm:$0xff]
      %v478 = vsel %vm306, 0.0, %v476
      %v479 = vsel %vm307, 0.0, %v477
      %v480 = vpack.c.bf16 %v479, %v478
      %s481 = scalar_lea.vmem %s2, 24
      %v482 = vld [vmem:[%s481] sm:$0xf]
      %v484 = vsel %vm247, %v480, 0
      %v487 = vsel %vm320, %v482, 0
      %489 = vmatpush.bf16.msra.mxu0 0
      %490 = vmatpush.bf16.msra.mxu0 0
      %491 = vmatpush.bf16.msra.mxu0 0
      %492 = vmatpush.bf16.msra.mxu0 0
      %493 = vmatpush.bf16.msra.mxu0 0
      %494 = vmatpush.bf16.msra.mxu0 0
      %495 = vmatpush.bf16.msra.mxu0 0
      %496 = vmatpush.bf16.msra.mxu0 %v487
      %497 = vmatmul.bf16.gmra.mxu0 %v484
      %v498 = vpop.f32.mrf.mxu0
      %v499 = vadd.f32 0.0, %v498
      %v500 = vpop.f32.mrf.mxu0
      %v501 = vadd.f32 0.0, %v500
      %502 = vdwg.mxu0
      %v503 = vadd.f32 %v474, %v499
      %v504 = vadd.f32 %v475, %v501
      %v505 = vld [vmem:[#allocation2 + $0xc] sm:$0xff]
      %v506 = vld [vmem:[#allocation2 + $0x14] sm:$0xff]
      %v507 = vpack.c.bf16 %v506, %v505
      %s508 = scalar_lea.vmem %s2, 28
      %v509 = vld [vmem:[%s508] sm:$0xf]
      %v511 = vsel %vm247, %v507, 0
      %v514 = vsel %vm320, %v509, 0
      %516 = vmatpush.bf16.msra.mxu0 0
      %517 = vmatpush.bf16.msra.mxu0 0
      %518 = vmatpush.bf16.msra.mxu0 0
      %519 = vmatpush.bf16.msra.mxu0 0
      %520 = vmatpush.bf16.msra.mxu0 0
      %521 = vmatpush.bf16.msra.mxu0 0
      %522 = vmatpush.bf16.msra.mxu0 0
      %523 = vmatpush.bf16.msra.mxu0 %v514
      %524 = vmatmul.bf16.gmra.mxu0 %v511
      %v525 = vpop.f32.mrf.mxu0
      %v526 = vadd.f32 0.0, %v525
      %v527 = vpop.f32.mrf.mxu0
      %v528 = vadd.f32 0.0, %v527
      %529 = vdwg.mxu0
      %v530 = vadd.f32 %v503, %v526
      %v531 = vadd.f32 %v504, %v528
      %v532 = vld [vmem:[#allocation2 + $0xd] sm:$0xff]
      %v533 = vld [vmem:[#allocation2 + $0x15] sm:$0xff]
      %v534 = vsel %vm362, 0.0, %v532
      %v535 = vsel %vm363, 0.0, %v533
      %v536 = vpack.c.bf16 %v535, %v534
      %s537 = scalar_lea.vmem %s2, 32
      %v538 = vld [vmem:[%s537] sm:$0xf]
      %v540 = vsel %vm247, %v536, 0
      %v543 = vsel %vm320, %v538, 0
      %545 = vmatpush.bf16.msra.mxu0 0
      %546 = vmatpush.bf16.msra.mxu0 0
      %547 = vmatpush.bf16.msra.mxu0 0
      %548 = vmatpush.bf16.msra.mxu0 0
      %549 = vmatpush.bf16.msra.mxu0 0
      %550 = vmatpush.bf16.msra.mxu0 0
      %551 = vmatpush.bf16.msra.mxu0 0
      %552 = vmatpush.bf16.msra.mxu0 %v543
      %553 = vmatmul.bf16.gmra.mxu0 %v540
      %v554 = vpop.f32.mrf.mxu0
      %v555 = vadd.f32 0.0, %v554
      %v556 = vpop.f32.mrf.mxu0
      %v557 = vadd.f32 0.0, %v556
      %558 = vdwg.mxu0
      %v559 = vadd.f32 %v530, %v555
      %v560 = vadd.f32 %v531, %v557
      %v561 = vld [vmem:[%s4] sm:$0x1]
      %v563 = vperm.slane %v561, 0
      %v565 = vadd.f32 %v559, %v563
      %v566 = vadd.f32 %v560, %v563
      %vm567 = vcmp.ge.f32.partialorder %v565, 0.0
      %vm568 = vcmp.ge.f32.partialorder %v566, 0.0
      %v569 = vmul.f32 %v565, 0.2
      %v570 = vmul.f32 %v566, 0.2
      %v571 = vsel %vm567, %v565, %v569
      %v572 = vsel %vm568, %v566, %v570
      %v573 = vsel %vm247, %v571, 0.0
      %v574 = vsel %vm247, %v572, 0.0
      %v575 = vadd.f32 %v573, %v574
      %v576 = vrot.slane %v575, 4
      %v577 = vadd.f32 %v575, %v576
      %v578 = vrot.slane %v577, 2
      %v579 = vadd.f32 %v577, %v578
      %v580 = vrot.slane %v579, 1
      %v581 = vadd.f32 %v579, %v580
      %v582 = vmul.f32 %v581, %v263
      %v583 = vsub.f32 %v571, %v582
      %v584 = vsub.f32 %v572, %v582
      %v585 = vmul.f32 %v583, %v583
      %v586 = vmul.f32 %v584, %v584
      %v587 = vsel %vm247, %v585, 0.0
      %v588 = vsel %vm247, %v586, 0.0
      %v589 = vadd.f32 %v587, %v588
      %v590 = vrot.slane %v589, 4
      %v591 = vadd.f32 %v589, %v590
      %v592 = vrot.slane %v591, 2
      %v593 = vadd.f32 %v591, %v592
      %v594 = vrot.slane %v593, 1
      %v595 = vadd.f32 %v593, %v594
      %v596 = vmul.f32 %v595, %v263
      %v597 = vadd.f32 %v596, 1e-08
      %v598 = vrsqrt.pop %v597
      %v599 = vmul.f32 %v598, %v597
      %v600 = vmul.f32 %v599, %v598
      %v601 = vmul.f32 0.5, %v600
      %v602 = vsub.f32 1.5, %v601
      %v603 = vmul.f32 %v598, %v602
      %vm604 = vweird.f32 %v597
      %vm605 = vweird.f32 %v598
      %vm606 = vmor %vm604, %vm605
      %v607 = vsel %vm606, %v598, %v603
      %v608 = vmul.f32 %v583, %v607
      %v609 = vmul.f32 %v584, %v607
      %v610 = vperm.slane %v232, 2
      %v611 = vmul.f32 %v610, %v608
      %v612 = vmul.f32 %v610, %v609
      %v613 = vperm.slane %v232, 3
      %v614 = vadd.f32 %v611, %v613
      %v615 = vadd.f32 %v612, %v613
      %v616 = vpack.c.bf16 %v614, %v614
      %v617 = vpack.c.bf16 %v615, %v615
      %vm618 = vcmask 60416
      %619 = vst.msk [vmem:[%s221] sm:$0xf] %vm618, %v616
      %620 = vst.msk [vmem:[%s221 + $0x4] sm:$0xf] %vm618, %v617
      %p621 = scmp.lt.s32.totalorder %s16, 1
      %s622 = scalar_select %p621, %s16, 1
      %s623 = smul.addr %s622, 2
      %s624 = smul.addr %s623, 4
      %s625 = scalar_lea.vmem %s5, %s624
      // Predicated region
      $region41: #{generator_forward.2} parent=39 // pred_check
        %p626 = pneg %p144
      $region42: #{generator_forward.2} parent=39 // pred_check_branch
        %628 = sbr.rel (%p626) target = $region44
      $region43: #{generator_forward.2} parent=39 // pred_region
        _
      $region44: #{generator_forward.2} parent=39 // pred_fallthru
        _
    $region40: #{generator_forward.2} parent=5 // pred_fallthru
      _
    %p629 = scmp.le.s32.totalorder 2, %s11
    // Predicated region
    $region45: #{generator_forward.2} parent=5 // pred_check
      %p630 = pneg %p629
    $region46: #{generator_forward.2} parent=5 // pred_check_branch
      %632 = sbr.rel (%p630) target = $region48
    $region47: #{generator_forward.2} parent=5 // pred_region
      %s633 = ssub.s32 %s11, 2
      // Predicated region
      $region49: #{generator_forward.2} parent=47 // pred_check
        %p634 = pneg %p150
      $region50: #{generator_forward.2} parent=47 // pred_check_branch
        %636 = sbr.rel (%p634) target = $region52
      $region51: #{generator_forward.2} parent=47 // pred_region
        %p637 = scmp.lt.s32.totalorder %s17, 1
        %s638 = scalar_select %p637, %s17, 1
        %s639 = smul.addr %s638, 2
        %s640 = smul.addr %s639, 4
        %s641 = scalar_lea.vmem %s5, %s640
      $region52: #{generator_forward.2} parent=47 // pred_fallthru
        _
    $region48: #{generator_forward.2} parent=5 // pred_fallthru
      _
  $region6: #{generator_forward.2} parent=0 // loop_footer
    %s15 = sadd.s32 1, %s11
  $region7: #{generator_forward.2} parent=0 // loop_footer_branch
    %10 = sbr.rel target = $region3
  $region8: #{generator_forward.2} parent=0 // loop_exit
    _

// kernel: generator_forward.3
$region0: #{generator_forward.3}
  #allocation0 [shape = 'u32[]', space=smem, size = 0x4, offset = 0x4, fixed_abs, tag = 'smem constant byte address 0x4 - core index']
  #allocation1 [shape = 'u32[72,128]{1,0:T(1,128)}', space=vmem, size = 0x9000, scoped, tag = 'internal scratch']
  #allocation2 [shape = 'f32[96,8]{1,0:T(8,128)}', space=vmem, size = 0xc000, scoped, tag = 'scratch operand']
  #allocation3 [shape = 'f32[96,4]{1,0:T(8,128)}', space=vmem, size = 0xc000, scoped, tag = 'scratch operand']
  %s0 = inlined_call_operand.vmem [shape: bf16[2,64,8], index: 0, kind: input, shape index: {}]
  %s1 = inlined_call_operand.vmem [shape: f32[2,4,4], index: 1, kind: input, shape index: {}]
  %s2 = inlined_call_operand.vmem [shape: bf16[9,8,4], index: 2, kind: input, shape index: {}]
  %s3 = inlined_call_operand.vmem [shape: bf16[9,4,4], index: 3, kind: input, shape index: {}]
  %s4 = inlined_call_operand.vmem [shape: f32[1,4], index: 4, kind: input, shape index: {}]
  %s5 = inlined_call_operand.vmem [shape: f32[1,4], index: 5, kind: input, shape index: {}]
  %s6 = inlined_call_operand.vmem [shape: bf16[4,3], index: 6, kind: input, shape index: {}]
  %s7 = inlined_call_operand.vmem [shape: f32[1,3], index: 7, kind: input, shape index: {}]
  %s8 = inlined_call_operand.vmem [shape: f32[2,64,3], index: 8, kind: output, shape index: {}]
  %s9 = sld [smem:[#allocation0]]
  $region65: #{generator_forward.3} parent=0
    _
  %s11 = ssub.s32 1, %s9
  %s12 = scalar_select 0, %s11, %s9
  loop: start=0, step=1, limit=4
  $region2: #{generator_forward.3} parent=0 // loop_pre_header
    _
  $region3: #{generator_forward.3} parent=0 // loop_header
    %s14 = sphi 0, %s18
    %p15 = scmp.ge.s32.totalorder %s14, 4
    %s24 = sphi 0, %s26
    %s27 = sphi 0, %s24
    %s28 = sphi 0, %s27
    %s44 = sphi 0, %s28
    %s50 = sphi 0, %s52
    %s53 = sphi 0, %s50
    %s54 = sphi 0, %s53
    %s70 = sphi 0, %s54
    %s74 = sphi 0, %s74
    %s76 = sphi 0, %s74
    %s77 = sphi 0, %s76
    %s91 = sphi 0, %s77
    %s95 = sphi 0, %s95
    %s97 = sphi 0, %s95
    %s98 = sphi 0, %s97
    %s112 = sphi 0, %s98
    %s116 = sphi 0, %s116
    %s118 = sphi 0, %s116
    %s119 = sphi 0, %s118
    %s133 = sphi 0, %s119
    %s137 = sphi 0, %s137
    %s139 = sphi 0, %s137
    %s140 = sphi 0, %s139
    %s154 = sphi 0, %s140
    %s158 = sphi 0, %s158
    %s160 = sphi 0, %s158
    %s161 = sphi 0, %s160
    %s175 = sphi 0, %s161
    %s179 = sphi 0, %s179
    %s181 = sphi 0, %s179
    %s182 = sphi 0, %s181
    %s196 = sphi 0, %s182
    %s202 = sphi 0, %s204
    %s205 = sphi 0, %s202
    %s206 = sphi 0, %s205
    %s222 = sphi 0, %s206
  $region4: #{generator_forward.3} parent=0 // loop_header_branch
    %17 = sbr.rel (%p15) target = $region8
  $region5: #{generator_forward.3} parent=0 // loop_body
    %s19 = ssub.s32 %s14, 1
    %s20 = ssub.s32 %s14, 2
    %s21 = sadd.s32 %s14, 1
    %s22 = ssub.s32 %s14, %s21
    %p23 = scmp.eq.s32.totalorder %s22, 0
    %s25 = sadd.s32 %s24, 1
    %s26 = scalar_select %p23, %s24, %s25
    %p29 = pneg %p23
    %p30 = scmp.eq.s32.totalorder %s14, 1
    %p31 = por %p29, %p30
    %p32 = scmp.ne.s32.totalorder %s24, %s27
    %p33 = scmp.eq.s32.totalorder %s14, 0
    %p34 = por %p32, %p33
    %p35 = scmp.ne.s32.totalorder %s24, %s27
    %p36 = scmp.eq.s32.totalorder %s19, 1
    %p37 = por %p35, %p36
    %p38 = scmp.ne.s32.totalorder %s27, %s28
    %p39 = scmp.eq.s32.totalorder %s19, 0
    %p40 = por %p38, %p39
    %p41 = scmp.ne.s32.totalorder %s27, %s28
    %p42 = scmp.eq.s32.totalorder %s20, 1
    %p43 = por %p41, %p42
    %p45 = scmp.ne.s32.totalorder %s28, %s44
    %p46 = scmp.eq.s32.totalorder %s20, 0
    %p47 = por %p45, %p46
    %s48 = ssub.s32 %s14, %s21
    %p49 = scmp.eq.s32.totalorder %s48, 0
    %s51 = sadd.s32 %s50, 1
    %s52 = scalar_select %p49, %s50, %s51
    %p55 = pneg %p49
    %p56 = scmp.eq.s32.totalorder %s14, 1
    %p57 = por %p55, %p56
    %p58 = scmp.ne.s32.totalorder %s50, %s53
    %p59 = scmp.eq.s32.totalorder %s14, 0
    %p60 = por %p58, %p59
    %p61 = scmp.ne.s32.totalorder %s50, %s53
    %p62 = scmp.eq.s32.totalorder %s19, 1
    %p63 = por %p61, %p62
    %p64 = scmp.ne.s32.totalorder %s53, %s54
    %p65 = scmp.eq.s32.totalorder %s19, 0
    %p66 = por %p64, %p65
    %p67 = scmp.ne.s32.totalorder %s53, %s54
    %p68 = scmp.eq.s32.totalorder %s20, 1
    %p69 = por %p67, %p68
    %p71 = scmp.ne.s32.totalorder %s54, %s70
    %p72 = scmp.eq.s32.totalorder %s20, 0
    %p73 = por %p71, %p72
    %s75 = sadd.s32 %s74, 1
    %p78 = scmp.eq.s32.totalorder %s14, 1
    %p79 = scmp.ne.s32.totalorder %s74, %s76
    %p80 = scmp.eq.s32.totalorder %s14, 0
    %p81 = por %p79, %p80
    %p82 = scmp.ne.s32.totalorder %s74, %s76
    %p83 = scmp.eq.s32.totalorder %s19, 1
    %p84 = por %p82, %p83
    %p85 = scmp.ne.s32.totalorder %s76, %s77
    %p86 = scmp.eq.s32.totalorder %s19, 0
    %p87 = por %p85, %p86
    %p88 = scmp.ne.s32.totalorder %s76, %s77
    %p89 = scmp.eq.s32.totalorder %s20, 1
    %p90 = por %p88, %p89
    %p92 = scmp.ne.s32.totalorder %s77, %s91
    %p93 = scmp.eq.s32.totalorder %s20, 0
    %p94 = por %p92, %p93
    %s96 = sadd.s32 %s95, 1
    %p99 = scmp.eq.s32.totalorder %s14, 1
    %p100 = scmp.ne.s32.totalorder %s95, %s97
    %p101 = scmp.eq.s32.totalorder %s14, 0
    %p102 = por %p100, %p101
    %p103 = scmp.ne.s32.totalorder %s95, %s97
    %p104 = scmp.eq.s32.totalorder %s19, 1
    %p105 = por %p103, %p104
    %p106 = scmp.ne.s32.totalorder %s97, %s98
    %p107 = scmp.eq.s32.totalorder %s19, 0
    %p108 = por %p106, %p107
    %p109 = scmp.ne.s32.totalorder %s97, %s98
    %p110 = scmp.eq.s32.totalorder %s20, 1
    %p111 = por %p109, %p110
    %p113 = scmp.ne.s32.totalorder %s98, %s112
    %p114 = scmp.eq.s32.totalorder %s20, 0
    %p115 = por %p113, %p114
    %s117 = sadd.s32 %s116, 1
    %p120 = scmp.eq.s32.totalorder %s14, 1
    %p121 = scmp.ne.s32.totalorder %s116, %s118
    %p122 = scmp.eq.s32.totalorder %s14, 0
    %p123 = por %p121, %p122
    %p124 = scmp.ne.s32.totalorder %s116, %s118
    %p125 = scmp.eq.s32.totalorder %s19, 1
    %p126 = por %p124, %p125
    %p127 = scmp.ne.s32.totalorder %s118, %s119
    %p128 = scmp.eq.s32.totalorder %s19, 0
    %p129 = por %p127, %p128
    %p130 = scmp.ne.s32.totalorder %s118, %s119
    %p131 = scmp.eq.s32.totalorder %s20, 1
    %p132 = por %p130, %p131
    %p134 = scmp.ne.s32.totalorder %s119, %s133
    %p135 = scmp.eq.s32.totalorder %s20, 0
    %p136 = por %p134, %p135
    %s138 = sadd.s32 %s137, 1
    %p141 = scmp.eq.s32.totalorder %s14, 1
    %p142 = scmp.ne.s32.totalorder %s137, %s139
    %p143 = scmp.eq.s32.totalorder %s14, 0
    %p144 = por %p142, %p143
    %p145 = scmp.ne.s32.totalorder %s137, %s139
    %p146 = scmp.eq.s32.totalorder %s19, 1
    %p147 = por %p145, %p146
    %p148 = scmp.ne.s32.totalorder %s139, %s140
    %p149 = scmp.eq.s32.totalorder %s19, 0
    %p150 = por %p148, %p149
    %p151 = scmp.ne.s32.totalorder %s139, %s140
    %p152 = scmp.eq.s32.totalorder %s20, 1
    %p153 = por %p151, %p152
    %p155 = scmp.ne.s32.totalorder %s140, %s154
    %p156 = scmp.eq.s32.totalorder %s20, 0
    %p157 = por %p155, %p156
    %s159 = sadd.s32 %s158, 1
    %p162 = scmp.eq.s32.totalorder %s14, 1
    %p163 = scmp.ne.s32.totalorder %s158, %s160
    %p164 = scmp.eq.s32.totalorder %s14, 0
    %p165 = por %p163, %p164
    %p166 = scmp.ne.s32.totalorder %s158, %s160
    %p167 = scmp.eq.s32.totalorder %s19, 1
    %p168 = por %p166, %p167
    %p169 = scmp.ne.s32.totalorder %s160, %s161
    %p170 = scmp.eq.s32.totalorder %s19, 0
    %p171 = por %p169, %p170
    %p172 = scmp.ne.s32.totalorder %s160, %s161
    %p173 = scmp.eq.s32.totalorder %s20, 1
    %p174 = por %p172, %p173
    %p176 = scmp.ne.s32.totalorder %s161, %s175
    %p177 = scmp.eq.s32.totalorder %s20, 0
    %p178 = por %p176, %p177
    %s180 = sadd.s32 %s179, 1
    %p183 = scmp.eq.s32.totalorder %s14, 1
    %p184 = scmp.ne.s32.totalorder %s179, %s181
    %p185 = scmp.eq.s32.totalorder %s14, 0
    %p186 = por %p184, %p185
    %p187 = scmp.ne.s32.totalorder %s179, %s181
    %p188 = scmp.eq.s32.totalorder %s19, 1
    %p189 = por %p187, %p188
    %p190 = scmp.ne.s32.totalorder %s181, %s182
    %p191 = scmp.eq.s32.totalorder %s19, 0
    %p192 = por %p190, %p191
    %p193 = scmp.ne.s32.totalorder %s181, %s182
    %p194 = scmp.eq.s32.totalorder %s20, 1
    %p195 = por %p193, %p194
    %p197 = scmp.ne.s32.totalorder %s182, %s196
    %p198 = scmp.eq.s32.totalorder %s20, 0
    %p199 = por %p197, %p198
    %s200 = ssub.s32 %s14, %s21
    %p201 = scmp.eq.s32.totalorder %s200, 0
    %s203 = sadd.s32 %s202, 1
    %s204 = scalar_select %p201, %s202, %s203
    %p207 = pneg %p201
    %p208 = scmp.eq.s32.totalorder %s14, 1
    %p209 = por %p207, %p208
    %p210 = scmp.ne.s32.totalorder %s202, %s205
    %p211 = scmp.eq.s32.totalorder %s14, 0
    %p212 = por %p210, %p211
    %p213 = scmp.ne.s32.totalorder %s202, %s205
    %p214 = scmp.eq.s32.totalorder %s19, 1
    %p215 = por %p213, %p214
    %p216 = scmp.ne.s32.totalorder %s205, %s206
    %p217 = scmp.eq.s32.totalorder %s19, 0
    %p218 = por %p216, %p217
    %p219 = scmp.ne.s32.totalorder %s205, %s206
    %p220 = scmp.eq.s32.totalorder %s20, 1
    %p221 = por %p219, %p220
    %p223 = scmp.ne.s32.totalorder %s206, %s222
    %p224 = scmp.eq.s32.totalorder %s20, 0
    %p225 = por %p223, %p224
    %p226 = scmp.le.s32.totalorder 1, %s14
    %p227 = scmp.lt.s32.totalorder %s14, 3
    %p228 = pnand %p226, %p227
    %p229 = pneg %p228
    // Predicated region
    $region9: #{generator_forward.3} parent=5 // pred_check
      _
    $region10: #{generator_forward.3} parent=5 // pred_check_branch
      %231 = sbr.rel (%p228) target = $region12
    $region11: #{generator_forward.3} parent=5 // pred_region
      %s232 = ssub.s32 %s14, 1
      // Predicated region
      $region13: #{generator_forward.3} parent=11 // pred_check
        %p233 = pneg %p87
      $region14: #{generator_forward.3} parent=11 // pred_check_branch
        %235 = sbr.rel (%p233) target = $region16
      $region15: #{generator_forward.3} parent=11 // pred_region
        _
      $region16: #{generator_forward.3} parent=11 // pred_fallthru
        _
      // Predicated region
      $region17: #{generator_forward.3} parent=11 // pred_check
        %p236 = pneg %p108
      $region18: #{generator_forward.3} parent=11 // pred_check_branch
        %238 = sbr.rel (%p236) target = $region20
      $region19: #{generator_forward.3} parent=11 // pred_region
        _
      $region20: #{generator_forward.3} parent=11 // pred_fallthru
        _
      // Predicated region
      $region21: #{generator_forward.3} parent=11 // pred_check
        %p239 = pneg %p129
      $region22: #{generator_forward.3} parent=11 // pred_check_branch
        %241 = sbr.rel (%p239) target = $region24
      $region23: #{generator_forward.3} parent=11 // pred_region
        _
      $region24: #{generator_forward.3} parent=11 // pred_fallthru
        _
      // Predicated region
      $region25: #{generator_forward.3} parent=11 // pred_check
        %p242 = pneg %p150
      $region26: #{generator_forward.3} parent=11 // pred_check_branch
        %244 = sbr.rel (%p242) target = $region28
      $region27: #{generator_forward.3} parent=11 // pred_region
        _
      $region28: #{generator_forward.3} parent=11 // pred_fallthru
        _
      // Predicated region
      $region29: #{generator_forward.3} parent=11 // pred_check
        %p245 = pneg %p171
      $region30: #{generator_forward.3} parent=11 // pred_check_branch
        %247 = sbr.rel (%p245) target = $region32
      $region31: #{generator_forward.3} parent=11 // pred_region
        _
      $region32: #{generator_forward.3} parent=11 // pred_fallthru
        _
      // Predicated region
      $region33: #{generator_forward.3} parent=11 // pred_check
        %p248 = pneg %p192
      $region34: #{generator_forward.3} parent=11 // pred_check_branch
        %250 = sbr.rel (%p248) target = $region36
      $region35: #{generator_forward.3} parent=11 // pred_region
        _
      $region36: #{generator_forward.3} parent=11 // pred_fallthru
        _
    $region12: #{generator_forward.3} parent=5 // pred_fallthru
      _
    %p251 = scmp.lt.s32.totalorder %s14, 2
    // Predicated region
    $region37: #{generator_forward.3} parent=5 // pred_check
      %p252 = pneg %p251
    $region38: #{generator_forward.3} parent=5 // pred_check_branch
      %254 = sbr.rel (%p252) target = $region40
    $region39: #{generator_forward.3} parent=5 // pred_region
      // Predicated region
      $region41: #{generator_forward.3} parent=39 // pred_check
        %p255 = pneg %p34
      $region42: #{generator_forward.3} parent=39 // pred_check_branch
        %257 = sbr.rel (%p255) target = $region44
      $region43: #{generator_forward.3} parent=39 // pred_region
        %p258 = scmp.lt.s32.totalorder %s14, 1
        %s259 = scalar_select %p258, %s14, 1
        %s260 = smul.addr %s259, 8
        %s261 = smul.addr %s260, 4
        %s262 = scalar_lea.vmem %s0, %s261
      $region44: #{generator_forward.3} parent=39 // pred_fallthru
        _
      // Predicated region
      $region45: #{generator_forward.3} parent=39 // pred_check
        %p263 = pneg %p60
      $region46: #{generator_forward.3} parent=39 // pred_check_branch
        %265 = sbr.rel (%p263) target = $region48
      $region47: #{generator_forward.3} parent=39 // pred_region
        %p266 = scmp.lt.s32.totalorder %s14, 1
        %s267 = scalar_select %p266, %s14, 1
        %s268 = smul.addr %s267, 4
        %s269 = scalar_lea.vmem %s1, %s268
      $region48: #{generator_forward.3} parent=39 // pred_fallthru
        _
    $region40: #{generator_forward.3} parent=5 // pred_fallthru
      _
    %p270 = scmp.le.s32.totalorder 1, %s14
    %p271 = scmp.lt.s32.totalorder %s14, 3
    %p272 = pnand %p270, %p271
    %p273 = pneg %p272
    // Predicated region
    $region49: #{generator_forward.3} parent=5 // pred_check
      _
    $region50: #{generator_forward.3} parent=5 // pred_check_branch
      %275 = sbr.rel (%p272) target = $region52
    $region51: #{generator_forward.3} parent=5 // pred_region
      %s276 = ssub.s32 %s14, 1
      %p277 = scmp.lt.s32.totalorder %s19, 1
      %s278 = scalar_select %p277, %s19, 1
      %s279 = smul.addr %s278, 8
      %s280 = smul.addr %s279, 4
      %s281 = scalar_lea.vmem %s0, %s280
      %p282 = pneg %p40
      %p283 = pneg %p37
      %p284 = scmp.lt.s32.totalorder %s19, 1
      %s285 = scalar_select %p284, %s19, 1
      %s286 = smul.addr %s285, 4
      %s287 = scalar_lea.vmem %s1, %s286
      %p288 = pneg %p66
      %p289 = pneg %p63
      %p290 = pneg %p87
      %p291 = pneg %p84
      %p292 = pneg %p108
      %p293 = pneg %p105
      %p294 = pneg %p129
      %p295 = pneg %p126
      %p296 = pneg %p150
      %p297 = pneg %p147
      %p298 = pneg %p171
      %p299 = pneg %p168
      %p300 = pneg %p192
      %p301 = pneg %p189
      %p302 = pneg %p218
      %p303 = pneg %p215
      %p304 = scmp.lt.s32.totalorder %s19, 1
      %s305 = scalar_select %p304, %s19, 1
      %s306 = smul.addr %s305, 8
      %s307 = smul.addr %s306, 8
      %s308 = scalar_lea.vmem %s8, %s307
      %p309 = scmp.lt.s32.totalorder %s19, 1
      %s310 = scalar_select %p309, %s19, 1
      %s311 = smul.addr %s310, 8
      %s312 = smul.addr %s311, 4
      %s313 = scalar_lea.vmem %s0, %s312
      %p314 = scmp.lt.s32.totalorder %s19, 1
      %s315 = scalar_select %p314, %s19, 1
      %s316 = smul.addr %s315, 4
      %s317 = scalar_lea.vmem %s1, %s316
      %p318 = scmp.lt.s32.totalorder %s19, 1
      %s319 = scalar_select %p318, %s19, 1
      %s320 = smul.addr %s319, 8
      %s321 = smul.addr %s320, 8
      %s322 = scalar_lea.vmem %s8, %s321
      %v324 = vlaneseq
      %v325 = vshrl.u32 %v324, 7
      %v326 = vadd.s32 %v325, 8
      %v327 = vadd.s32 %v325, 16
      %v328 = vadd.s32 %v325, 24
      %v329 = vadd.s32 %v325, 32
      %v330 = vadd.s32 %v325, 40
      %v331 = vadd.s32 %v325, 48
      %v332 = vadd.s32 %v325, 56
      %v333 = vand.u32 %v325, 7
      %v334 = vand.u32 %v326, 7
      %v335 = vand.u32 %v327, 7
      %v336 = vand.u32 %v328, 7
      %v337 = vand.u32 %v329, 7
      %v338 = vand.u32 %v330, 7
      %v339 = vand.u32 %v331, 7
      %v340 = vand.u32 %v332, 7
      %vm341 = vcmp.eq.s32.totalorder %v333, 0
      %vm342 = vcmp.eq.s32.totalorder %v334, 0
      %vm343 = vcmp.eq.s32.totalorder %v335, 0
      %vm344 = vcmp.eq.s32.totalorder %v336, 0
      %vm345 = vcmp.eq.s32.totalorder %v337, 0
      %vm346 = vcmp.eq.s32.totalorder %v338, 0
      %vm347 = vcmp.eq.s32.totalorder %v339, 0
      %vm348 = vcmp.eq.s32.totalorder %v340, 0
      %vm349 = vcmp.eq.s32.totalorder %v333, 7
      %vm350 = vcmp.eq.s32.totalorder %v334, 7
      %vm351 = vcmp.eq.s32.totalorder %v335, 7
      %vm352 = vcmp.eq.s32.totalorder %v336, 7
      %vm353 = vcmp.eq.s32.totalorder %v337, 7
      %vm354 = vcmp.eq.s32.totalorder %v338, 7
      %vm355 = vcmp.eq.s32.totalorder %v339, 7
      %vm356 = vcmp.eq.s32.totalorder %v340, 7
      %v357 = vld [vmem:[%s317] sm:$0xf]
      %vm358 = vcmask 64512
      %359 = vst.msk [vmem:[#allocation2] sm:$0xff] %vm358, 0.0
      %360 = vst.msk [vmem:[#allocation2 + $0x8] sm:$0xff] %vm358, 0.0
      %361 = vst.msk [vmem:[#allocation2 + $0x50] sm:$0xff] %vm358, 0.0
      %362 = vst.msk [vmem:[#allocation2 + $0x58] sm:$0xff] %vm358, 0.0
      %v363 = vld [vmem:[%s313] sm:$0xf]
      %v364 = vld [vmem:[%s313 + $0x4] sm:$0xf]
      %v365 = vld [vmem:[%s313 + $0x8] sm:$0xf]
      %v366 = vld [vmem:[%s313 + $0xc] sm:$0xf]
      %v367 = vld [vmem:[%s313 + $0x10] sm:$0xf]
      %v368 = vld [vmem:[%s313 + $0x14] sm:$0xf]
      %v369 = vld [vmem:[%s313 + $0x18] sm:$0xf]
      %v370 = vld [vmem:[%s313 + $0x1c] sm:$0xf]
      %v371 = vunpack.c.l.bf16 %v363
      %v372 = vunpack.c.l.bf16 %v364
      %v373 = vunpack.c.l.bf16 %v365
      %v374 = vunpack.c.l.bf16 %v366
      %v375 = vunpack.c.l.bf16 %v367
      %v376 = vunpack.c.l.bf16 %v368
      %v377 = vunpack.c.l.bf16 %v369
      %v378 = vunpack.c.l.bf16 %v370
      %379 = vst.msk [vmem:[#allocation2 + $0x10] sm:$0xff] %vm358, %v371
      %380 = vst.msk [vmem:[#allocation2 + $0x18] sm:$0xff] %vm358, %v372
      %381 = vst.msk [vmem:[#allocation2 + $0x20] sm:$0xff] %vm358, %v373
      %382 = vst.msk [vmem:[#allocation2 + $0x28] sm:$0xff] %vm358, %v374
      %383 = vst.msk [vmem:[#allocation2 + $0x30] sm:$0xff] %vm358, %v375
      %384 = vst.msk [vmem:[#allocation2 + $0x38] sm:$0xff] %vm358, %v376
      %385 = vst.msk [vmem:[#allocation2 + $0x40] sm:$0xff] %vm358, %v377
      %386 = vst.msk [vmem:[#allocation2 + $0x48] sm:$0xff] %vm358, %v378
      %v387 = vld [vmem:[#allocation2 + $0x7] sm:$0xff]
      %v388 = vld [vmem:[#allocation2 + $0xf] sm:$0xff]
      %v389 = vld [vmem:[#allocation2 + $0x17] sm:$0xff]
      %v390 = vld [vmem:[#allocation2 + $0x1f] sm:$0xff]
      %v391 = vld [vmem:[#allocation2 + $0x27] sm:$0xff]
      %v392 = vld [vmem:[#allocation2 + $0x2f] sm:$0xff]
      %v393 = vld [vmem:[#allocation2 + $0x37] sm:$0xff]
      %v394 = vld [vmem:[#allocation2 + $0x3f] sm:$0xff]
      %v395 = vsel %vm341, 1, 0
      %v396 = vsel %vm342, 1, 0
      %v397 = vsel %vm343, 1, 0
      %v398 = vsel %vm344, 1, 0
      %v399 = vsel %vm345, 1, 0
      %v400 = vsel %vm346, 1, 0
      %v401 = vsel %vm347, 1, 0
      %v402 = vsel %vm348, 1, 0
      %vm403 = vcmp.eq.s32.totalorder %v395, 1
      %vm404 = vcmp.eq.s32.totalorder %v396, 1
      %vm405 = vcmp.eq.s32.totalorder %v397, 1
      %vm406 = vcmp.eq.s32.totalorder %v398, 1
      %vm407 = vcmp.eq.s32.totalorder %v399, 1
      %vm408 = vcmp.eq.s32.totalorder %v400, 1
      %vm409 = vcmp.eq.s32.totalorder %v401, 1
      %vm410 = vcmp.eq.s32.totalorder %v402, 1
      %v411 = vsel %vm403, 0.0, %v387
      %v412 = vsel %vm404, 0.0, %v388
      %v413 = vsel %vm405, 0.0, %v389
      %v414 = vsel %vm406, 0.0, %v390
      %v415 = vsel %vm407, 0.0, %v391
      %v416 = vsel %vm408, 0.0, %v392
      %v417 = vsel %vm409, 0.0, %v393
      %v418 = vsel %vm410, 0.0, %v394
      %v419 = vpack.c.bf16 %v412, %v411
      %v420 = vpack.c.bf16 %v414, %v413
      %v421 = vpack.c.bf16 %v416, %v415
      %v422 = vpack.c.bf16 %v418, %v417
      %v423 = vld [vmem:[%s2] sm:$0xf]
      %v424 = vld [vmem:[#allocation2 + $0x8] sm:$0xff]
      %v425 = vld [vmem:[#allocation2 + $0x10] sm:$0xff]
      %v426 = vld [vmem:[#allocation2 + $0x18] sm:$0xff]
      %v427 = vld [vmem:[#allocation2 + $0x20] sm:$0xff]
      %v428 = vld [vmem:[#allocation2 + $0x28] sm:$0xff]
      %v429 = vld [vmem:[#allocation2 + $0x30] sm:$0xff]
      %v430 = vld [vmem:[#allocation2 + $0x38] sm:$0xff]
      %v431 = vld [vmem:[#allocation2 + $0x40] sm:$0xff]
      %v432 = vpack.c.bf16 %v425, %v424
      %v433 = vpack.c.bf16 %v427, %v426
      %v434 = vpack.c.bf16 %v429, %v428
      %v435 = vpack.c.bf16 %v431, %v430
      %s436 = scalar_lea.vmem %s2, 4
      %v437 = vld [vmem:[%s436] sm:$0xf]
      %v439 = vsel %vm358, %v432, 0
      %v442 = vsel %vm358, %v433, 0
      %v445 = vsel %vm358, %v434, 0
      %v448 = vsel %vm358, %v435, 0
      %vm450 = vcmask 1043456
      %v452 = vsel %vm450, %v437, 0
      %454 = vmatpush.bf16.msra.mxu0 0
      %455 = vmatpush.bf16.msra.mxu0 0
      %456 = vmatpush.bf16.msra.mxu0 0
      %457 = vmatpush.bf16.msra.mxu0 0
      %458 = vmatpush.bf16.msra.mxu0 0
      %459 = vmatpush.bf16.msra.mxu0 0
      %460 = vmatpush.bf16.msra.mxu0 0
      %461 = vmatpush.bf16.msra.mxu0 %v452
      %462 = vmatmul.bf16.gmra.mxu0 %v439
      %v463 = vpop.f32.mrf.mxu0
      %v464 = vadd.f32 0.0, %v463
      %v465 = vpop.f32.mrf.mxu0
      %v466 = vadd.f32 0.0, %v465
      %467 = vmatmul.bf16.gmra.mxu0 %v442
      %v468 = vpop.f32.mrf.mxu0
      %v469 = vadd.f32 0.0, %v468
      %v470 = vpop.f32.mrf.mxu0
      %v471 = vadd.f32 0.0, %v470
      %472 = vmatmul.bf16.gmra.mxu0 %v445
      %v473 = vpop.f32.mrf.mxu0
      %v474 = vadd.f32 0.0, %v473
      %v475 = vpop.f32.mrf.mxu0
      %v476 = vadd.f32 0.0, %v475
      %477 = vmatmul.bf16.gmra.mxu0 %v448
      %v478 = vpop.f32.mrf.mxu0
      %v479 = vadd.f32 0.0, %v478
      %v480 = vpop.f32.mrf.mxu0
      %v481 = vadd.f32 0.0, %v480
      %482 = vdwg.mxu0
      %v484 = vsel %vm358, %v419, 0
      %v487 = vsel %vm358, %v420, 0
      %v490 = vsel %vm358, %v421, 0
      %v493 = vsel %vm358, %v422, 0
      %v496 = vsel %vm450, %v423, 0
      %498 = vmatpush.bf16.msra.mxu0 0
      %499 = vmatpush.bf16.msra.mxu0 0
      %500 = vmatpush.bf16.msra.mxu0 0
      %501 = vmatpush.bf16.msra.mxu0 0
      %502 = vmatpush.bf16.msra.mxu0 0
      %503 = vmatpush.bf16.msra.mxu0 0
      %504 = vmatpush.bf16.msra.mxu0 0
      %505 = vmatpush.bf16.msra.mxu0 %v496
      %506 = vmatmul.bf16.gmra.mxu0 %v484
      %v507 = vpop.f32.mrf.mxu0
      %v508 = vadd.f32 %v464, %v507
      %v509 = vpop.f32.mrf.mxu0
      %v510 = vadd.f32 %v466, %v509
      %511 = vmatmul.bf16.gmra.mxu0 %v487
      %v512 = vpop.f32.mrf.mxu0
      %v513 = vadd.f32 %v469, %v512
      %v514 = vpop.f32.mrf.mxu0
      %v515 = vadd.f32 %v471, %v514
      %516 = vmatmul.bf16.gmra.mxu0 %v490
      %v517 = vpop.f32.mrf.mxu0
      %v518 = vadd.f32 %v474, %v517
      %v519 = vpop.f32.mrf.mxu0
      %v520 = vadd.f32 %v476, %v519
      %521 = vmatmul.bf16.gmra.mxu0 %v493
      %v522 = vpop.f32.mrf.mxu0
      %v523 = vadd.f32 %v479, %v522
      %v524 = vpop.f32.mrf.mxu0
      %v525 = vadd.f32 %v481, %v524
      %526 = vdwg.mxu0
      %v527 = vld [vmem:[#allocation2 + $0x9] sm:$0xff]
      %v528 = vld [vmem:[#allocation2 + $0x11] sm:$0xff]
      %v529 = vld [vmem:[#allocation2 + $0x19] sm:$0xff]
      %v530 = vld [vmem:[#allocation2 + $0x21] sm:$0xff]
      %v531 = vld [vmem:[#allocation2 + $0x29] sm:$0xff]
      %v532 = vld [vmem:[#allocation2 + $0x31] sm:$0xff]
      %v533 = vld [vmem:[#allocation2 + $0x39] sm:$0xff]
      %v534 = vld [vmem:[#allocation2 + $0x41] sm:$0xff]
      %v535 = vsel %vm349, 1, 0
      %v536 = vsel %vm350, 1, 0
      %v537 = vsel %vm351, 1, 0
      %v538 = vsel %vm352, 1, 0
      %v539 = vsel %vm353, 1, 0
      %v540 = vsel %vm354, 1, 0
      %v541 = vsel %vm355, 1, 0
      %v542 = vsel %vm356, 1, 0
      %vm543 = vcmp.eq.s32.totalorder %v535, 1
      %vm544 = vcmp.eq.s32.totalorder %v536, 1
      %vm545 = vcmp.eq.s32.totalorder %v537, 1
      %vm546 = vcmp.eq.s32.totalorder %v538, 1
      %vm547 = vcmp.eq.s32.totalorder %v539, 1
      %vm548 = vcmp.eq.s32.totalorder %v540, 1
      %vm549 = vcmp.eq.s32.totalorder %v541, 1
      %vm550 = vcmp.eq.s32.totalorder %v542, 1
      %v551 = vsel %vm543, 0.0, %v527
      %v552 = vsel %vm544, 0.0, %v528
      %v553 = vsel %vm545, 0.0, %v529
      %v554 = vsel %vm546, 0.0, %v530
      %v555 = vsel %vm547, 0.0, %v531
      %v556 = vsel %vm548, 0.0, %v532
      %v557 = vsel %vm549, 0.0, %v533
      %v558 = vsel %vm550, 0.0, %v534
      %v559 = vpack.c.bf16 %v552, %v551
      %v560 = vpack.c.bf16 %v554, %v553
      %v561 = vpack.c.bf16 %v556, %v555
      %v562 = vpack.c.bf16 %v558, %v557
      %s563 = scalar_lea.vmem %s2, 8
      %v564 = vld [vmem:[%s563] sm:$0xf]
      %v566 = vsel %vm358, %v559, 0
      %v569 = vsel %vm358, %v560, 0
      %v572 = vsel %vm358, %v561, 0
      %v575 = vsel %vm358, %v562, 0
      %v578 = vsel %vm450, %v564, 0
      %580 = vmatpush.bf16.msra.mxu0 0
      %581 = vmatpush.bf16.msra.mxu0 0
      %582 = vmatpush.bf16.msra.mxu0 0
      %583 = vmatpush.bf16.msra.mxu0 0
      %584 = vmatpush.bf16.msra.mxu0 0
      %585 = vmatpush.bf16.msra.mxu0 0
      %586 = vmatpush.bf16.msra.mxu0 0
      %587 = vmatpush.bf16.msra.mxu0 %v578
      %588 = vmatmul.bf16.gmra.mxu0 %v566
      %v589 = vpop.f32.mrf.mxu0
      %v590 = vadd.f32 0.0, %v589
      %v591 = vpop.f32.mrf.mxu0
      %v592 = vadd.f32 0.0, %v591
      %593 = vmatmul.bf16.gmra.mxu0 %v569
      %v594 = vpop.f32.mrf.mxu0
      %v595 = vadd.f32 0.0, %v594
      %v596 = vpop.f32.mrf.mxu0
      %v597 = vadd.f32 0.0, %v596
      %598 = vmatmul.bf16.gmra.mxu0 %v572
      %v599 = vpop.f32.mrf.mxu0
      %v600 = vadd.f32 0.0, %v599
      %v601 = vpop.f32.mrf.mxu0
      %v602 = vadd.f32 0.0, %v601
      %603 = vmatmul.bf16.gmra.mxu0 %v575
      %v604 = vpop.f32.mrf.mxu0
      %v605 = vadd.f32 0.0, %v604
      %v606 = vpop.f32.mrf.mxu0
      %v607 = vadd.f32 0.0, %v606
      %608 = vdwg.mxu0
      %v609 = vadd.f32 %v508, %v590
      %v610 = vadd.f32 %v510, %v592
      %v611 = vadd.f32 %v513, %v595
      %v612 = vadd.f32 %v515, %v597
      %v613 = vadd.f32 %v518, %v600
      %v614 = vadd.f32 %v520, %v602
      %v615 = vadd.f32 %v523, %v605
      %v616 = vadd.f32 %v525, %v607
      %v617 = vld [vmem:[#allocation2 + $0xf] sm:$0xff]
      %v618 = vld [vmem:[#allocation2 + $0x17] sm:$0xff]
      %v619 = vld [vmem:[#allocation2 + $0x1f] sm:$0xff]
      %v620 = vld [vmem:[#allocation2 + $0x27] sm:$0xff]
      %v621 = vld [vmem:[#allocation2 + $0x2f] sm:$0xff]
      %v622 = vld [vmem:[#allocation2 + $0x37] sm:$0xff]
      %v623 = vld [vmem:[#allocation2 + $0x3f] sm:$0xff]
      %v624 = vld [vmem:[#allocation2 + $0x47] sm:$0xff]
      %v625 = vsel %vm403, 0.0, %v617
      %v626 = vsel %vm404, 0.0, %v618
      %v627 = vsel %vm405, 0.0, %v619
      %v628 = vsel %vm406, 0.0, %v620
      %v629 = vsel %vm407, 0.0, %v621
      %v630 = vsel %vm408, 0.0, %v622
      %v631 = vsel %vm409, 0.0, %v623
      %v632 = vsel %vm410, 0.0, %v624
      %v633 = vpack.c.bf16 %v626, %v625
      %v634 = vpack.c.bf16 %v628, %v627
      %v635 = vpack.c.bf16 %v630, %v629
      %v636 = vpack.c.bf16 %v632, %v631
      %s637 = scalar_lea.vmem %s2, 12
      %v638 = vld [vmem:[%s637] sm:$0xf]
      %v640 = vsel %vm358, %v633, 0
      %v643 = vsel %vm358, %v634, 0
      %v646 = vsel %vm358, %v635, 0
      %v649 = vsel %vm358, %v636, 0
      %v652 = vsel %vm450, %v638, 0
      %654 = vmatpush.bf16.msra.mxu0 0
      %655 = vmatpush.bf16.msra.mxu0 0
      %656 = vmatpush.bf16.msra.mxu0 0
      %657 = vmatpush.bf16.msra.mxu0 0
      %658 = vmatpush.bf16.msra.mxu0 0
      %659 = vmatpush.bf16.msra.mxu0 0
      %660 = vmatpush.bf16.msra.mxu0 0
      %661 = vmatpush.bf16.msra.mxu0 %v652
      %662 = vmatmul.bf16.gmra.mxu0 %v640
      %v663 = vpop.f32.mrf.mxu0
      %v664 = vadd.f32 0.0, %v663
      %v665 = vpop.f32.mrf.mxu0
      %v666 = vadd.f32 0.0, %v665
      %667 = vmatmul.bf16.gmra.mxu0 %v643
      %v668 = vpop.f32.mrf.mxu0
      %v669 = vadd.f32 0.0, %v668
      %v670 = vpop.f32.mrf.mxu0
      %v671 = vadd.f32 0.0, %v670
      %672 = vmatmul.bf16.gmra.mxu0 %v646
      %v673 = vpop.f32.mrf.mxu0
      %v674 = vadd.f32 0.0, %v673
      %v675 = vpop.f32.mrf.mxu0
      %v676 = vadd.f32 0.0, %v675
      %677 = vmatmul.bf16.gmra.mxu0 %v649
      %v678 = vpop.f32.mrf.mxu0
      %v679 = vadd.f32 0.0, %v678
      %v680 = vpop.f32.mrf.mxu0
      %v681 = vadd.f32 0.0, %v680
      %682 = vdwg.mxu0
      %v683 = vadd.f32 %v609, %v664
      %v684 = vadd.f32 %v610, %v666
      %v685 = vadd.f32 %v611, %v669
      %v686 = vadd.f32 %v612, %v671
      %v687 = vadd.f32 %v613, %v674
      %v688 = vadd.f32 %v614, %v676
      %v689 = vadd.f32 %v615, %v679
      %v690 = vadd.f32 %v616, %v681
      %v691 = vld [vmem:[#allocation2 + $0x10] sm:$0xff]
      %v692 = vld [vmem:[#allocation2 + $0x18] sm:$0xff]
      %v693 = vld [vmem:[#allocation2 + $0x20] sm:$0xff]
      %v694 = vld [vmem:[#allocation2 + $0x28] sm:$0xff]
      %v695 = vld [vmem:[#allocation2 + $0x30] sm:$0xff]
      %v696 = vld [vmem:[#allocation2 + $0x38] sm:$0xff]
      %v697 = vld [vmem:[#allocation2 + $0x40] sm:$0xff]
      %v698 = vld [vmem:[#allocation2 + $0x48] sm:$0xff]
      %v699 = vpack.c.bf16 %v692, %v691
      %v700 = vpack.c.bf16 %v694, %v693
      %v701 = vpack.c.bf16 %v696, %v695
      %v702 = vpack.c.bf16 %v698, %v697
      %s703 = scalar_lea.vmem %s2, 16
      %v704 = vld [vmem:[%s703] sm:$0xf]
      %v706 = vsel %vm358, %v699, 0
      %v709 = vsel %vm358, %v700, 0
      %v712 = vsel %vm358, %v701, 0
      %v715 = vsel %vm358, %v702, 0
      %v718 = vsel %vm450, %v704, 0
      %720 = vmatpush.bf16.msra.mxu0 0
      %721 = vmatpush.bf16.msra.mxu0 0
      %722 = vmatpush.bf16.msra.mxu0 0
      %723 = vmatpush.bf16.msra.mxu0 0
      %724 = vmatpush.bf16.msra.mxu0 0
      %725 = vmatpush.bf16.msra.mxu0 0
      %726 = vmatpush.bf16.msra.mxu0 0
      %727 = vmatpush.bf16.msra.mxu0 %v718
      %728 = vmatmul.bf16.gmra.mxu0 %v706
      %v729 = vpop.f32.mrf.mxu0
      %v730 = vadd.f32 0.0, %v729
      %v731 = vpop.f32.mrf.mxu0
      %v732 = vadd.f32 0.0, %v731
      %733 = vmatmul.bf16.gmra.mxu0 %v709
      %v734 = vpop.f32.mrf.mxu0
      %v735 = vadd.f32 0.0, %v734
      %v736 = vpop.f32.mrf.mxu0
      %v737 = vadd.f32 0.0, %v736
      %738 = vmatmul.bf16.gmra.mxu0 %v712
      %v739 = vpop.f32.mrf.mxu0
      %v740 = vadd.f32 0.0, %v739
      %v741 = vpop.f32.mrf.mxu0
      %v742 = vadd.f32 0.0, %v741
      %743 = vmatmul.bf16.gmra.mxu0 %v715
      %v744 = vpop.f32.mrf.mxu0
      %v745 = vadd.f32 0.0, %v744
      %v746 = vpop.f32.mrf.mxu0
      %v747 = vadd.f32 0.0, %v746
      %748 = vdwg.mxu0
      %v749 = vadd.f32 %v683, %v730
      %v750 = vadd.f32 %v684, %v732
      %v751 = vadd.f32 %v685, %v735
      %v752 = vadd.f32 %v686, %v737
      %v753 = vadd.f32 %v687, %v740
      %v754 = vadd.f32 %v688, %v742
      %v755 = vadd.f32 %v689, %v745
      %v756 = vadd.f32 %v690, %v747
      %v757 = vld [vmem:[#allocation2 + $0x11] sm:$0xff]
      %v758 = vld [vmem:[#allocation2 + $0x19] sm:$0xff]
      %v759 = vld [vmem:[#allocation2 + $0x21] sm:$0xff]
      %v760 = vld [vmem:[#allocation2 + $0x29] sm:$0xff]
      %v761 = vld [vmem:[#allocation2 + $0x31] sm:$0xff]
      %v762 = vld [vmem:[#allocation2 + $0x39] sm:$0xff]
      %v763 = vld [vmem:[#allocation2 + $0x41] sm:$0xff]
      %v764 = vld [vmem:[#allocation2 + $0x49] sm:$0xff]
      %v765 = vsel %vm543, 0.0, %v757
      %v766 = vsel %vm544, 0.0, %v758
      %v767 = vsel %vm545, 0.0, %v759
      %v768 = vsel %vm546, 0.0, %v760
      %v769 = vsel %vm547, 0.0, %v761
      %v770 = vsel %vm548, 0.0, %v762
      %v771 = vsel %vm549, 0.0, %v763
      %v772 = vsel %vm550, 0.0, %v764
      %v773 = vpack.c.bf16 %v766, %v765
      %v774 = vpack.c.bf16 %v768, %v767
      %v775 = vpack.c.bf16 %v770, %v769
      %v776 = vpack.c.bf16 %v772, %v771
      %s777 = scalar_lea.vmem %s2, 20
      %v778 = vld [vmem:[%s777] sm:$0xf]
      %v780 = vsel %vm358, %v773, 0
      %v783 = vsel %vm358, %v774, 0
      %v786 = vsel %vm358, %v775, 0
      %v789 = vsel %vm358, %v776, 0
      %v792 = vsel %vm450, %v778, 0
      %794 = vmatpush.bf16.msra.mxu0 0
      %795 = vmatpush.bf16.msra.mxu0 0
      %796 = vmatpush.bf16.msra.mxu0 0
      %797 = vmatpush.bf16.msra.mxu0 0
      %798 = vmatpush.bf16.msra.mxu0 0
      %799 = vmatpush.bf16.msra.mxu0 0
      %800 = vmatpush.bf16.msra.mxu0 0
      %801 = vmatpush.bf16.msra.mxu0 %v792
      %802 = vmatmul.bf16.gmra.mxu0 %v780
      %v803 = vpop.f32.mrf.mxu0
      %v804 = vadd.f32 0.0, %v803
      %v805 = vpop.f32.mrf.mxu0
      %v806 = vadd.f32 0.0, %v805
      %807 = vmatmul.bf16.gmra.mxu0 %v783
      %v808 = vpop.f32.mrf.mxu0
      %v809 = vadd.f32 0.0, %v808
      %v810 = vpop.f32.mrf.mxu0
      %v811 = vadd.f32 0.0, %v810
      %812 = vmatmul.bf16.gmra.mxu0 %v786
      %v813 = vpop.f32.mrf.mxu0
      %v814 = vadd.f32 0.0, %v813
      %v815 = vpop.f32.mrf.mxu0
      %v816 = vadd.f32 0.0, %v815
      %817 = vmatmul.bf16.gmra.mxu0 %v789
      %v818 = vpop.f32.mrf.mxu0
      %v819 = vadd.f32 0.0, %v818
      %v820 = vpop.f32.mrf.mxu0
      %v821 = vadd.f32 0.0, %v820
      %822 = vdwg.mxu0
      %v823 = vadd.f32 %v749, %v804
      %v824 = vadd.f32 %v750, %v806
      %v825 = vadd.f32 %v751, %v809
      %v826 = vadd.f32 %v752, %v811
      %v827 = vadd.f32 %v753, %v814
      %v828 = vadd.f32 %v754, %v816
      %v829 = vadd.f32 %v755, %v819
      %v830 = vadd.f32 %v756, %v821
      %v831 = vld [vmem:[#allocation2 + $0x17] sm:$0xff]
      %v832 = vld [vmem:[#allocation2 + $0x1f] sm:$0xff]
      %v833 = vld [vmem:[#allocation2 + $0x27] sm:$0xff]
      %v834 = vld [vmem:[#allocation2 + $0x2f] sm:$0xff]
      %v835 = vld [vmem:[#allocation2 + $0x37] sm:$0xff]
      %v836 = vld [vmem:[#allocation2 + $0x3f] sm:$0xff]
      %v837 = vld [vmem:[#allocation2 + $0x47] sm:$0xff]
      %v838 = vld [vmem:[#allocation2 + $0x4f] sm:$0xff]
      %v839 = vsel %vm403, 0.0, %v831
      %v840 = vsel %vm404, 0.0, %v832
      %v841 = vsel %vm405, 0.0, %v833
      %v842 = vsel %vm406, 0.0, %v834
      %v843 = vsel %vm407, 0.0, %v835
      %v844 = vsel %vm408, 0.0, %v836
      %v845 = vsel %vm409, 0.0, %v837
      %v846 = vsel %vm410, 0.0, %v838
      %v847 = vpack.c.bf16 %v840, %v839
      %v848 = vpack.c.bf16 %v842, %v841
      %v849 = vpack.c.bf16 %v844, %v843
      %v850 = vpack.c.bf16 %v846, %v845
      %s851 = scalar_lea.vmem %s2, 24
      %v852 = vld [vmem:[%s851] sm:$0xf]
      %v854 = vsel %vm358, %v847, 0
      %v857 = vsel %vm358, %v848, 0
      %v860 = vsel %vm358, %v849, 0
      %v863 = vsel %vm358, %v850, 0
      %v866 = vsel %vm450, %v852, 0
      %868 = vmatpush.bf16.msra.mxu0 0
      %869 = vmatpush.bf16.msra.mxu0 0
      %870 = vmatpush.bf16.msra.mxu0 0
      %871 = vmatpush.bf16.msra.mxu0 0
      %872 = vmatpush.bf16.msra.mxu0 0
      %873 = vmatpush.bf16.msra.mxu0 0
      %874 = vmatpush.bf16.msra.mxu0 0
      %875 = vmatpush.bf16.msra.mxu0 %v866
      %876 = vmatmul.bf16.gmra.mxu0 %v854
      %v877 = vpop.f32.mrf.mxu0
      %v878 = vadd.f32 0.0, %v877
      %v879 = vpop.f32.mrf.mxu0
      %v880 = vadd.f32 0.0, %v879
      %881 = vmatmul.bf16.gmra.mxu0 %v857
      %v882 = vpop.f32.mrf.mxu0
      %v883 = vadd.f32 0.0, %v882
      %v884 = vpop.f32.mrf.mxu0
      %v885 = vadd.f32 0.0, %v884
      %886 = vmatmul.bf16.gmra.mxu0 %v860
      %v887 = vpop.f32.mrf.mxu0
      %v888 = vadd.f32 0.0, %v887
      %v889 = vpop.f32.mrf.mxu0
      %v890 = vadd.f32 0.0, %v889
      %891 = vmatmul.bf16.gmra.mxu0 %v863
      %v892 = vpop.f32.mrf.mxu0
      %v893 = vadd.f32 0.0, %v892
      %v894 = vpop.f32.mrf.mxu0
      %v895 = vadd.f32 0.0, %v894
      %896 = vdwg.mxu0
      %v897 = vadd.f32 %v823, %v878
      %v898 = vadd.f32 %v824, %v880
      %v899 = vadd.f32 %v825, %v883
      %v900 = vadd.f32 %v826, %v885
      %v901 = vadd.f32 %v827, %v888
      %v902 = vadd.f32 %v828, %v890
      %v903 = vadd.f32 %v829, %v893
      %v904 = vadd.f32 %v830, %v895
      %v905 = vld [vmem:[#allocation2 + $0x18] sm:$0xff]
      %v906 = vld [vmem:[#allocation2 + $0x20] sm:$0xff]
      %v907 = vld [vmem:[#allocation2 + $0x28] sm:$0xff]
      %v908 = vld [vmem:[#allocation2 + $0x30] sm:$0xff]
      %v909 = vld [vmem:[#allocation2 + $0x38] sm:$0xff]
      %v910 = vld [vmem:[#allocation2 + $0x40] sm:$0xff]
      %v911 = vld [vmem:[#allocation2 + $0x48] sm:$0xff]
      %v912 = vld [vmem:[#allocation2 + $0x50] sm:$0xff]
      %v913 = vpack.c.bf16 %v906, %v905
      %v914 = vpack.c.bf16 %v908, %v907
      %v915 = vpack.c.bf16 %v910, %v909
      %v916 = vpack.c.bf16 %v912, %v911
      %s917 = scalar_lea.vmem %s2, 28
      %v918 = vld [vmem:[%s917] sm:$0xf]
      %v920 = vsel %vm358, %v913, 0
      %v923 = vsel %vm358, %v914, 0
      %v926 = vsel %vm358, %v915, 0
      %v929 = vsel %vm358, %v916, 0
      %v932 = vsel %vm450, %v918, 0
      %934 = vmatpush.bf16.msra.mxu0 0
      %935 = vmatpush.bf16.msra.mxu0 0
      %936 = vmatpush.bf16.msra.mxu0 0
      %937 = vmatpush.bf16.msra.mxu0 0
      %938 = vmatpush.bf16.msra.mxu0 0
      %939 = vmatpush.bf16.msra.mxu0 0
      %940 = vmatpush.bf16.msra.mxu0 0
      %941 = vmatpush.bf16.msra.mxu0 %v932
      %942 = vmatmul.bf16.gmra.mxu0 %v920
      %v943 = vpop.f32.mrf.mxu0
      %v944 = vadd.f32 0.0, %v943
      %v945 = vpop.f32.mrf.mxu0
      %v946 = vadd.f32 0.0, %v945
      %947 = vmatmul.bf16.gmra.mxu0 %v923
      %v948 = vpop.f32.mrf.mxu0
      %v949 = vadd.f32 0.0, %v948
      %v950 = vpop.f32.mrf.mxu0
      %v951 = vadd.f32 0.0, %v950
      %952 = vmatmul.bf16.gmra.mxu0 %v926
      %v953 = vpop.f32.mrf.mxu0
      %v954 = vadd.f32 0.0, %v953
      %v955 = vpop.f32.mrf.mxu0
      %v956 = vadd.f32 0.0, %v955
      %957 = vmatmul.bf16.gmra.mxu0 %v929
      %v958 = vpop.f32.mrf.mxu0
      %v959 = vadd.f32 0.0, %v958
      %v960 = vpop.f32.mrf.mxu0
      %v961 = vadd.f32 0.0, %v960
      %962 = vdwg.mxu0
      %v963 = vadd.f32 %v897, %v944
      %v964 = vadd.f32 %v898, %v946
      %v965 = vadd.f32 %v899, %v949
      %v966 = vadd.f32 %v900, %v951
      %v967 = vadd.f32 %v901, %v954
      %v968 = vadd.f32 %v902, %v956
      %v969 = vadd.f32 %v903, %v959
      %v970 = vadd.f32 %v904, %v961
      %v971 = vld [vmem:[#allocation2 + $0x19] sm:$0xff]
      %v972 = vld [vmem:[#allocation2 + $0x21] sm:$0xff]
      %v973 = vld [vmem:[#allocation2 + $0x29] sm:$0xff]
      %v974 = vld [vmem:[#allocation2 + $0x31] sm:$0xff]
      %v975 = vld [vmem:[#allocation2 + $0x39] sm:$0xff]
      %v976 = vld [vmem:[#allocation2 + $0x41] sm:$0xff]
      %v977 = vld [vmem:[#allocation2 + $0x49] sm:$0xff]
      %v978 = vld [vmem:[#allocation2 + $0x51] sm:$0xff]
      %v979 = vsel %vm543, 0.0, %v971
      %v980 = vsel %vm544, 0.0, %v972
      %v981 = vsel %vm545, 0.0, %v973
      %v982 = vsel %vm546, 0.0, %v974
      %v983 = vsel %vm547, 0.0, %v975
      %v984 = vsel %vm548, 0.0, %v976
      %v985 = vsel %vm549, 0.0, %v977
      %v986 = vsel %vm550, 0.0, %v978
      %v987 = vpack.c.bf16 %v980, %v979
      %v988 = vpack.c.bf16 %v982, %v981
      %v989 = vpack.c.bf16 %v984, %v983
      %v990 = vpack.c.bf16 %v986, %v985
      %s991 = scalar_lea.vmem %s2, 32
      %v992 = vld [vmem:[%s991] sm:$0xf]
      %v994 = vsel %vm358, %v987, 0
      %v997 = vsel %vm358, %v988, 0
      %v1000 = vsel %vm358, %v989, 0
      %v1003 = vsel %vm358, %v990, 0
      %v1006 = vsel %vm450, %v992, 0
      %1008 = vmatpush.bf16.msra.mxu0 0
      %1009 = vmatpush.bf16.msra.mxu0 0
      %1010 = vmatpush.bf16.msra.mxu0 0
      %1011 = vmatpush.bf16.msra.mxu0 0
      %1012 = vmatpush.bf16.msra.mxu0 0
      %1013 = vmatpush.bf16.msra.mxu0 0
      %1014 = vmatpush.bf16.msra.mxu0 0
      %1015 = vmatpush.bf16.msra.mxu0 %v1006
      %1016 = vmatmul.bf16.gmra.mxu0 %v994
      %v1017 = vpop.f32.mrf.mxu0
      %v1018 = vadd.f32 0.0, %v1017
      %v1019 = vpop.f32.mrf.mxu0
      %v1020 = vadd.f32 0.0, %v1019
      %1021 = vmatmul.bf16.gmra.mxu0 %v997
      %v1022 = vpop.f32.mrf.mxu0
      %v1023 = vadd.f32 0.0, %v1022
      %v1024 = vpop.f32.mrf.mxu0
      %v1025 = vadd.f32 0.0, %v1024
      %1026 = vmatmul.bf16.gmra.mxu0 %v1000
      %v1027 = vpop.f32.mrf.mxu0
      %v1028 = vadd.f32 0.0, %v1027
      %v1029 = vpop.f32.mrf.mxu0
      %v1030 = vadd.f32 0.0, %v1029
      %1031 = vmatmul.bf16.gmra.mxu0 %v1003
      %v1032 = vpop.f32.mrf.mxu0
      %v1033 = vadd.f32 0.0, %v1032
      %v1034 = vpop.f32.mrf.mxu0
      %v1035 = vadd.f32 0.0, %v1034
      %1036 = vdwg.mxu0
      %v1037 = vadd.f32 %v963, %v1018
      %v1038 = vadd.f32 %v964, %v1020
      %v1039 = vadd.f32 %v965, %v1023
      %v1040 = vadd.f32 %v966, %v1025
      %v1041 = vadd.f32 %v967, %v1028
      %v1042 = vadd.f32 %v968, %v1030
      %v1043 = vadd.f32 %v969, %v1033
      %v1044 = vadd.f32 %v970, %v1035
      %v1045 = vld [vmem:[%s4] sm:$0x1]
      %v1047 = vperm.slane %v1045, 0
      %v1049 = vadd.f32 %v1037, %v1047
      %v1050 = vadd.f32 %v1038, %v1047
      %v1051 = vadd.f32 %v1039, %v1047
      %v1052 = vadd.f32 %v1040, %v1047
      %v1053 = vadd.f32 %v1041, %v1047
      %v1054 = vadd.f32 %v1042, %v1047
      %v1055 = vadd.f32 %v1043, %v1047
      %v1056 = vadd.f32 %v1044, %v1047
      %vm1057 = vcmp.ge.f32.partialorder %v1049, 0.0
      %vm1058 = vcmp.ge.f32.partialorder %v1050, 0.0
      %vm1059 = vcmp.ge.f32.partialorder %v1051, 0.0
      %vm1060 = vcmp.ge.f32.partialorder %v1052, 0.0
      %vm1061 = vcmp.ge.f32.partialorder %v1053, 0.0
      %vm1062 = vcmp.ge.f32.partialorder %v1054, 0.0
      %vm1063 = vcmp.ge.f32.partialorder %v1055, 0.0
      %vm1064 = vcmp.ge.f32.partialorder %v1056, 0.0
      %v1065 = vmul.f32 %v1049, 0.2
      %v1066 = vmul.f32 %v1050, 0.2
      %v1067 = vmul.f32 %v1051, 0.2
      %v1068 = vmul.f32 %v1052, 0.2
      %v1069 = vmul.f32 %v1053, 0.2
      %v1070 = vmul.f32 %v1054, 0.2
      %v1071 = vmul.f32 %v1055, 0.2
      %v1072 = vmul.f32 %v1056, 0.2
      %v1073 = vsel %vm1057, %v1049, %v1065
      %v1074 = vsel %vm1058, %v1050, %v1066
      %v1075 = vsel %vm1059, %v1051, %v1067
      %v1076 = vsel %vm1060, %v1052, %v1068
      %v1077 = vsel %vm1061, %v1053, %v1069
      %v1078 = vsel %vm1062, %v1054, %v1070
      %v1079 = vsel %vm1063, %v1055, %v1071
      %v1080 = vsel %vm1064, %v1056, %v1072
      %vm1081 = vcmask 31744
      %v1082 = vsel %vm1081, %v1073, 0.0
      %v1083 = vsel %vm1081, %v1074, 0.0
      %v1084 = vadd.f32 %v1082, %v1083
      %v1085 = vsel %vm1081, %v1075, 0.0
      %v1086 = vadd.f32 %v1084, %v1085
      %v1087 = vsel %vm1081, %v1076, 0.0
      %v1088 = vadd.f32 %v1086, %v1087
      %v1089 = vsel %vm1081, %v1077, 0.0
      %v1090 = vadd.f32 %v1088, %v1089
      %v1091 = vsel %vm1081, %v1078, 0.0
      %v1092 = vadd.f32 %v1090, %v1091
      %v1093 = vsel %vm1081, %v1079, 0.0
      %v1094 = vadd.f32 %v1092, %v1093
      %v1095 = vsel %vm1081, %v1080, 0.0
      %v1096 = vadd.f32 %v1094, %v1095
      %v1097 = vrot.slane %v1096, 4
      %v1098 = vadd.f32 %v1096, %v1097
      %v1099 = vrot.slane %v1098, 2
      %v1100 = vadd.f32 %v1098, %v1099
      %v1101 = vrot.slane %v1100, 1
      %v1102 = vadd.f32 %v1100, %v1101
      %v1103 = vrcp.pop 64.0
      %v1104 = vmul.f32 64.0, %v1103
      %v1105 = vsub.f32 1.0, %v1104
      %v1106 = vmul.f32 %v1103, %v1105
      %v1107 = vadd.f32 %v1103, %v1106
      %vm1108 = vweird.f32 %v1103
      %v1109 = vsel %vm1108, %v1103, %v1107
      %v1110 = vmul.f32 %v1102, %v1109
      %v1111 = vsub.f32 %v1073, %v1110
      %v1112 = vsub.f32 %v1074, %v1110
      %v1113 = vsub.f32 %v1075, %v1110
      %v1114 = vsub.f32 %v1076, %v1110
      %v1115 = vsub.f32 %v1077, %v1110
      %v1116 = vsub.f32 %v1078, %v1110
      %v1117 = vsub.f32 %v1079, %v1110
      %v1118 = vsub.f32 %v1080, %v1110
      %v1119 = vmul.f32 %v1111, %v1111
      %v1120 = vmul.f32 %v1112, %v1112
      %v1121 = vmul.f32 %v1113, %v1113
      %v1122 = vmul.f32 %v1114, %v1114
      %v1123 = vmul.f32 %v1115, %v1115
      %v1124 = vmul.f32 %v1116, %v1116
      %v1125 = vmul.f32 %v1117, %v1117
      %v1126 = vmul.f32 %v1118, %v1118
      %v1127 = vsel %vm1081, %v1119, 0.0
      %v1128 = vsel %vm1081, %v1120, 0.0
      %v1129 = vadd.f32 %v1127, %v1128
      %v1130 = vsel %vm1081, %v1121, 0.0
      %v1131 = vadd.f32 %v1129, %v1130
      %v1132 = vsel %vm1081, %v1122, 0.0
      %v1133 = vadd.f32 %v1131, %v1132
      %v1134 = vsel %vm1081, %v1123, 0.0
      %v1135 = vadd.f32 %v1133, %v1134
      %v1136 = vsel %vm1081, %v1124, 0.0
      %v1137 = vadd.f32 %v1135, %v1136
      %v1138 = vsel %vm1081, %v1125, 0.0
      %v1139 = vadd.f32 %v1137, %v1138
      %v1140 = vsel %vm1081, %v1126, 0.0
      %v1141 = vadd.f32 %v1139, %v1140
      %v1142 = vrot.slane %v1141, 4
      %v1143 = vadd.f32 %v1141, %v1142
      %v1144 = vrot.slane %v1143, 2
      %v1145 = vadd.f32 %v1143, %v1144
      %v1146 = vrot.slane %v1145, 1
      %v1147 = vadd.f32 %v1145, %v1146
      %v1148 = vmul.f32 %v1147, %v1109
      %v1149 = vadd.f32 %v1148, 1e-08
      %v1150 = vrsqrt.pop %v1149
      %v1151 = vmul.f32 %v1150, %v1149
      %v1152 = vmul.f32 %v1151, %v1150
      %v1153 = vmul.f32 0.5, %v1152
      %v1154 = vsub.f32 1.5, %v1153
      %v1155 = vmul.f32 %v1150, %v1154
      %vm1156 = vweird.f32 %v1149
      %vm1157 = vweird.f32 %v1150
      %vm1158 = vmor %vm1156, %vm1157
      %v1159 = vsel %vm1158, %v1150, %v1155
      %v1160 = vmul.f32 %v1111, %v1159
      %v1161 = vmul.f32 %v1112, %v1159
      %v1162 = vmul.f32 %v1113, %v1159
      %v1163 = vmul.f32 %v1114, %v1159
      %v1164 = vmul.f32 %v1115, %v1159
      %v1165 = vmul.f32 %v1116, %v1159
      %v1166 = vmul.f32 %v1117, %v1159
      %v1167 = vmul.f32 %v1118, %v1159
      %v1168 = vperm.slane %v357, 0
      %v1169 = vmul.f32 %v1168, %v1160
      %v1170 = vmul.f32 %v1168, %v1161
      %v1171 = vmul.f32 %v1168, %v1162
      %v1172 = vmul.f32 %v1168, %v1163
      %v1173 = vmul.f32 %v1168, %v1164
      %v1174 = vmul.f32 %v1168, %v1165
      %v1175 = vmul.f32 %v1168, %v1166
      %v1176 = vmul.f32 %v1168, %v1167
      %v1177 = vperm.slane %v357, 1
      %v1178 = vadd.f32 %v1169, %v1177
      %v1179 = vadd.f32 %v1170, %v1177
      %v1180 = vadd.f32 %v1171, %v1177
      %v1181 = vadd.f32 %v1172, %v1177
      %v1182 = vadd.f32 %v1173, %v1177
      %v1183 = vadd.f32 %v1174, %v1177
      %v1184 = vadd.f32 %v1175, %v1177
      %v1185 = vadd.f32 %v1176, %v1177
      %1186 = vst.msk [vmem:[#allocation3] sm:$0xff] %vm1081, 0.0
      %1187 = vst.msk [vmem:[#allocation3 + $0x8] sm:$0xff] %vm1081, 0.0
      %1188 = vst.msk [vmem:[#allocation3 + $0x50] sm:$0xff] %vm1081, 0.0
      %1189 = vst.msk [vmem:[#allocation3 + $0x58] sm:$0xff] %vm1081, 0.0
      %1190 = vst.msk [vmem:[#allocation3 + $0x10] sm:$0xff] %vm1081, %v1178
      %1191 = vst.msk [vmem:[#allocation3 + $0x18] sm:$0xff] %vm1081, %v1179
      %1192 = vst.msk [vmem:[#allocation3 + $0x20] sm:$0xff] %vm1081, %v1180
      %1193 = vst.msk [vmem:[#allocation3 + $0x28] sm:$0xff] %vm1081, %v1181
      %1194 = vst.msk [vmem:[#allocation3 + $0x30] sm:$0xff] %vm1081, %v1182
      %1195 = vst.msk [vmem:[#allocation3 + $0x38] sm:$0xff] %vm1081, %v1183
      %1196 = vst.msk [vmem:[#allocation3 + $0x40] sm:$0xff] %vm1081, %v1184
      %1197 = vst.msk [vmem:[#allocation3 + $0x48] sm:$0xff] %vm1081, %v1185
      %v1198 = vld [vmem:[#allocation3 + $0x7] sm:$0xff]
      %v1199 = vld [vmem:[#allocation3 + $0xf] sm:$0xff]
      %v1200 = vld [vmem:[#allocation3 + $0x17] sm:$0xff]
      %v1201 = vld [vmem:[#allocation3 + $0x1f] sm:$0xff]
      %v1202 = vld [vmem:[#allocation3 + $0x27] sm:$0xff]
      %v1203 = vld [vmem:[#allocation3 + $0x2f] sm:$0xff]
      %v1204 = vld [vmem:[#allocation3 + $0x37] sm:$0xff]
      %v1205 = vld [vmem:[#allocation3 + $0x3f] sm:$0xff]
      %v1206 = vsel %vm403, 0.0, %v1198
      %v1207 = vsel %vm404, 0.0, %v1199
      %v1208 = vsel %vm405, 0.0, %v1200
      %v1209 = vsel %vm406, 0.0, %v1201
      %v1210 = vsel %vm407, 0.0, %v1202
      %v1211 = vsel %vm408, 0.0, %v1203
      %v1212 = vsel %vm409, 0.0, %v1204
      %v1213 = vsel %vm410, 0.0, %v1205
      %v1214 = vpack.c.bf16 %v1207, %v1206
      %v1215 = vpack.c.bf16 %v1209, %v1208
      %v1216 = vpack.c.bf16 %v1211, %v1210
      %v1217 = vpack.c.bf16 %v1213, %v1212
      %v1218 = vld [vmem:[%s3] sm:$0x3]
      %v1219 = vld [vmem:[#allocation3 + $0x8] sm:$0xff]
      %v1220 = vld [vmem:[#allocation3 + $0x10] sm:$0xff]
      %v1221 = vld [vmem:[#allocation3 + $0x18] sm:$0xff]
      %v1222 = vld [vmem:[#allocation3 + $0x20] sm:$0xff]
      %v1223 = vld [vmem:[#allocation3 + $0x28] sm:$0xff]
      %v1224 = vld [vmem:[#allocation3 + $0x30] sm:$0xff]
      %v1225 = vld [vmem:[#allocation3 + $0x38] sm:$0xff]
      %v1226 = vld [vmem:[#allocation3 + $0x40] sm:$0xff]
      %v1227 = vpack.c.bf16 %v1220, %v1219
      %v1228 = vpack.c.bf16 %v1222, %v1221
      %v1229 = vpack.c.bf16 %v1224, %v1223
      %v1230 = vpack.c.bf16 %v1226, %v1225
      %s1231 = scalar_lea.vmem %s3, 2
      %v1232 = vld [vmem:[%s1231] sm:$0x3]
      %v1234 = vsel %vm1081, %v1227, 0
      %v1237 = vsel %vm1081, %v1228, 0
      %v1240 = vsel %vm1081, %v1229, 0
      %v1243 = vsel %vm1081, %v1230, 0
      %vm1245 = vcmask 1041408
      %v1247 = vsel %vm1245, %v1232, 0
      %1249 = vmatpush.bf16.msra.mxu0 0
      %1250 = vmatpush.bf16.msra.mxu0 0
      %1251 = vmatpush.bf16.msra.mxu0 0
      %1252 = vmatpush.bf16.msra.mxu0 0
      %1253 = vmatpush.bf16.msra.mxu0 0
      %1254 = vmatpush.bf16.msra.mxu0 0
      %1255 = vmatpush.bf16.msra.mxu0 0
      %1256 = vmatpush.bf16.msra.mxu0 %v1247
      %1257 = vmatmul.bf16.gmra.mxu0 %v1234
      %v1258 = vpop.f32.mrf.mxu0
      %v1259 = vadd.f32 0.0, %v1258
      %v1260 = vpop.f32.mrf.mxu0
      %v1261 = vadd.f32 0.0, %v1260
      %1262 = vmatmul.bf16.gmra.mxu0 %v1237
      %v1263 = vpop.f32.mrf.mxu0
      %v1264 = vadd.f32 0.0, %v1263
      %v1265 = vpop.f32.mrf.mxu0
      %v1266 = vadd.f32 0.0, %v1265
      %1267 = vmatmul.bf16.gmra.mxu0 %v1240
      %v1268 = vpop.f32.mrf.mxu0
      %v1269 = vadd.f32 0.0, %v1268
      %v1270 = vpop.f32.mrf.mxu0
      %v1271 = vadd.f32 0.0, %v1270
      %1272 = vmatmul.bf16.gmra.mxu0 %v1243
      %v1273 = vpop.f32.mrf.mxu0
      %v1274 = vadd.f32 0.0, %v1273
      %v1275 = vpop.f32.mrf.mxu0
      %v1276 = vadd.f32 0.0, %v1275
      %1277 = vdwg.mxu0
      %v1279 = vsel %vm1081, %v1214, 0
      %v1282 = vsel %vm1081, %v1215, 0
      %v1285 = vsel %vm1081, %v1216, 0
      %v1288 = vsel %vm1081, %v1217, 0
      %v1291 = vsel %vm1245, %v1218, 0
      %1293 = vmatpush.bf16.msra.mxu0 0
      %1294 = vmatpush.bf16.msra.mxu0 0
      %1295 = vmatpush.bf16.msra.mxu0 0
      %1296 = vmatpush.bf16.msra.mxu0 0
      %1297 = vmatpush.bf16.msra.mxu0 0
      %1298 = vmatpush.bf16.msra.mxu0 0
      %1299 = vmatpush.bf16.msra.mxu0 0
      %1300 = vmatpush.bf16.msra.mxu0 %v1291
      %1301 = vmatmul.bf16.gmra.mxu0 %v1279
      %v1302 = vpop.f32.mrf.mxu0
      %v1303 = vadd.f32 %v1259, %v1302
      %v1304 = vpop.f32.mrf.mxu0
      %v1305 = vadd.f32 %v1261, %v1304
      %1306 = vmatmul.bf16.gmra.mxu0 %v1282
      %v1307 = vpop.f32.mrf.mxu0
      %v1308 = vadd.f32 %v1264, %v1307
      %v1309 = vpop.f32.mrf.mxu0
      %v1310 = vadd.f32 %v1266, %v1309
      %1311 = vmatmul.bf16.gmra.mxu0 %v1285
      %v1312 = vpop.f32.mrf.mxu0
      %v1313 = vadd.f32 %v1269, %v1312
      %v1314 = vpop.f32.mrf.mxu0
      %v1315 = vadd.f32 %v1271, %v1314
      %1316 = vmatmul.bf16.gmra.mxu0 %v1288
      %v1317 = vpop.f32.mrf.mxu0
      %v1318 = vadd.f32 %v1274, %v1317
      %v1319 = vpop.f32.mrf.mxu0
      %v1320 = vadd.f32 %v1276, %v1319
      %1321 = vdwg.mxu0
      %v1322 = vld [vmem:[#allocation3 + $0x9] sm:$0xff]
      %v1323 = vld [vmem:[#allocation3 + $0x11] sm:$0xff]
      %v1324 = vld [vmem:[#allocation3 + $0x19] sm:$0xff]
      %v1325 = vld [vmem:[#allocation3 + $0x21] sm:$0xff]
      %v1326 = vld [vmem:[#allocation3 + $0x29] sm:$0xff]
      %v1327 = vld [vmem:[#allocation3 + $0x31] sm:$0xff]
      %v1328 = vld [vmem:[#allocation3 + $0x39] sm:$0xff]
      %v1329 = vld [vmem:[#allocation3 + $0x41] sm:$0xff]
      %v1330 = vsel %vm543, 0.0, %v1322
      %v1331 = vsel %vm544, 0.0, %v1323
      %v1332 = vsel %vm545, 0.0, %v1324
      %v1333 = vsel %vm546, 0.0, %v1325
      %v1334 = vsel %vm547, 0.0, %v1326
      %v1335 = vsel %vm548, 0.0, %v1327
      %v1336 = vsel %vm549, 0.0, %v1328
      %v1337 = vsel %vm550, 0.0, %v1329
      %v1338 = vpack.c.bf16 %v1331, %v1330
      %v1339 = vpack.c.bf16 %v1333, %v1332
      %v1340 = vpack.c.bf16 %v1335, %v1334
      %v1341 = vpack.c.bf16 %v1337, %v1336
      %s1342 = scalar_lea.vmem %s3, 4
      %v1343 = vld [vmem:[%s1342] sm:$0x3]
      %v1345 = vsel %vm1081, %v1338, 0
      %v1348 = vsel %vm1081, %v1339, 0
      %v1351 = vsel %vm1081, %v1340, 0
      %v1354 = vsel %vm1081, %v1341, 0
      %v1357 = vsel %vm1245, %v1343, 0
      %1359 = vmatpush.bf16.msra.mxu0 0
      %1360 = vmatpush.bf16.msra.mxu0 0
      %1361 = vmatpush.bf16.msra.mxu0 0
      %1362 = vmatpush.bf16.msra.mxu0 0
      %1363 = vmatpush.bf16.msra.mxu0 0
      %1364 = vmatpush.bf16.msra.mxu0 0
      %1365 = vmatpush.bf16.msra.mxu0 0
      %1366 = vmatpush.bf16.msra.mxu0 %v1357
      %1367 = vmatmul.bf16.gmra.mxu0 %v1345
      %v1368 = vpop.f32.mrf.mxu0
      %v1369 = vadd.f32 0.0, %v1368
      %v1370 = vpop.f32.mrf.mxu0
      %v1371 = vadd.f32 0.0, %v1370
      %1372 = vmatmul.bf16.gmra.mxu0 %v1348
      %v1373 = vpop.f32.mrf.mxu0
      %v1374 = vadd.f32 0.0, %v1373
      %v1375 = vpop.f32.mrf.mxu0
      %v1376 = vadd.f32 0.0, %v1375
      %1377 = vmatmul.bf16.gmra.mxu0 %v1351
      %v1378 = vpop.f32.mrf.mxu0
      %v1379 = vadd.f32 0.0, %v1378
      %v1380 = vpop.f32.mrf.mxu0
      %v1381 = vadd.f32 0.0, %v1380
      %1382 = vmatmul.bf16.gmra.mxu0 %v1354
      %v1383 = vpop.f32.mrf.mxu0
      %v1384 = vadd.f32 0.0, %v1383
      %v1385 = vpop.f32.mrf.mxu0
      %v1386 = vadd.f32 0.0, %v1385
      %1387 = vdwg.mxu0
      %v1388 = vadd.f32 %v1303, %v1369
      %v1389 = vadd.f32 %v1305, %v1371
      %v1390 = vadd.f32 %v1308, %v1374
      %v1391 = vadd.f32 %v1310, %v1376
      %v1392 = vadd.f32 %v1313, %v1379
      %v1393 = vadd.f32 %v1315, %v1381
      %v1394 = vadd.f32 %v1318, %v1384
      %v1395 = vadd.f32 %v1320, %v1386
      %v1396 = vld [vmem:[#allocation3 + $0xf] sm:$0xff]
      %v1397 = vld [vmem:[#allocation3 + $0x17] sm:$0xff]
      %v1398 = vld [vmem:[#allocation3 + $0x1f] sm:$0xff]
      %v1399 = vld [vmem:[#allocation3 + $0x27] sm:$0xff]
      %v1400 = vld [vmem:[#allocation3 + $0x2f] sm:$0xff]
      %v1401 = vld [vmem:[#allocation3 + $0x37] sm:$0xff]
      %v1402 = vld [vmem:[#allocation3 + $0x3f] sm:$0xff]
      %v1403 = vld [vmem:[#allocation3 + $0x47] sm:$0xff]
      %v1404 = vsel %vm403, 0.0, %v1396
      %v1405 = vsel %vm404, 0.0, %v1397
      %v1406 = vsel %vm405, 0.0, %v1398
      %v1407 = vsel %vm406, 0.0, %v1399
      %v1408 = vsel %vm407, 0.0, %v1400
      %v1409 = vsel %vm408, 0.0, %v1401
      %v1410 = vsel %vm409, 0.0, %v1402
      %v1411 = vsel %vm410, 0.0, %v1403
      %v1412 = vpack.c.bf16 %v1405, %v1404
      %v1413 = vpack.c.bf16 %v1407, %v1406
      %v1414 = vpack.c.bf16 %v1409, %v1408
      %v1415 = vpack.c.bf16 %v1411, %v1410
      %s1416 = scalar_lea.vmem %s3, 6
      %v1417 = vld [vmem:[%s1416] sm:$0x3]
      %v1419 = vsel %vm1081, %v1412, 0
      %v1422 = vsel %vm1081, %v1413, 0
      %v1425 = vsel %vm1081, %v1414, 0
      %v1428 = vsel %vm1081, %v1415, 0
      %v1431 = vsel %vm1245, %v1417, 0
      %1433 = vmatpush.bf16.msra.mxu0 0
      %1434 = vmatpush.bf16.msra.mxu0 0
      %1435 = vmatpush.bf16.msra.mxu0 0
      %1436 = vmatpush.bf16.msra.mxu0 0
      %1437 = vmatpush.bf16.msra.mxu0 0
      %1438 = vmatpush.bf16.msra.mxu0 0
      %1439 = vmatpush.bf16.msra.mxu0 0
      %1440 = vmatpush.bf16.msra.mxu0 %v1431
      %1441 = vmatmul.bf16.gmra.mxu0 %v1419
      %v1442 = vpop.f32.mrf.mxu0
      %v1443 = vadd.f32 0.0, %v1442
      %v1444 = vpop.f32.mrf.mxu0
      %v1445 = vadd.f32 0.0, %v1444
      %1446 = vmatmul.bf16.gmra.mxu0 %v1422
      %v1447 = vpop.f32.mrf.mxu0
      %v1448 = vadd.f32 0.0, %v1447
      %v1449 = vpop.f32.mrf.mxu0
      %v1450 = vadd.f32 0.0, %v1449
      %1451 = vmatmul.bf16.gmra.mxu0 %v1425
      %v1452 = vpop.f32.mrf.mxu0
      %v1453 = vadd.f32 0.0, %v1452
      %v1454 = vpop.f32.mrf.mxu0
      %v1455 = vadd.f32 0.0, %v1454
      %1456 = vmatmul.bf16.gmra.mxu0 %v1428
      %v1457 = vpop.f32.mrf.mxu0
      %v1458 = vadd.f32 0.0, %v1457
      %v1459 = vpop.f32.mrf.mxu0
      %v1460 = vadd.f32 0.0, %v1459
      %1461 = vdwg.mxu0
      %v1462 = vadd.f32 %v1388, %v1443
      %v1463 = vadd.f32 %v1389, %v1445
      %v1464 = vadd.f32 %v1390, %v1448
      %v1465 = vadd.f32 %v1391, %v1450
      %v1466 = vadd.f32 %v1392, %v1453
      %v1467 = vadd.f32 %v1393, %v1455
      %v1468 = vadd.f32 %v1394, %v1458
      %v1469 = vadd.f32 %v1395, %v1460
      %v1470 = vld [vmem:[#allocation3 + $0x10] sm:$0xff]
      %v1471 = vld [vmem:[#allocation3 + $0x18] sm:$0xff]
      %v1472 = vld [vmem:[#allocation3 + $0x20] sm:$0xff]
      %v1473 = vld [vmem:[#allocation3 + $0x28] sm:$0xff]
      %v1474 = vld [vmem:[#allocation3 + $0x30] sm:$0xff]
      %v1475 = vld [vmem:[#allocation3 + $0x38] sm:$0xff]
      %v1476 = vld [vmem:[#allocation3 + $0x40] sm:$0xff]
      %v1477 = vld [vmem:[#allocation3 + $0x48] sm:$0xff]
      %v1478 = vpack.c.bf16 %v1471, %v1470
      %v1479 = vpack.c.bf16 %v1473, %v1472
      %v1480 = vpack.c.bf16 %v1475, %v1474
      %v1481 = vpack.c.bf16 %v1477, %v1476
      %s1482 = scalar_lea.vmem %s3, 8
      %v1483 = vld [vmem:[%s1482] sm:$0x3]
      %v1485 = vsel %vm1081, %v1478, 0
      %v1488 = vsel %vm1081, %v1479, 0
      %v1491 = vsel %vm1081, %v1480, 0
      %v1494 = vsel %vm1081, %v1481, 0
      %v1497 = vsel %vm1245, %v1483, 0
      %1499 = vmatpush.bf16.msra.mxu0 0
      %1500 = vmatpush.bf16.msra.mxu0 0
      %1501 = vmatpush.bf16.msra.mxu0 0
      %1502 = vmatpush.bf16.msra.mxu0 0
      %1503 = vmatpush.bf16.msra.mxu0 0
      %1504 = vmatpush.bf16.msra.mxu0 0
      %1505 = vmatpush.bf16.msra.mxu0 0
      %1506 = vmatpush.bf16.msra.mxu0 %v1497
      %1507 = vmatmul.bf16.gmra.mxu0 %v1485
      %v1508 = vpop.f32.mrf.mxu0
      %v1509 = vadd.f32 0.0, %v1508
      %v1510 = vpop.f32.mrf.mxu0
      %v1511 = vadd.f32 0.0, %v1510
      %1512 = vmatmul.bf16.gmra.mxu0 %v1488
      %v1513 = vpop.f32.mrf.mxu0
      %v1514 = vadd.f32 0.0, %v1513
      %v1515 = vpop.f32.mrf.mxu0
      %v1516 = vadd.f32 0.0, %v1515
      %1517 = vmatmul.bf16.gmra.mxu0 %v1491
      %v1518 = vpop.f32.mrf.mxu0
      %v1519 = vadd.f32 0.0, %v1518
      %v1520 = vpop.f32.mrf.mxu0
      %v1521 = vadd.f32 0.0, %v1520
      %1522 = vmatmul.bf16.gmra.mxu0 %v1494
      %v1523 = vpop.f32.mrf.mxu0
      %v1524 = vadd.f32 0.0, %v1523
      %v1525 = vpop.f32.mrf.mxu0
      %v1526 = vadd.f32 0.0, %v1525
      %1527 = vdwg.mxu0
      %v1528 = vadd.f32 %v1462, %v1509
      %v1529 = vadd.f32 %v1463, %v1511
      %v1530 = vadd.f32 %v1464, %v1514
      %v1531 = vadd.f32 %v1465, %v1516
      %v1532 = vadd.f32 %v1466, %v1519
      %v1533 = vadd.f32 %v1467, %v1521
      %v1534 = vadd.f32 %v1468, %v1524
      %v1535 = vadd.f32 %v1469, %v1526
      %v1536 = vld [vmem:[#allocation3 + $0x11] sm:$0xff]
      %v1537 = vld [vmem:[#allocation3 + $0x19] sm:$0xff]
      %v1538 = vld [vmem:[#allocation3 + $0x21] sm:$0xff]
      %v1539 = vld [vmem:[#allocation3 + $0x29] sm:$0xff]
      %v1540 = vld [vmem:[#allocation3 + $0x31] sm:$0xff]
      %v1541 = vld [vmem:[#allocation3 + $0x39] sm:$0xff]
      %v1542 = vld [vmem:[#allocation3 + $0x41] sm:$0xff]
      %v1543 = vld [vmem:[#allocation3 + $0x49] sm:$0xff]
      %v1544 = vsel %vm543, 0.0, %v1536
      %v1545 = vsel %vm544, 0.0, %v1537
      %v1546 = vsel %vm545, 0.0, %v1538
      %v1547 = vsel %vm546, 0.0, %v1539
      %v1548 = vsel %vm547, 0.0, %v1540
      %v1549 = vsel %vm548, 0.0, %v1541
      %v1550 = vsel %vm549, 0.0, %v1542
      %v1551 = vsel %vm550, 0.0, %v1543
      %v1552 = vpack.c.bf16 %v1545, %v1544
      %v1553 = vpack.c.bf16 %v1547, %v1546
      %v1554 = vpack.c.bf16 %v1549, %v1548
      %v1555 = vpack.c.bf16 %v1551, %v1550
      %s1556 = scalar_lea.vmem %s3, 10
      %v1557 = vld [vmem:[%s1556] sm:$0x3]
      %v1559 = vsel %vm1081, %v1552, 0
      %v1562 = vsel %vm1081, %v1553, 0
      %v1565 = vsel %vm1081, %v1554, 0
      %v1568 = vsel %vm1081, %v1555, 0
      %v1571 = vsel %vm1245, %v1557, 0
      %1573 = vmatpush.bf16.msra.mxu0 0
      %1574 = vmatpush.bf16.msra.mxu0 0
      %1575 = vmatpush.bf16.msra.mxu0 0
      %1576 = vmatpush.bf16.msra.mxu0 0
      %1577 = vmatpush.bf16.msra.mxu0 0
      %1578 = vmatpush.bf16.msra.mxu0 0
      %1579 = vmatpush.bf16.msra.mxu0 0
      %1580 = vmatpush.bf16.msra.mxu0 %v1571
      %1581 = vmatmul.bf16.gmra.mxu0 %v1559
      %v1582 = vpop.f32.mrf.mxu0
      %v1583 = vadd.f32 0.0, %v1582
      %v1584 = vpop.f32.mrf.mxu0
      %v1585 = vadd.f32 0.0, %v1584
      %1586 = vmatmul.bf16.gmra.mxu0 %v1562
      %v1587 = vpop.f32.mrf.mxu0
      %v1588 = vadd.f32 0.0, %v1587
      %v1589 = vpop.f32.mrf.mxu0
      %v1590 = vadd.f32 0.0, %v1589
      %1591 = vmatmul.bf16.gmra.mxu0 %v1565
      %v1592 = vpop.f32.mrf.mxu0
      %v1593 = vadd.f32 0.0, %v1592
      %v1594 = vpop.f32.mrf.mxu0
      %v1595 = vadd.f32 0.0, %v1594
      %1596 = vmatmul.bf16.gmra.mxu0 %v1568
      %v1597 = vpop.f32.mrf.mxu0
      %v1598 = vadd.f32 0.0, %v1597
      %v1599 = vpop.f32.mrf.mxu0
      %v1600 = vadd.f32 0.0, %v1599
      %1601 = vdwg.mxu0
      %v1602 = vadd.f32 %v1528, %v1583
      %v1603 = vadd.f32 %v1529, %v1585
      %v1604 = vadd.f32 %v1530, %v1588
      %v1605 = vadd.f32 %v1531, %v1590
      %v1606 = vadd.f32 %v1532, %v1593
      %v1607 = vadd.f32 %v1533, %v1595
      %v1608 = vadd.f32 %v1534, %v1598
      %v1609 = vadd.f32 %v1535, %v1600
      %v1610 = vld [vmem:[#allocation3 + $0x17] sm:$0xff]
      %v1611 = vld [vmem:[#allocation3 + $0x1f] sm:$0xff]
      %v1612 = vld [vmem:[#allocation3 + $0x27] sm:$0xff]
      %v1613 = vld [vmem:[#allocation3 + $0x2f] sm:$0xff]
      %v1614 = vld [vmem:[#allocation3 + $0x37] sm:$0xff]
      %v1615 = vld [vmem:[#allocation3 + $0x3f] sm:$0xff]
      %v1616 = vld [vmem:[#allocation3 + $0x47] sm:$0xff]
      %v1617 = vld [vmem:[#allocation3 + $0x4f] sm:$0xff]
      %v1618 = vsel %vm403, 0.0, %v1610
      %v1619 = vsel %vm404, 0.0, %v1611
      %v1620 = vsel %vm405, 0.0, %v1612
      %v1621 = vsel %vm406, 0.0, %v1613
      %v1622 = vsel %vm407, 0.0, %v1614
      %v1623 = vsel %vm408, 0.0, %v1615
      %v1624 = vsel %vm409, 0.0, %v1616
      %v1625 = vsel %vm410, 0.0, %v1617
      %v1626 = vpack.c.bf16 %v1619, %v1618
      %v1627 = vpack.c.bf16 %v1621, %v1620
      %v1628 = vpack.c.bf16 %v1623, %v1622
      %v1629 = vpack.c.bf16 %v1625, %v1624
      %s1630 = scalar_lea.vmem %s3, 12
      %v1631 = vld [vmem:[%s1630] sm:$0x3]
      %v1633 = vsel %vm1081, %v1626, 0
      %v1636 = vsel %vm1081, %v1627, 0
      %v1639 = vsel %vm1081, %v1628, 0
      %v1642 = vsel %vm1081, %v1629, 0
      %v1645 = vsel %vm1245, %v1631, 0
      %1647 = vmatpush.bf16.msra.mxu0 0
      %1648 = vmatpush.bf16.msra.mxu0 0
      %1649 = vmatpush.bf16.msra.mxu0 0
      %1650 = vmatpush.bf16.msra.mxu0 0
      %1651 = vmatpush.bf16.msra.mxu0 0
      %1652 = vmatpush.bf16.msra.mxu0 0
      %1653 = vmatpush.bf16.msra.mxu0 0
      %1654 = vmatpush.bf16.msra.mxu0 %v1645
      %1655 = vmatmul.bf16.gmra.mxu0 %v1633
      %v1656 = vpop.f32.mrf.mxu0
      %v1657 = vadd.f32 0.0, %v1656
      %v1658 = vpop.f32.mrf.mxu0
      %v1659 = vadd.f32 0.0, %v1658
      %1660 = vmatmul.bf16.gmra.mxu0 %v1636
      %v1661 = vpop.f32.mrf.mxu0
      %v1662 = vadd.f32 0.0, %v1661
      %v1663 = vpop.f32.mrf.mxu0
      %v1664 = vadd.f32 0.0, %v1663
      %1665 = vmatmul.bf16.gmra.mxu0 %v1639
      %v1666 = vpop.f32.mrf.mxu0
      %v1667 = vadd.f32 0.0, %v1666
      %v1668 = vpop.f32.mrf.mxu0
      %v1669 = vadd.f32 0.0, %v1668
      %1670 = vmatmul.bf16.gmra.mxu0 %v1642
      %v1671 = vpop.f32.mrf.mxu0
      %v1672 = vadd.f32 0.0, %v1671
      %v1673 = vpop.f32.mrf.mxu0
      %v1674 = vadd.f32 0.0, %v1673
      %1675 = vdwg.mxu0
      %v1676 = vadd.f32 %v1602, %v1657
      %v1677 = vadd.f32 %v1603, %v1659
      %v1678 = vadd.f32 %v1604, %v1662
      %v1679 = vadd.f32 %v1605, %v1664
      %v1680 = vadd.f32 %v1606, %v1667
      %v1681 = vadd.f32 %v1607, %v1669
      %v1682 = vadd.f32 %v1608, %v1672
      %v1683 = vadd.f32 %v1609, %v1674
      %v1684 = vld [vmem:[#allocation3 + $0x18] sm:$0xff]
      %v1685 = vld [vmem:[#allocation3 + $0x20] sm:$0xff]
      %v1686 = vld [vmem:[#allocation3 + $0x28] sm:$0xff]
      %v1687 = vld [vmem:[#allocation3 + $0x30] sm:$0xff]
      %v1688 = vld [vmem:[#allocation3 + $0x38] sm:$0xff]
      %v1689 = vld [vmem:[#allocation3 + $0x40] sm:$0xff]
      %v1690 = vld [vmem:[#allocation3 + $0x48] sm:$0xff]
      %v1691 = vld [vmem:[#allocation3 + $0x50] sm:$0xff]
      %v1692 = vpack.c.bf16 %v1685, %v1684
      %v1693 = vpack.c.bf16 %v1687, %v1686
      %v1694 = vpack.c.bf16 %v1689, %v1688
      %v1695 = vpack.c.bf16 %v1691, %v1690
      %s1696 = scalar_lea.vmem %s3, 14
      %v1697 = vld [vmem:[%s1696] sm:$0x3]
      %v1699 = vsel %vm1081, %v1692, 0
      %v1702 = vsel %vm1081, %v1693, 0
      %v1705 = vsel %vm1081, %v1694, 0
      %v1708 = vsel %vm1081, %v1695, 0
      %v1711 = vsel %vm1245, %v1697, 0
      %1713 = vmatpush.bf16.msra.mxu0 0
      %1714 = vmatpush.bf16.msra.mxu0 0
      %1715 = vmatpush.bf16.msra.mxu0 0
      %1716 = vmatpush.bf16.msra.mxu0 0
      %1717 = vmatpush.bf16.msra.mxu0 0
      %1718 = vmatpush.bf16.msra.mxu0 0
      %1719 = vmatpush.bf16.msra.mxu0 0
      %1720 = vmatpush.bf16.msra.mxu0 %v1711
      %1721 = vmatmul.bf16.gmra.mxu0 %v1699
      %v1722 = vpop.f32.mrf.mxu0
      %v1723 = vadd.f32 0.0, %v1722
      %v1724 = vpop.f32.mrf.mxu0
      %v1725 = vadd.f32 0.0, %v1724
      %1726 = vmatmul.bf16.gmra.mxu0 %v1702
      %v1727 = vpop.f32.mrf.mxu0
      %v1728 = vadd.f32 0.0, %v1727
      %v1729 = vpop.f32.mrf.mxu0
      %v1730 = vadd.f32 0.0, %v1729
      %1731 = vmatmul.bf16.gmra.mxu0 %v1705
      %v1732 = vpop.f32.mrf.mxu0
      %v1733 = vadd.f32 0.0, %v1732
      %v1734 = vpop.f32.mrf.mxu0
      %v1735 = vadd.f32 0.0, %v1734
      %1736 = vmatmul.bf16.gmra.mxu0 %v1708
      %v1737 = vpop.f32.mrf.mxu0
      %v1738 = vadd.f32 0.0, %v1737
      %v1739 = vpop.f32.mrf.mxu0
      %v1740 = vadd.f32 0.0, %v1739
      %1741 = vdwg.mxu0
      %v1742 = vadd.f32 %v1676, %v1723
      %v1743 = vadd.f32 %v1677, %v1725
      %v1744 = vadd.f32 %v1678, %v1728
      %v1745 = vadd.f32 %v1679, %v1730
      %v1746 = vadd.f32 %v1680, %v1733
      %v1747 = vadd.f32 %v1681, %v1735
      %v1748 = vadd.f32 %v1682, %v1738
      %v1749 = vadd.f32 %v1683, %v1740
      %v1750 = vld [vmem:[#allocation3 + $0x19] sm:$0xff]
      %v1751 = vld [vmem:[#allocation3 + $0x21] sm:$0xff]
      %v1752 = vld [vmem:[#allocation3 + $0x29] sm:$0xff]
      %v1753 = vld [vmem:[#allocation3 + $0x31] sm:$0xff]
      %v1754 = vld [vmem:[#allocation3 + $0x39] sm:$0xff]
      %v1755 = vld [vmem:[#allocation3 + $0x41] sm:$0xff]
      %v1756 = vld [vmem:[#allocation3 + $0x49] sm:$0xff]
      %v1757 = vld [vmem:[#allocation3 + $0x51] sm:$0xff]
      %v1758 = vsel %vm543, 0.0, %v1750
      %v1759 = vsel %vm544, 0.0, %v1751
      %v1760 = vsel %vm545, 0.0, %v1752
      %v1761 = vsel %vm546, 0.0, %v1753
      %v1762 = vsel %vm547, 0.0, %v1754
      %v1763 = vsel %vm548, 0.0, %v1755
      %v1764 = vsel %vm549, 0.0, %v1756
      %v1765 = vsel %vm550, 0.0, %v1757
      %v1766 = vpack.c.bf16 %v1759, %v1758
      %v1767 = vpack.c.bf16 %v1761, %v1760
      %v1768 = vpack.c.bf16 %v1763, %v1762
      %v1769 = vpack.c.bf16 %v1765, %v1764
      %s1770 = scalar_lea.vmem %s3, 16
      %v1771 = vld [vmem:[%s1770] sm:$0x3]
      %v1773 = vsel %vm1081, %v1766, 0
      %v1776 = vsel %vm1081, %v1767, 0
      %v1779 = vsel %vm1081, %v1768, 0
      %v1782 = vsel %vm1081, %v1769, 0
      %v1785 = vsel %vm1245, %v1771, 0
      %1787 = vmatpush.bf16.msra.mxu0 0
      %1788 = vmatpush.bf16.msra.mxu0 0
      %1789 = vmatpush.bf16.msra.mxu0 0
      %1790 = vmatpush.bf16.msra.mxu0 0
      %1791 = vmatpush.bf16.msra.mxu0 0
      %1792 = vmatpush.bf16.msra.mxu0 0
      %1793 = vmatpush.bf16.msra.mxu0 0
      %1794 = vmatpush.bf16.msra.mxu0 %v1785
      %1795 = vmatmul.bf16.gmra.mxu0 %v1773
      %v1796 = vpop.f32.mrf.mxu0
      %v1797 = vadd.f32 0.0, %v1796
      %v1798 = vpop.f32.mrf.mxu0
      %v1799 = vadd.f32 0.0, %v1798
      %1800 = vmatmul.bf16.gmra.mxu0 %v1776
      %v1801 = vpop.f32.mrf.mxu0
      %v1802 = vadd.f32 0.0, %v1801
      %v1803 = vpop.f32.mrf.mxu0
      %v1804 = vadd.f32 0.0, %v1803
      %1805 = vmatmul.bf16.gmra.mxu0 %v1779
      %v1806 = vpop.f32.mrf.mxu0
      %v1807 = vadd.f32 0.0, %v1806
      %v1808 = vpop.f32.mrf.mxu0
      %v1809 = vadd.f32 0.0, %v1808
      %1810 = vmatmul.bf16.gmra.mxu0 %v1782
      %v1811 = vpop.f32.mrf.mxu0
      %v1812 = vadd.f32 0.0, %v1811
      %v1813 = vpop.f32.mrf.mxu0
      %v1814 = vadd.f32 0.0, %v1813
      %1815 = vdwg.mxu0
      %v1816 = vadd.f32 %v1742, %v1797
      %v1817 = vadd.f32 %v1743, %v1799
      %v1818 = vadd.f32 %v1744, %v1802
      %v1819 = vadd.f32 %v1745, %v1804
      %v1820 = vadd.f32 %v1746, %v1807
      %v1821 = vadd.f32 %v1747, %v1809
      %v1822 = vadd.f32 %v1748, %v1812
      %v1823 = vadd.f32 %v1749, %v1814
      %v1824 = vld [vmem:[%s5] sm:$0x1]
      %v1826 = vperm.slane %v1824, 0
      %v1828 = vadd.f32 %v1816, %v1826
      %v1829 = vadd.f32 %v1817, %v1826
      %v1830 = vadd.f32 %v1818, %v1826
      %v1831 = vadd.f32 %v1819, %v1826
      %v1832 = vadd.f32 %v1820, %v1826
      %v1833 = vadd.f32 %v1821, %v1826
      %v1834 = vadd.f32 %v1822, %v1826
      %v1835 = vadd.f32 %v1823, %v1826
      %vm1836 = vcmp.ge.f32.partialorder %v1828, 0.0
      %vm1837 = vcmp.ge.f32.partialorder %v1829, 0.0
      %vm1838 = vcmp.ge.f32.partialorder %v1830, 0.0
      %vm1839 = vcmp.ge.f32.partialorder %v1831, 0.0
      %vm1840 = vcmp.ge.f32.partialorder %v1832, 0.0
      %vm1841 = vcmp.ge.f32.partialorder %v1833, 0.0
      %vm1842 = vcmp.ge.f32.partialorder %v1834, 0.0
      %vm1843 = vcmp.ge.f32.partialorder %v1835, 0.0
      %v1844 = vmul.f32 %v1828, 0.2
      %v1845 = vmul.f32 %v1829, 0.2
      %v1846 = vmul.f32 %v1830, 0.2
      %v1847 = vmul.f32 %v1831, 0.2
      %v1848 = vmul.f32 %v1832, 0.2
      %v1849 = vmul.f32 %v1833, 0.2
      %v1850 = vmul.f32 %v1834, 0.2
      %v1851 = vmul.f32 %v1835, 0.2
      %v1852 = vsel %vm1836, %v1828, %v1844
      %v1853 = vsel %vm1837, %v1829, %v1845
      %v1854 = vsel %vm1838, %v1830, %v1846
      %v1855 = vsel %vm1839, %v1831, %v1847
      %v1856 = vsel %vm1840, %v1832, %v1848
      %v1857 = vsel %vm1841, %v1833, %v1849
      %v1858 = vsel %vm1842, %v1834, %v1850
      %v1859 = vsel %vm1843, %v1835, %v1851
      %v1860 = vsel %vm1081, %v1852, 0.0
      %v1861 = vsel %vm1081, %v1853, 0.0
      %v1862 = vadd.f32 %v1860, %v1861
      %v1863 = vsel %vm1081, %v1854, 0.0
      %v1864 = vadd.f32 %v1862, %v1863
      %v1865 = vsel %vm1081, %v1855, 0.0
      %v1866 = vadd.f32 %v1864, %v1865
      %v1867 = vsel %vm1081, %v1856, 0.0
      %v1868 = vadd.f32 %v1866, %v1867
      %v1869 = vsel %vm1081, %v1857, 0.0
      %v1870 = vadd.f32 %v1868, %v1869
      %v1871 = vsel %vm1081, %v1858, 0.0
      %v1872 = vadd.f32 %v1870, %v1871
      %v1873 = vsel %vm1081, %v1859, 0.0
      %v1874 = vadd.f32 %v1872, %v1873
      %v1875 = vrot.slane %v1874, 4
      %v1876 = vadd.f32 %v1874, %v1875
      %v1877 = vrot.slane %v1876, 2
      %v1878 = vadd.f32 %v1876, %v1877
      %v1879 = vrot.slane %v1878, 1
      %v1880 = vadd.f32 %v1878, %v1879
      %v1881 = vmul.f32 %v1880, %v1109
      %v1882 = vsub.f32 %v1852, %v1881
      %v1883 = vsub.f32 %v1853, %v1881
      %v1884 = vsub.f32 %v1854, %v1881
      %v1885 = vsub.f32 %v1855, %v1881
      %v1886 = vsub.f32 %v1856, %v1881
      %v1887 = vsub.f32 %v1857, %v1881
      %v1888 = vsub.f32 %v1858, %v1881
      %v1889 = vsub.f32 %v1859, %v1881
      %v1890 = vmul.f32 %v1882, %v1882
      %v1891 = vmul.f32 %v1883, %v1883
      %v1892 = vmul.f32 %v1884, %v1884
      %v1893 = vmul.f32 %v1885, %v1885
      %v1894 = vmul.f32 %v1886, %v1886
      %v1895 = vmul.f32 %v1887, %v1887
      %v1896 = vmul.f32 %v1888, %v1888
      %v1897 = vmul.f32 %v1889, %v1889
      %v1898 = vsel %vm1081, %v1890, 0.0
      %v1899 = vsel %vm1081, %v1891, 0.0
      %v1900 = vadd.f32 %v1898, %v1899
      %v1901 = vsel %vm1081, %v1892, 0.0
      %v1902 = vadd.f32 %v1900, %v1901
      %v1903 = vsel %vm1081, %v1893, 0.0
      %v1904 = vadd.f32 %v1902, %v1903
      %v1905 = vsel %vm1081, %v1894, 0.0
      %v1906 = vadd.f32 %v1904, %v1905
      %v1907 = vsel %vm1081, %v1895, 0.0
      %v1908 = vadd.f32 %v1906, %v1907
      %v1909 = vsel %vm1081, %v1896, 0.0
      %v1910 = vadd.f32 %v1908, %v1909
      %v1911 = vsel %vm1081, %v1897, 0.0
      %v1912 = vadd.f32 %v1910, %v1911
      %v1913 = vrot.slane %v1912, 4
      %v1914 = vadd.f32 %v1912, %v1913
      %v1915 = vrot.slane %v1914, 2
      %v1916 = vadd.f32 %v1914, %v1915
      %v1917 = vrot.slane %v1916, 1
      %v1918 = vadd.f32 %v1916, %v1917
      %v1919 = vmul.f32 %v1918, %v1109
      %v1920 = vadd.f32 %v1919, 1e-08
      %v1921 = vrsqrt.pop %v1920
      %v1922 = vmul.f32 %v1921, %v1920
      %v1923 = vmul.f32 %v1922, %v1921
      %v1924 = vmul.f32 0.5, %v1923
      %v1925 = vsub.f32 1.5, %v1924
      %v1926 = vmul.f32 %v1921, %v1925
      %vm1927 = vweird.f32 %v1920
      %vm1928 = vweird.f32 %v1921
      %vm1929 = vmor %vm1927, %vm1928
      %v1930 = vsel %vm1929, %v1921, %v1926
      %v1931 = vmul.f32 %v1882, %v1930
      %v1932 = vmul.f32 %v1883, %v1930
      %v1933 = vmul.f32 %v1884, %v1930
      %v1934 = vmul.f32 %v1885, %v1930
      %v1935 = vmul.f32 %v1886, %v1930
      %v1936 = vmul.f32 %v1887, %v1930
      %v1937 = vmul.f32 %v1888, %v1930
      %v1938 = vmul.f32 %v1889, %v1930
      %v1939 = vperm.slane %v357, 2
      %v1940 = vmul.f32 %v1939, %v1931
      %v1941 = vmul.f32 %v1939, %v1932
      %v1942 = vmul.f32 %v1939, %v1933
      %v1943 = vmul.f32 %v1939, %v1934
      %v1944 = vmul.f32 %v1939, %v1935
      %v1945 = vmul.f32 %v1939, %v1936
      %v1946 = vmul.f32 %v1939, %v1937
      %v1947 = vmul.f32 %v1939, %v1938
      %v1948 = vperm.slane %v357, 3
      %v1949 = vadd.f32 %v1940, %v1948
      %v1950 = vadd.f32 %v1941, %v1948
      %v1951 = vadd.f32 %v1942, %v1948
      %v1952 = vadd.f32 %v1943, %v1948
      %v1953 = vadd.f32 %v1944, %v1948
      %v1954 = vadd.f32 %v1945, %v1948
      %v1955 = vadd.f32 %v1946, %v1948
      %v1956 = vadd.f32 %v1947, %v1948
      %v1957 = vpack.c.bf16 %v1950, %v1949
      %v1958 = vpack.c.bf16 %v1952, %v1951
      %v1959 = vpack.c.bf16 %v1954, %v1953
      %v1960 = vpack.c.bf16 %v1956, %v1955
      %v1961 = vld [vmem:[%s6] sm:$0x3]
      %v1962 = vld [vmem:[%s7] sm:$0x1]
      %v1964 = vperm.slane %v1962, 0
      %v1967 = vsel %vm1081, %v1957, 0
      %v1970 = vsel %vm1081, %v1958, 0
      %v1973 = vsel %vm1081, %v1959, 0
      %v1976 = vsel %vm1081, %v1960, 0
      %v1979 = vsel %vm1245, %v1961, 0
      %1981 = vmatpush.bf16.msra.mxu0 0
      %1982 = vmatpush.bf16.msra.mxu0 0
      %1983 = vmatpush.bf16.msra.mxu0 0
      %1984 = vmatpush.bf16.msra.mxu0 0
      %1985 = vmatpush.bf16.msra.mxu0 0
      %1986 = vmatpush.bf16.msra.mxu0 0
      %1987 = vmatpush.bf16.msra.mxu0 0
      %1988 = vmatpush.bf16.msra.mxu0 %v1979
      %1989 = vmatmul.bf16.gmra.mxu0 %v1967
      %v1990 = vpop.f32.mrf.mxu0
      %v1991 = vadd.f32 %v1964, %v1990
      %v1992 = vpop.f32.mrf.mxu0
      %v1993 = vadd.f32 %v1964, %v1992
      %1994 = vmatmul.bf16.gmra.mxu0 %v1970
      %v1995 = vpop.f32.mrf.mxu0
      %v1996 = vadd.f32 %v1964, %v1995
      %v1997 = vpop.f32.mrf.mxu0
      %v1998 = vadd.f32 %v1964, %v1997
      %1999 = vmatmul.bf16.gmra.mxu0 %v1973
      %v2000 = vpop.f32.mrf.mxu0
      %v2001 = vadd.f32 %v1964, %v2000
      %v2002 = vpop.f32.mrf.mxu0
      %v2003 = vadd.f32 %v1964, %v2002
      %2004 = vmatmul.bf16.gmra.mxu0 %v1976
      %v2005 = vpop.f32.mrf.mxu0
      %v2006 = vadd.f32 %v1964, %v2005
      %v2007 = vpop.f32.mrf.mxu0
      %v2008 = vadd.f32 %v1964, %v2007
      %2009 = vdwg.mxu0
      %vm2010 = vcmask 23552
      %2011 = vst.msk [vmem:[%s322] sm:$0xff] %vm2010, %v1991
      %2012 = vst.msk [vmem:[%s322 + $0x8] sm:$0xff] %vm2010, %v1993
      %2013 = vst.msk [vmem:[%s322 + $0x10] sm:$0xff] %vm2010, %v1996
      %2014 = vst.msk [vmem:[%s322 + $0x18] sm:$0xff] %vm2010, %v1998
      %2015 = vst.msk [vmem:[%s322 + $0x20] sm:$0xff] %vm2010, %v2001
      %2016 = vst.msk [vmem:[%s322 + $0x28] sm:$0xff] %vm2010, %v2003
      %2017 = vst.msk [vmem:[%s322 + $0x30] sm:$0xff] %vm2010, %v2006
      %2018 = vst.msk [vmem:[%s322 + $0x38] sm:$0xff] %vm2010, %v2008
      %p2019 = scmp.lt.s32.totalorder %s19, 1
      %s2020 = scalar_select %p2019, %s19, 1
      %s2021 = smul.addr %s2020, 8
      %s2022 = smul.addr %s2021, 8
      %s2023 = scalar_lea.vmem %s8, %s2022
      // Predicated region
      $region53: #{generator_forward.3} parent=51 // pred_check
        %p2024 = pneg %p215
      $region54: #{generator_forward.3} parent=51 // pred_check_branch
        %2026 = sbr.rel (%p2024) target = $region56
      $region55: #{generator_forward.3} parent=51 // pred_region
        _
      $region56: #{generator_forward.3} parent=51 // pred_fallthru
        _
    $region52: #{generator_forward.3} parent=5 // pred_fallthru
      _
    %p2027 = scmp.le.s32.totalorder 2, %s14
    // Predicated region
    $region57: #{generator_forward.3} parent=5 // pred_check
      %p2028 = pneg %p2027
    $region58: #{generator_forward.3} parent=5 // pred_check_branch
      %2030 = sbr.rel (%p2028) target = $region60
    $region59: #{generator_forward.3} parent=5 // pred_region
      %s2031 = ssub.s32 %s14, 2
      // Predicated region
      $region61: #{generator_forward.3} parent=59 // pred_check
        %p2032 = pneg %p221
      $region62: #{generator_forward.3} parent=59 // pred_check_branch
        %2034 = sbr.rel (%p2032) target = $region64
      $region63: #{generator_forward.3} parent=59 // pred_region
        %p2035 = scmp.lt.s32.totalorder %s20, 1
        %s2036 = scalar_select %p2035, %s20, 1
        %s2037 = smul.addr %s2036, 8
        %s2038 = smul.addr %s2037, 8
        %s2039 = scalar_lea.vmem %s8, %s2038
      $region64: #{generator_forward.3} parent=59 // pred_fallthru
        _
    $region60: #{generator_forward.3} parent=5 // pred_fallthru
      _
  $region6: #{generator_forward.3} parent=0 // loop_footer
    %s18 = sadd.s32 1, %s14
  $region7: #{generator_forward.3} parent=0 // loop_footer_branch
    %13 = sbr.rel target = $region3
  $region8: #{generator_forward.3} parent=0 // loop_exit
    _

</llo_original>
